<compile_context>
chip_gen: v7x
topology: tpu7x:2x2x1
jax: 0.10.0
libtpu: 0.0.40
codegen_flags: <defaults>
</compile_context>

<pallas_src>
import functools
import math

import jax
import jax.numpy as jnp
from jax.experimental import pallas as pl
from jax.experimental.pallas import tpu as pltpu


def _round_up(x, m):
    return (x + m - 1) // m * m


# --------------------------------------------------------------------------
# Per-chip configuration & capability probes
# --------------------------------------------------------------------------

_VMEM_LIMIT = None
_WEIGHT_PIPELINE_MODE = None   # pl.Buffered(3) if supported (probed)
_IMPLICIT_CONV_OK = False      # implicit-im2col 3x3 kernel usable (probed)


def _vmem_limit():
    global _VMEM_LIMIT
    if _VMEM_LIMIT is None:
        kind = ""
        try:
            kind = jax.devices()[0].device_kind.lower()
        except Exception:
            pass
        if "v7" in kind:
            _VMEM_LIMIT = 48 << 20   # v7x: 64 MiB physical per TC
        elif "v5" in kind or "v6" in kind:
            _VMEM_LIMIT = 96 << 20   # v5e / v6e: 128 MiB physical
        else:
            _VMEM_LIMIT = 64 << 20
    return _VMEM_LIMIT


# --------------------------------------------------------------------------
# Pallas kernels
# --------------------------------------------------------------------------

def _matmul_kernel(a_ref, b_ref, bias_ref, *rest, relu, has_res):
    """Tiled-K matmul: acc += a@b; epilogue adds bias (+residual) (+ReLU)."""
    if has_res:
        res_ref, o_ref, acc_ref = rest
    else:
        o_ref, acc_ref = rest

    k = pl.program_id(2)

    @pl.when(k == 0)
    def _():
        acc_ref[...] = jnp.zeros_like(acc_ref)

    acc_ref[...] += jnp.dot(a_ref[...], b_ref[...],
                            preferred_element_type=jnp.float32)

    @pl.when(k == pl.num_programs(2) - 1)
    def _():
        out = acc_ref[...] + bias_ref[...]
        if has_res:
            out = out + res_ref[...].astype(jnp.float32)
        if relu:
            out = jnp.maximum(out, 0.0)
        o_ref[...] = out.astype(o_ref.dtype)


def _conv_s1_kernel(x_ref, w_ref, b_ref, o_ref, *, KH, KW, OH, OW, relu):
    """Implicit-im2col stride-1 conv: accumulate KH*KW shifted matmuls.

    x_ref: (N, H+2p, W+2p, Cin) padded activation, fully resident in VMEM.
    w_ref: (Kp, tn) weight block, rows laid out tap-major / cin-minor.
    """
    n = x_ref.shape[0]
    cin = x_ref.shape[3]
    m = n * OH * OW
    acc = jnp.zeros(o_ref.shape, jnp.float32)
    for kh in range(KH):
        for kw in range(KW):
            a = x_ref[:, kh:kh + OH, kw:kw + OW, :].reshape(m, cin)
            wt = w_ref[(kh * KW + kw) * cin:(kh * KW + kw + 1) * cin, :]
            acc = acc + jnp.dot(a, wt, preferred_element_type=jnp.float32)
    out = acc + b_ref[...]
    if relu:
        out = jnp.maximum(out, 0.0)
    o_ref[...] = out.astype(o_ref.dtype)


def _maxpool_kernel(p_ref, o_ref):
    # Pairwise max tree over the 9 taps (depth 4 instead of a 9-deep chain).
    vals = [p_ref[k] for k in range(p_ref.shape[0])]
    while len(vals) > 1:
        nxt = [jnp.maximum(vals[i], vals[i + 1])
               for i in range(0, len(vals) - 1, 2)]
        if len(vals) % 2:
            nxt.append(vals[-1])
        vals = nxt
    o_ref[...] = vals[0]


# --------------------------------------------------------------------------
# Matmul wrapper (weights are pre-cast / pre-padded at init time)
# --------------------------------------------------------------------------

def _matmul_bias_act(a, w_pad, b_pad, *, relu, n_out, residual=None,
                     out_dtype=jnp.bfloat16):
    """act(a @ w + b [+ residual]) with pre-padded bf16 w_pad:(Kp,Np), b:(1,Np)."""
    M, K = a.shape
    Kp, Np = w_pad.shape

    Mp = _round_up(M, 16)          # bf16 packs 16 sublanes
    tm = Mp                        # single i-block: weights streamed only once

    tn = 256 if Np % 256 == 0 else 128
    if Np // tn == 1 and Np >= 256:
        tn = 128                   # keep >=2 parallel blocks for v7x dual TCs

    if Kp <= 512:
        tk = Kp
    elif Kp % 512 == 0:
        tk = 512
    elif Kp % 256 == 0:
        tk = 256
    else:
        tk = 128
    nk = Kp // tk

    a_bf = a.astype(jnp.bfloat16)
    if (Mp, Kp) != (M, K):
        a_bf = jnp.zeros((Mp, Kp), jnp.bfloat16).at[:M, :K].set(a_bf)

    has_res = residual is not None

    if _WEIGHT_PIPELINE_MODE is not None and nk >= 3:
        b_spec = pl.BlockSpec((tk, tn), lambda i, j, k: (k, j),
                              pipeline_mode=_WEIGHT_PIPELINE_MODE)
    else:
        b_spec = pl.BlockSpec((tk, tn), lambda i, j, k: (k, j))

    inputs = [a_bf, w_pad, b_pad]
    in_specs = [
        pl.BlockSpec((tm, tk), lambda i, j, k: (i, k)),
        b_spec,
        pl.BlockSpec((1, tn), lambda i, j, k: (0, j)),
    ]
    if has_res:
        r = residual.astype(jnp.bfloat16)
        Mr, Nr = r.shape
        if (Mp, Np) != (Mr, Nr):
            r = jnp.zeros((Mp, Np), jnp.bfloat16).at[:Mr, :Nr].set(r)
        inputs.append(r)
        # Block index independent of k -> stays resident across the K steps.
        in_specs.append(pl.BlockSpec((tm, tn), lambda i, j, k: (i, j)))

    out = pl.pallas_call(
        functools.partial(_matmul_kernel, relu=relu, has_res=has_res),
        out_shape=jax.ShapeDtypeStruct((Mp, Np), out_dtype),
        grid_spec=pltpu.PrefetchScalarGridSpec(
            num_scalar_prefetch=0,
            grid=(Mp // tm, Np // tn, nk),
            in_specs=in_specs,
            out_specs=pl.BlockSpec((tm, tn), lambda i, j, k: (i, j)),
            scratch_shapes=[pltpu.VMEM((tm, tn), jnp.float32)],
        ),
        compiler_params=pltpu.CompilerParams(
            dimension_semantics=("parallel", "parallel", "arbitrary"),
            vmem_limit_bytes=_vmem_limit(),
        ),
    )(*inputs)
    if (Mp, Np) != (M, n_out):
        out = out[:M, :n_out]
    return out


# --------------------------------------------------------------------------
# Convolution wrappers
# --------------------------------------------------------------------------

def _conv3x3_s1(x, w_pad, b_pad, *, n_out, relu=True):
    """3x3 / stride-1 / pad-1 conv via the implicit-im2col Pallas kernel."""
    N, H, W, Cin = x.shape
    Kp, Np = w_pad.shape
    xp = jnp.pad(x.astype(jnp.bfloat16), ((0, 0), (1, 1), (1, 1), (0, 0)))
    OH, OW = H, W
    M = N * OH * OW

    tn = 256 if Np % 256 == 0 else 128
    if Np // tn == 1 and Np >= 256:
        tn = 128

    out = pl.pallas_call(
        functools.partial(_conv_s1_kernel, KH=3, KW=3, OH=OH, OW=OW, relu=relu),
        out_shape=jax.ShapeDtypeStruct((M, Np), jnp.bfloat16),
        grid_spec=pltpu.PrefetchScalarGridSpec(
            num_scalar_prefetch=0,
            grid=(Np // tn,),
            in_specs=[
                # Full padded activation, resident across the Cout grid.
                pl.BlockSpec((N, H + 2, W + 2, Cin), lambda j: (0, 0, 0, 0)),
                pl.BlockSpec((Kp, tn), lambda j: (0, j)),
                pl.BlockSpec((1, tn), lambda j: (0, j)),
            ],
            out_specs=pl.BlockSpec((M, tn), lambda j: (0, j)),
        ),
        compiler_params=pltpu.CompilerParams(
            dimension_semantics=("parallel",),
            vmem_limit_bytes=_vmem_limit(),
        ),
    )(xp, w_pad, b_pad)
    if n_out != Np:
        out = out[:, :n_out]
    return out.reshape(N, OH, OW, n_out)


def _conv_explicit(x, w_pad, b_pad, *, KH, KW, stride, padding, relu, n_out):
    """General conv via explicit im2col + Pallas matmul (stem & stride-2 only)."""
    N, H, W, Cin = x.shape
    OH = (H + 2 * padding - KH) // stride + 1
    OW = (W + 2 * padding - KW) // stride + 1
    xb = x.astype(jnp.bfloat16)
    if padding:
        xb = jnp.pad(xb, ((0, 0), (padding, padding), (padding, padding), (0, 0)))
    cols = [xb[:, kh:kh + stride * (OH - 1) + 1:stride,
               kw:kw + stride * (OW - 1) + 1:stride, :]
            for kh in range(KH) for kw in range(KW)]
    patches = jnp.stack(cols, axis=3).reshape(N * OH * OW, KH * KW * Cin)
    out = _matmul_bias_act(patches, w_pad, b_pad, relu=relu, n_out=n_out,
                           out_dtype=jnp.bfloat16)
    return out.reshape(N, OH, OW, n_out)


def _conv2_3x3(x, w_pad, b_pad, *, n_out, stride):
    if stride == 1 and _IMPLICIT_CONV_OK:
        return _conv3x3_s1(x, w_pad, b_pad, n_out=n_out)
    return _conv_explicit(x, w_pad, b_pad, KH=3, KW=3, stride=stride, padding=1,
                          relu=True, n_out=n_out)


def _conv1x1(x, w_pad, b_pad, *, n_out, relu, residual=None):
    N, H, W, Cin = x.shape
    res2d = None if residual is None else residual.reshape(N * H * W, -1)
    out = _matmul_bias_act(x.reshape(N * H * W, Cin), w_pad, b_pad, relu=relu,
                           n_out=n_out, residual=res2d, out_dtype=jnp.bfloat16)
    return out.reshape(N, H, W, n_out)


def _maxpool_3x3_s2(x):
    """3x3, stride 2, pad 1 max-pool.  x: (N, H, W, C) NHWC."""
    N, H, W, C = x.shape
    OH = (H + 2 - 3) // 2 + 1
    OW = (W + 2 - 3) // 2 + 1
    neg = jnp.finfo(x.dtype).min
    xp = jnp.full((N, H + 2, W + 2, C), neg, x.dtype)
    xp = xp.at[:, 1:H + 1, 1:W + 1, :].set(x)
    # TODO(synk): the 9 shifted taps are still materialized (tiny at this size);
    # an in-kernel strided-window reduction would avoid the copy entirely.
    cols = [xp[:, kh:kh + 2 * (OH - 1) + 1:2, kw:kw + 2 * (OW - 1) + 1:2, :]
            for kh in range(3) for kw in range(3)]
    M, L = N * OH, OW * C          # lane-dense last dim (OW*C)
    pats = jnp.stack(cols, axis=0).reshape(9, M, L)
    Mp = _round_up(M, 16)
    tm = Mp if Mp <= 256 else 256
    Mp = _round_up(M, tm)
    if Mp != M:
        pats = jnp.full((9, Mp, L), neg, x.dtype).at[:, :M, :].set(pats)
    out = pl.pallas_call(
        _maxpool_kernel,
        out_shape=jax.ShapeDtypeStruct((Mp, L), x.dtype),
        grid_spec=pltpu.PrefetchScalarGridSpec(
            num_scalar_prefetch=0,
            grid=(Mp // tm,),
            in_specs=[pl.BlockSpec((9, tm, L), lambda i: (0, i, 0))],
            out_specs=pl.BlockSpec((tm, L), lambda i: (i, 0)),
        ),
        compiler_params=pltpu.CompilerParams(
            dimension_semantics=("parallel",),
            vmem_limit_bytes=_vmem_limit(),
        ),
    )(pats)
    if Mp != M:
        out = out[:M]
    return out.reshape(N, OH, OW, C)


# --------------------------------------------------------------------------
# jit'd forward building blocks (few Python dispatches per forward)
# --------------------------------------------------------------------------

@jax.jit
def stem_forward(x_nchw, w_pad, b_pad):
    x = jnp.transpose(x_nchw, (0, 2, 3, 1)).astype(jnp.bfloat16)   # NCHW -> NHWC
    x = _conv_explicit(x, w_pad, b_pad, KH=7, KW=7, stride=2, padding=3,
                       relu=True, n_out=64)
    return _maxpool_3x3_s2(x)


@functools.partial(jax.jit, static_argnames=("planes", "stride"))
def bottleneck_first(x, blk, planes, stride):
    """First block of a layer: conv3 and the downsample conv share one matmul."""
    out = _conv1x1(x, blk["conv1_w"], blk["conv1_b"], n_out=planes, relu=True)
    out = _conv2_3x3(out, blk["conv2_w"], blk["conv2_b"], n_out=planes,
                     stride=stride)
    xd = x if stride == 1 else x[:, ::stride, ::stride, :]
    N, OH, OW, _ = out.shape
    a = jnp.concatenate([out, xd.astype(jnp.bfloat16)],
                        axis=-1).reshape(N * OH * OW, -1)
    y = _matmul_bias_act(a, blk["conv3d_w"], blk["conv3d_b"], relu=True,
                         n_out=4 * planes, out_dtype=jnp.bfloat16)
    return y.reshape(N, OH, OW, 4 * planes)


@functools.partial(jax.jit, static_argnames=("planes",))
def bottleneck_rest(x, blk, planes):
    """Non-first blocks: residual add + ReLU fused into the conv3 epilogue."""
    out = _conv1x1(x, blk["conv1_w"], blk["conv1_b"], n_out=planes, relu=True)
    out = _conv2_3x3(out, blk["conv2_w"], blk["conv2_b"], n_out=planes, stride=1)
    return _conv1x1(out, blk["conv3_w"], blk["conv3_b"], n_out=4 * planes,
                    relu=True, residual=x)


@functools.partial(jax.jit, static_argnames=("num_class",))
def fc_head(x, w1, b1, w2, b2, w3, b3, num_class):
    # TODO(synk): adaptive global avg-pool kept in plain JAX (trivial reduction).
    feats = jnp.mean(x.astype(jnp.float32), axis=(1, 2))            # (N, 2048)
    h = _matmul_bias_act(feats, w1, b1, relu=True, n_out=512,
                         out_dtype=jnp.float32)
    h = _matmul_bias_act(h, w2, b2, relu=True, n_out=128, out_dtype=jnp.float32)
    return _matmul_bias_act(h, w3, b3, relu=False, n_out=num_class,
                            out_dtype=jnp.float32)


# --------------------------------------------------------------------------
# Deterministic synthetic parameters (BN folded; pre-cast / pre-padded weights)
# --------------------------------------------------------------------------

LAYER_CFG = [(64, 3, 1), (128, 4, 2), (256, 23, 2), (512, 3, 2)]  # ResNet101


def _init_conv(key, kh, kw, cin, cout):
    wk, bk = jax.random.split(key)
    w = jax.random.normal(wk, (kh, kw, cin, cout), jnp.float32) / math.sqrt(kh * kw * cin)
    b = jax.random.normal(bk, (cout,), jnp.float32) * 0.1   # folded-BN beta (synthetic)
    return w, b


def _prep_mm(w2d, b):
    """Reshape/cast/pad once: (K,Cout) f32 -> (Kp,Np) bf16, (1,Np) f32 bias."""
    K, Cout = w2d.shape
    Kp, Np = _round_up(K, 128), _round_up(Cout, 128)
    w_pad = jnp.zeros((Kp, Np), jnp.bfloat16).at[:K, :Cout].set(
        w2d.astype(jnp.bfloat16))
    b_pad = jnp.zeros((1, Np), jnp.float32).at[:, :Cout].set(
        b.reshape(1, Cout).astype(jnp.float32))
    return w_pad, b_pad


def _bottleneck_params(kit, inplanes, planes, first):
    w1, b1 = _init_conv(next(kit), 1, 1, inplanes, planes)
    w2, b2 = _init_conv(next(kit), 3, 3, planes, planes)
    w3, b3 = _init_conv(next(kit), 1, 1, planes, planes * 4)
    p = {}
    p["conv1_w"], p["conv1_b"] = _prep_mm(w1.reshape(inplanes, planes), b1)
    p["conv2_w"], p["conv2_b"] = _prep_mm(w2.reshape(9 * planes, planes), b2)
    if first:
        wd, bd = _init_conv(next(kit), 1, 1, inplanes, planes * 4)
        # conv3 and the downsample share one matmul: concatenate along K.
        wf = jnp.concatenate([w3.reshape(planes, planes * 4),
                              wd.reshape(inplanes, planes * 4)], axis=0)
        p["conv3d_w"], p["conv3d_b"] = _prep_mm(wf, b3 + bd)
    else:
        p["conv3_w"], p["conv3_b"] = _prep_mm(w3.reshape(planes, planes * 4), b3)
    return p


def make_resnet101_params(key, num_class):
    kit = iter(jax.random.split(key, 512))
    params = {}
    w0, b0 = _init_conv(next(kit), 7, 7, 3, 64)
    params["stem_w"], params["stem_b"] = _prep_mm(w0.reshape(147, 64), b0)
    inplanes = 64
    for idx, (planes, blocks, _) in enumerate(LAYER_CFG, start=1):
        layer = []
        for bi in range(blocks):
            layer.append(_bottleneck_params(kit, inplanes, planes, first=(bi == 0)))
            inplanes = planes * 4
        params[f"layer{idx}"] = layer
    for name, (din, dout) in (("fc1", (2048, 512)), ("fc2", (512, 128)),
                              ("fc3", (128, num_class))):
        wk, bk = jax.random.split(next(kit))
        w = jax.random.normal(wk, (din, dout), jnp.float32) / math.sqrt(din)
        b = jax.random.normal(bk, (dout,), jnp.float32) * 0.1
        params[name + "_w"], params[name + "_b"] = _prep_mm(w, b)
    return params


# --------------------------------------------------------------------------
# Full forward pass
# --------------------------------------------------------------------------

def resnet101_forward(params, x_nchw, num_class):
    x = stem_forward(x_nchw, params["stem_w"], params["stem_b"])
    for idx, (planes, blocks, stride) in enumerate(LAYER_CFG, start=1):
        layer = params[f"layer{idx}"]
        x = bottleneck_first(x, layer[0], planes=planes, stride=stride)
        for blk in layer[1:]:
            x = bottleneck_rest(x, blk, planes=planes)
    return fc_head(x, params["fc1_w"], params["fc1_b"],
                   params["fc2_w"], params["fc2_b"],
                   params["fc3_w"], params["fc3_b"], num_class=num_class)


# --------------------------------------------------------------------------
# One-time capability probes (graceful fallback keeps the script runnable)
# --------------------------------------------------------------------------

def _run_probes():
    global _WEIGHT_PIPELINE_MODE, _IMPLICIT_CONV_OK

    # (a) deeper weight buffering (hides weight DMA, mainly v5e/v6e).
    if hasattr(pl, "Buffered"):
        try:
            _WEIGHT_PIPELINE_MODE = pl.Buffered(3)
            a = jnp.zeros((16, 1536), jnp.bfloat16)
            w = jnp.zeros((1536, 128), jnp.bfloat16)
            b = jnp.zeros((1, 128), jnp.float32)
            jax.block_until_ready(
                _matmul_bias_act(a, w, b, relu=False, n_out=128))
        except Exception:
            _WEIGHT_PIPELINE_MODE = None

    # (b) implicit-im2col 3x3 kernel on every (spatial, Cin) config used.
    try:
        for hw, cin in ((8, 64), (4, 128), (2, 256), (1, 512)):
            x = jnp.zeros((2, hw, hw, cin), jnp.bfloat16)
            w = jnp.zeros((_round_up(9 * cin, 128), _round_up(cin, 128)),
                          jnp.bfloat16)
            b = jnp.zeros((1, _round_up(cin, 128)), jnp.float32)
            jax.block_until_ready(_conv3x3_s1(x, w, b, n_out=cin))
        _IMPLICIT_CONV_OK = True
    except Exception:
        _IMPLICIT_CONV_OK = False   # fall back to explicit im2col path


# --------------------------------------------------------------------------

if __name__ == "__main__":
    key = jax.random.PRNGKey(0)
    pkey, xkey = jax.random.split(key)
    num_class = 10

    _run_probes()
    params = make_resnet101_params(pkey, num_class)
    x = jax.random.normal(xkey, (2, 3, 32, 32), jnp.float32)   # NCHW like PyTorch

    out = resnet101_forward(params, x, num_class)
    out = jax.block_until_ready(out)
    assert out.shape == (2, num_class), out.shape
    assert bool(jnp.all(jnp.isfinite(out)))
    print("KERNEL_OK")
</pallas_src>

<mosaic_0001>
module attributes {stable_mosaic.version = 11 : i64} {
  func.func @_conv_s1_kernel(%arg0: i32, %arg1: memref<2x10x10x64xbf16, #tpu.memory_space<vmem>>, %arg2: memref<640x128xbf16, #tpu.memory_space<vmem>>, %arg3: memref<1x128xf32, #tpu.memory_space<vmem>>, %arg4: memref<128x128xbf16, #tpu.memory_space<vmem>>) attributes {dimension_semantics = [#tpu.dimension_semantics<parallel>], iteration_bounds = array<i64: 1>, scalar_prefetch = 0 : i64, scratch_operands = 0 : i64, tpu.core_type = #tpu.core_type<tc>, window_params = [{pipeline_mode = #tpu.pipeline_mode<synchronous>, transform_indices = @transform_0, window_bounds = array<i64: 2, 10, 10, 64>}, {transform_indices = @transform_1, window_bounds = array<i64: 640, 128>}, {transform_indices = @transform_2, window_bounds = array<i64: 1, 128>}, {transform_indices = @transform_3, window_bounds = array<i64: 128, 128>}]} {
    %cst = arith.constant 0.000000e+00 : f32
    %0 = vector.broadcast %cst : f32 to vector<128x128xf32>
    %c0 = arith.constant 0 : index
    %c0_0 = arith.constant 0 : index
    %c0_1 = arith.constant 0 : index
    %c0_2 = arith.constant 0 : index
    %1 = vector.load %arg1[%c0, %c0_0, %c0_1, %c0_2] : memref<2x10x10x64xbf16, #tpu.memory_space<vmem>>, vector<2x8x8x64xbf16>
    %2 = vector.shape_cast %1 : vector<2x8x8x64xbf16> to vector<128x64xbf16>
    %c0_3 = arith.constant 0 : index
    %c0_4 = arith.constant 0 : index
    %3 = vector.load %arg2[%c0_3, %c0_4] : memref<640x128xbf16, #tpu.memory_space<vmem>>, vector<64x128xbf16>
    %cst_5 = arith.constant dense<0.000000e+00> : vector<128x128xf32>
    %4 = tpu.matmul %2, %3, %cst_5 {dimension_numbers = #tpu.dot_dimension_numbers<[1], [0], [0], [1], [0, 0, 1, 1], [], []>} : vector<128x64xbf16>, vector<64x128xbf16>, vector<128x128xf32> -> vector<128x128xf32>
    %5 = arith.addf %0, %4 : vector<128x128xf32>
    %c0_6 = arith.constant 0 : index
    %c0_7 = arith.constant 0 : index
    %c1 = arith.constant 1 : index
    %c0_8 = arith.constant 0 : index
    %6 = vector.load %arg1[%c0_6, %c0_7, %c1, %c0_8] : memref<2x10x10x64xbf16, #tpu.memory_space<vmem>>, vector<2x8x8x64xbf16>
    %7 = vector.shape_cast %6 : vector<2x8x8x64xbf16> to vector<128x64xbf16>
    %c64 = arith.constant 64 : index
    %c0_9 = arith.constant 0 : index
    %8 = vector.load %arg2[%c64, %c0_9] : memref<640x128xbf16, #tpu.memory_space<vmem>>, vector<64x128xbf16>
    %cst_10 = arith.constant dense<0.000000e+00> : vector<128x128xf32>
    %9 = tpu.matmul %7, %8, %cst_10 {dimension_numbers = #tpu.dot_dimension_numbers<[1], [0], [0], [1], [0, 0, 1, 1], [], []>} : vector<128x64xbf16>, vector<64x128xbf16>, vector<128x128xf32> -> vector<128x128xf32>
    %10 = arith.addf %5, %9 : vector<128x128xf32>
    %c0_11 = arith.constant 0 : index
    %c0_12 = arith.constant 0 : index
    %c2 = arith.constant 2 : index
    %c0_13 = arith.constant 0 : index
    %11 = vector.load %arg1[%c0_11, %c0_12, %c2, %c0_13] : memref<2x10x10x64xbf16, #tpu.memory_space<vmem>>, vector<2x8x8x64xbf16>
    %12 = vector.shape_cast %11 : vector<2x8x8x64xbf16> to vector<128x64xbf16>
    %c128 = arith.constant 128 : index
    %c0_14 = arith.constant 0 : index
    %13 = vector.load %arg2[%c128, %c0_14] : memref<640x128xbf16, #tpu.memory_space<vmem>>, vector<64x128xbf16>
    %cst_15 = arith.constant dense<0.000000e+00> : vector<128x128xf32>
    %14 = tpu.matmul %12, %13, %cst_15 {dimension_numbers = #tpu.dot_dimension_numbers<[1], [0], [0], [1], [0, 0, 1, 1], [], []>} : vector<128x64xbf16>, vector<64x128xbf16>, vector<128x128xf32> -> vector<128x128xf32>
    %15 = arith.addf %10, %14 : vector<128x128xf32>
    %c0_16 = arith.constant 0 : index
    %c1_17 = arith.constant 1 : index
    %c0_18 = arith.constant 0 : index
    %c0_19 = arith.constant 0 : index
    %16 = vector.load %arg1[%c0_16, %c1_17, %c0_18, %c0_19] : memref<2x10x10x64xbf16, #tpu.memory_space<vmem>>, vector<2x8x8x64xbf16>
    %17 = vector.shape_cast %16 : vector<2x8x8x64xbf16> to vector<128x64xbf16>
    %c192 = arith.constant 192 : index
    %c0_20 = arith.constant 0 : index
    %18 = vector.load %arg2[%c192, %c0_20] : memref<640x128xbf16, #tpu.memory_space<vmem>>, vector<64x128xbf16>
    %cst_21 = arith.constant dense<0.000000e+00> : vector<128x128xf32>
    %19 = tpu.matmul %17, %18, %cst_21 {dimension_numbers = #tpu.dot_dimension_numbers<[1], [0], [0], [1], [0, 0, 1, 1], [], []>} : vector<128x64xbf16>, vector<64x128xbf16>, vector<128x128xf32> -> vector<128x128xf32>
    %20 = arith.addf %15, %19 : vector<128x128xf32>
    %c0_22 = arith.constant 0 : index
    %c1_23 = arith.constant 1 : index
    %c1_24 = arith.constant 1 : index
    %c0_25 = arith.constant 0 : index
    %21 = vector.load %arg1[%c0_22, %c1_23, %c1_24, %c0_25] : memref<2x10x10x64xbf16, #tpu.memory_space<vmem>>, vector<2x8x8x64xbf16>
    %22 = vector.shape_cast %21 : vector<2x8x8x64xbf16> to vector<128x64xbf16>
    %c256 = arith.constant 256 : index
    %c0_26 = arith.constant 0 : index
    %23 = vector.load %arg2[%c256, %c0_26] : memref<640x128xbf16, #tpu.memory_space<vmem>>, vector<64x128xbf16>
    %cst_27 = arith.constant dense<0.000000e+00> : vector<128x128xf32>
    %24 = tpu.matmul %22, %23, %cst_27 {dimension_numbers = #tpu.dot_dimension_numbers<[1], [0], [0], [1], [0, 0, 1, 1], [], []>} : vector<128x64xbf16>, vector<64x128xbf16>, vector<128x128xf32> -> vector<128x128xf32>
    %25 = arith.addf %20, %24 : vector<128x128xf32>
    %c0_28 = arith.constant 0 : index
    %c1_29 = arith.constant 1 : index
    %c2_30 = arith.constant 2 : index
    %c0_31 = arith.constant 0 : index
    %26 = vector.load %arg1[%c0_28, %c1_29, %c2_30, %c0_31] : memref<2x10x10x64xbf16, #tpu.memory_space<vmem>>, vector<2x8x8x64xbf16>
    %27 = vector.shape_cast %26 : vector<2x8x8x64xbf16> to vector<128x64xbf16>
    %c320 = arith.constant 320 : index
    %c0_32 = arith.constant 0 : index
    %28 = vector.load %arg2[%c320, %c0_32] : memref<640x128xbf16, #tpu.memory_space<vmem>>, vector<64x128xbf16>
    %cst_33 = arith.constant dense<0.000000e+00> : vector<128x128xf32>
    %29 = tpu.matmul %27, %28, %cst_33 {dimension_numbers = #tpu.dot_dimension_numbers<[1], [0], [0], [1], [0, 0, 1, 1], [], []>} : vector<128x64xbf16>, vector<64x128xbf16>, vector<128x128xf32> -> vector<128x128xf32>
    %30 = arith.addf %25, %29 : vector<128x128xf32>
    %c0_34 = arith.constant 0 : index
    %c2_35 = arith.constant 2 : index
    %c0_36 = arith.constant 0 : index
    %c0_37 = arith.constant 0 : index
    %31 = vector.load %arg1[%c0_34, %c2_35, %c0_36, %c0_37] : memref<2x10x10x64xbf16, #tpu.memory_space<vmem>>, vector<2x8x8x64xbf16>
    %32 = vector.shape_cast %31 : vector<2x8x8x64xbf16> to vector<128x64xbf16>
    %c384 = arith.constant 384 : index
    %c0_38 = arith.constant 0 : index
    %33 = vector.load %arg2[%c384, %c0_38] : memref<640x128xbf16, #tpu.memory_space<vmem>>, vector<64x128xbf16>
    %cst_39 = arith.constant dense<0.000000e+00> : vector<128x128xf32>
    %34 = tpu.matmul %32, %33, %cst_39 {dimension_numbers = #tpu.dot_dimension_numbers<[1], [0], [0], [1], [0, 0, 1, 1], [], []>} : vector<128x64xbf16>, vector<64x128xbf16>, vector<128x128xf32> -> vector<128x128xf32>
    %35 = arith.addf %30, %34 : vector<128x128xf32>
    %c0_40 = arith.constant 0 : index
    %c2_41 = arith.constant 2 : index
    %c1_42 = arith.constant 1 : index
    %c0_43 = arith.constant 0 : index
    %36 = vector.load %arg1[%c0_40, %c2_41, %c1_42, %c0_43] : memref<2x10x10x64xbf16, #tpu.memory_space<vmem>>, vector<2x8x8x64xbf16>
    %37 = vector.shape_cast %36 : vector<2x8x8x64xbf16> to vector<128x64xbf16>
    %c448 = arith.constant 448 : index
    %c0_44 = arith.constant 0 : index
    %38 = vector.load %arg2[%c448, %c0_44] : memref<640x128xbf16, #tpu.memory_space<vmem>>, vector<64x128xbf16>
    %cst_45 = arith.constant dense<0.000000e+00> : vector<128x128xf32>
    %39 = tpu.matmul %37, %38, %cst_45 {dimension_numbers = #tpu.dot_dimension_numbers<[1], [0], [0], [1], [0, 0, 1, 1], [], []>} : vector<128x64xbf16>, vector<64x128xbf16>, vector<128x128xf32> -> vector<128x128xf32>
    %40 = arith.addf %35, %39 : vector<128x128xf32>
    %c0_46 = arith.constant 0 : index
    %c2_47 = arith.constant 2 : index
    %c2_48 = arith.constant 2 : index
    %c0_49 = arith.constant 0 : index
    %41 = vector.load %arg1[%c0_46, %c2_47, %c2_48, %c0_49] : memref<2x10x10x64xbf16, #tpu.memory_space<vmem>>, vector<2x8x8x64xbf16>
    %42 = vector.shape_cast %41 : vector<2x8x8x64xbf16> to vector<128x64xbf16>
    %c512 = arith.constant 512 : index
    %c0_50 = arith.constant 0 : index
    %43 = vector.load %arg2[%c512, %c0_50] : memref<640x128xbf16, #tpu.memory_space<vmem>>, vector<64x128xbf16>
    %cst_51 = arith.constant dense<0.000000e+00> : vector<128x128xf32>
    %44 = tpu.matmul %42, %43, %cst_51 {dimension_numbers = #tpu.dot_dimension_numbers<[1], [0], [0], [1], [0, 0, 1, 1], [], []>} : vector<128x64xbf16>, vector<64x128xbf16>, vector<128x128xf32> -> vector<128x128xf32>
    %45 = arith.addf %40, %44 : vector<128x128xf32>
    %c0_52 = arith.constant 0 : index
    %c0_53 = arith.constant 0 : index
    %46 = vector.load %arg3[%c0_52, %c0_53] : memref<1x128xf32, #tpu.memory_space<vmem>>, vector<1x128xf32>
    %47 = vector.broadcast %46 : vector<1x128xf32> to vector<128x128xf32>
    %48 = arith.addf %45, %47 : vector<128x128xf32>
    %cst_54 = arith.constant 0.000000e+00 : f32
    %49 = vector.broadcast %cst_54 : f32 to vector<128x128xf32>
    %50 = arith.maximumf %48, %49 : vector<128x128xf32>
    %51 = arith.truncf %50 : vector<128x128xf32> to vector<128x128xbf16>
    %c0_55 = arith.constant 0 : index
    %c0_56 = arith.constant 0 : index
    %52 = vector.load %arg4[%c0_55, %c0_56] : memref<128x128xbf16, #tpu.memory_space<vmem>>, vector<128x128xbf16>
    tpu.vector_store %arg4[%c0_55, %c0_56], %51 {strides = array<i32>} : memref<128x128xbf16, #tpu.memory_space<vmem>>, vector<128x128xbf16>,
    return
  }
  func.func @transform_0(%arg0: i32) -> (i32, i32, i32, i32) {
    %c0_i32 = arith.constant 0 : i32
    %c0_i32_0 = arith.constant 0 : i32
    %c0_i32_1 = arith.constant 0 : i32
    %c0_i32_2 = arith.constant 0 : i32
    %c0_i32_3 = arith.constant 0 : i32
    return %c0_i32, %c0_i32_0, %c0_i32_1, %c0_i32_2 : i32, i32, i32, i32
  }
  func.func @transform_1(%arg0: i32) -> (i32, i32) {
    %c0_i32 = arith.constant 0 : i32
    %c0_i32_0 = arith.constant 0 : i32
    return %c0_i32, %arg0 : i32, i32
  }
  func.func @transform_2(%arg0: i32) -> (i32, i32) {
    %c0_i32 = arith.constant 0 : i32
    %c0_i32_0 = arith.constant 0 : i32
    return %c0_i32, %arg0 : i32, i32
  }
  func.func @transform_3(%arg0: i32) -> (i32, i32) {
    %c0_i32 = arith.constant 0 : i32
    %c0_i32_0 = arith.constant 0 : i32
    return %c0_i32, %arg0 : i32, i32
  }
}

module attributes {stable_mosaic.version = 11 : i64} {
  func.func @_matmul_kernel(%arg0: i32, %arg1: i32, %arg2: i32, %arg3: memref<512x256xbf16, #tpu.memory_space<vmem>>, %arg4: memref<256x128xbf16, #tpu.memory_space<vmem>>, %arg5: memref<1x128xf32, #tpu.memory_space<vmem>>, %arg6: memref<512x128xbf16, #tpu.memory_space<vmem>>, %arg7: memref<512x128xf32, #tpu.memory_space<vmem>>) attributes {dimension_semantics = [#tpu.dimension_semantics<parallel>, #tpu.dimension_semantics<parallel>, #tpu.dimension_semantics<arbitrary>], iteration_bounds = array<i64: 1, 1, 1>, scalar_prefetch = 0 : i64, scratch_operands = 1 : i64, tpu.core_type = #tpu.core_type<tc>, window_params = [{transform_indices = @transform_0, window_bounds = array<i64: 512, 256>}, {transform_indices = @transform_1, window_bounds = array<i64: 256, 128>}, {transform_indices = @transform_2, window_bounds = array<i64: 1, 128>}, {transform_indices = @transform_3, window_bounds = array<i64: 512, 128>}]} {
    %c0_i32 = arith.constant 0 : i32
    %0 = arith.cmpi eq, %arg2, %c0_i32 : i32
    %1 = arith.extui %0 : i1 to i32
    %c0_i32_0 = arith.constant 0 : i32
    %2 = arith.cmpi ne, %1, %c0_i32_0 : i32
    scf.if %2 {
      %cst_10 = arith.constant 0.000000e+00 : f32
      %12 = vector.broadcast %cst_10 : f32 to vector<512x128xf32>
      %c0_11 = arith.constant 0 : index
      %c0_12 = arith.constant 0 : index
      %13 = vector.load %arg7[%c0_11, %c0_12] : memref<512x128xf32, #tpu.memory_space<vmem>>, vector<512x128xf32>
      tpu.vector_store %arg7[%c0_11, %c0_12], %12 {strides = array<i32>} : memref<512x128xf32, #tpu.memory_space<vmem>>, vector<512x128xf32>,
    } else {
    }
    %c0 = arith.constant 0 : index
    %c0_1 = arith.constant 0 : index
    %3 = vector.load %arg7[%c0, %c0_1] : memref<512x128xf32, #tpu.memory_space<vmem>>, vector<512x128xf32>
    %c0_2 = arith.constant 0 : index
    %c0_3 = arith.constant 0 : index
    %4 = vector.load %arg3[%c0_2, %c0_3] : memref<512x256xbf16, #tpu.memory_space<vmem>>, vector<512x256xbf16>
    %c0_4 = arith.constant 0 : index
    %c0_5 = arith.constant 0 : index
    %5 = vector.load %arg4[%c0_4, %c0_5] : memref<256x128xbf16, #tpu.memory_space<vmem>>, vector<256x128xbf16>
    %cst = arith.constant dense<0.000000e+00> : vector<512x128xf32>
    %6 = tpu.matmul %4, %5, %cst {dimension_numbers = #tpu.dot_dimension_numbers<[1], [0], [0], [1], [0, 0, 1, 1], [], []>} : vector<512x256xbf16>, vector<256x128xbf16>, vector<512x128xf32> -> vector<512x128xf32>
    %7 = arith.addf %3, %6 : vector<512x128xf32>
    %c0_6 = arith.constant 0 : index
    %c0_7 = arith.constant 0 : index
    %8 = vector.load %arg7[%c0_6, %c0_7] : memref<512x128xf32, #tpu.memory_space<vmem>>, vector<512x128xf32>
    tpu.vector_store %arg7[%c0_6, %c0_7], %7 {strides = array<i32>} : memref<512x128xf32, #tpu.memory_space<vmem>>, vector<512x128xf32>,
    %c0_i32_8 = arith.constant 0 : i32
    %9 = arith.cmpi eq, %arg2, %c0_i32_8 : i32
    %10 = arith.extui %9 : i1 to i32
    %c0_i32_9 = arith.constant 0 : i32
    %11 = arith.cmpi ne, %10, %c0_i32_9 : i32
    scf.if %11 {
      %c0_10 = arith.constant 0 : index
      %c0_11 = arith.constant 0 : index
      %12 = vector.load %arg7[%c0_10, %c0_11] : memref<512x128xf32, #tpu.memory_space<vmem>>, vector<512x128xf32>
      %c0_12 = arith.constant 0 : index
      %c0_13 = arith.constant 0 : index
      %13 = vector.load %arg5[%c0_12, %c0_13] : memref<1x128xf32, #tpu.memory_space<vmem>>, vector<1x128xf32>
      %14 = vector.broadcast %13 : vector<1x128xf32> to vector<512x128xf32>
      %15 = arith.addf %12, %14 : vector<512x128xf32>
      %cst_14 = arith.constant 0.000000e+00 : f32
      %16 = vector.broadcast %cst_14 : f32 to vector<512x128xf32>
      %17 = arith.maximumf %15, %16 : vector<512x128xf32>
      %18 = arith.truncf %17 : vector<512x128xf32> to vector<512x128xbf16>
      %c0_15 = arith.constant 0 : index
      %c0_16 = arith.constant 0 : index
      %19 = vector.load %arg6[%c0_15, %c0_16] : memref<512x128xbf16, #tpu.memory_space<vmem>>, vector<512x128xbf16>
      tpu.vector_store %arg6[%c0_15, %c0_16], %18 {strides = array<i32>} : memref<512x128xbf16, #tpu.memory_space<vmem>>, vector<512x128xbf16>,
    } else {
    }
    return
  }
  func.func @transform_0(%arg0: i32, %arg1: i32, %arg2: i32) -> (i32, i32) {
    %c0_i32 = arith.constant 0 : i32
    return %arg0, %arg2 : i32, i32
  }
  func.func @transform_1(%arg0: i32, %arg1: i32, %arg2: i32) -> (i32, i32) {
    %c0_i32 = arith.constant 0 : i32
    return %arg2, %arg1 : i32, i32
  }
  func.func @transform_2(%arg0: i32, %arg1: i32, %arg2: i32) -> (i32, i32) {
    %c0_i32 = arith.constant 0 : i32
    %c0_i32_0 = arith.constant 0 : i32
    return %c0_i32, %arg1 : i32, i32
  }
  func.func @transform_3(%arg0: i32, %arg1: i32, %arg2: i32) -> (i32, i32) {
    %c0_i32 = arith.constant 0 : i32
    return %arg0, %arg1 : i32, i32
  }
}

module attributes {stable_mosaic.version = 11 : i64} {
  func.func @_maxpool_kernel(%arg0: i32, %arg1: memref<9x16x512xbf16, #tpu.memory_space<vmem>>, %arg2: memref<16x512xbf16, #tpu.memory_space<vmem>>) attributes {dimension_semantics = [#tpu.dimension_semantics<parallel>], iteration_bounds = array<i64: 1>, scalar_prefetch = 0 : i64, scratch_operands = 0 : i64, tpu.core_type = #tpu.core_type<tc>, window_params = [{transform_indices = @transform_0, window_bounds = array<i64: 9, 16, 512>}, {transform_indices = @transform_1, window_bounds = array<i64: 16, 512>}]} {
    %c0 = arith.constant 0 : index
    %c0_0 = arith.constant 0 : index
    %c0_1 = arith.constant 0 : index
    %0 = vector.load %arg1[%c0, %c0_0, %c0_1] : memref<9x16x512xbf16, #tpu.memory_space<vmem>>, vector<1x16x512xbf16>
    %1 = vector.shape_cast %0 : vector<1x16x512xbf16> to vector<16x512xbf16>
    %c1 = arith.constant 1 : index
    %c0_2 = arith.constant 0 : index
    %c0_3 = arith.constant 0 : index
    %2 = vector.load %arg1[%c1, %c0_2, %c0_3] : memref<9x16x512xbf16, #tpu.memory_space<vmem>>, vector<1x16x512xbf16>
    %3 = vector.shape_cast %2 : vector<1x16x512xbf16> to vector<16x512xbf16>
    %c2 = arith.constant 2 : index
    %c0_4 = arith.constant 0 : index
    %c0_5 = arith.constant 0 : index
    %4 = vector.load %arg1[%c2, %c0_4, %c0_5] : memref<9x16x512xbf16, #tpu.memory_space<vmem>>, vector<1x16x512xbf16>
    %5 = vector.shape_cast %4 : vector<1x16x512xbf16> to vector<16x512xbf16>
    %c3 = arith.constant 3 : index
    %c0_6 = arith.constant 0 : index
    %c0_7 = arith.constant 0 : index
    %6 = vector.load %arg1[%c3, %c0_6, %c0_7] : memref<9x16x512xbf16, #tpu.memory_space<vmem>>, vector<1x16x512xbf16>
    %7 = vector.shape_cast %6 : vector<1x16x512xbf16> to vector<16x512xbf16>
    %c4 = arith.constant 4 : index
    %c0_8 = arith.constant 0 : index
    %c0_9 = arith.constant 0 : index
    %8 = vector.load %arg1[%c4, %c0_8, %c0_9] : memref<9x16x512xbf16, #tpu.memory_space<vmem>>, vector<1x16x512xbf16>
    %9 = vector.shape_cast %8 : vector<1x16x512xbf16> to vector<16x512xbf16>
    %c5 = arith.constant 5 : index
    %c0_10 = arith.constant 0 : index
    %c0_11 = arith.constant 0 : index
    %10 = vector.load %arg1[%c5, %c0_10, %c0_11] : memref<9x16x512xbf16, #tpu.memory_space<vmem>>, vector<1x16x512xbf16>
    %11 = vector.shape_cast %10 : vector<1x16x512xbf16> to vector<16x512xbf16>
    %c6 = arith.constant 6 : index
    %c0_12 = arith.constant 0 : index
    %c0_13 = arith.constant 0 : index
    %12 = vector.load %arg1[%c6, %c0_12, %c0_13] : memref<9x16x512xbf16, #tpu.memory_space<vmem>>, vector<1x16x512xbf16>
    %13 = vector.shape_cast %12 : vector<1x16x512xbf16> to vector<16x512xbf16>
    %c7 = arith.constant 7 : index
    %c0_14 = arith.constant 0 : index
    %c0_15 = arith.constant 0 : index
    %14 = vector.load %arg1[%c7, %c0_14, %c0_15] : memref<9x16x512xbf16, #tpu.memory_space<vmem>>, vector<1x16x512xbf16>
    %15 = vector.shape_cast %14 : vector<1x16x512xbf16> to vector<16x512xbf16>
    %c8 = arith.constant 8 : index
    %c0_16 = arith.constant 0 : index
    %c0_17 = arith.constant 0 : index
    %16 = vector.load %arg1[%c8, %c0_16, %c0_17] : memref<9x16x512xbf16, #tpu.memory_space<vmem>>, vector<1x16x512xbf16>
    %17 = vector.shape_cast %16 : vector<1x16x512xbf16> to vector<16x512xbf16>
    %18 = arith.maximumf %1, %3 : vector<16x512xbf16>
    %19 = arith.maximumf %5, %7 : vector<16x512xbf16>
    %20 = arith.maximumf %9, %11 : vector<16x512xbf16>
    %21 = arith.maximumf %13, %15 : vector<16x512xbf16>
    %22 = arith.maximumf %18, %19 : vector<16x512xbf16>
    %23 = arith.maximumf %20, %21 : vector<16x512xbf16>
    %24 = arith.maximumf %22, %23 : vector<16x512xbf16>
    %25 = arith.maximumf %24, %17 : vector<16x512xbf16>
    %c0_18 = arith.constant 0 : index
    %c0_19 = arith.constant 0 : index
    %26 = vector.load %arg2[%c0_18, %c0_19] : memref<16x512xbf16, #tpu.memory_space<vmem>>, vector<16x512xbf16>
    tpu.vector_store %arg2[%c0_18, %c0_19], %25 {strides = array<i32>} : memref<16x512xbf16, #tpu.memory_space<vmem>>, vector<16x512xbf16>,
    return
  }
  func.func @transform_0(%arg0: i32) -> (i32, i32, i32) {
    %c0_i32 = arith.constant 0 : i32
    %c0_i32_0 = arith.constant 0 : i32
    %c0_i32_1 = arith.constant 0 : i32
    return %c0_i32, %arg0, %c0_i32_0 : i32, i32, i32
  }
  func.func @transform_1(%arg0: i32) -> (i32, i32) {
    %c0_i32 = arith.constant 0 : i32
    %c0_i32_0 = arith.constant 0 : i32
    return %arg0, %c0_i32 : i32, i32
  }
}

</mosaic_0001>

<llo_original>
// kernel: tpu_custom_call.1
$region0: #{tpu_custom_call.1}
  #allocation0 [shape = 'u32[]', space=smem, size = 0x4, offset = 0x4, fixed_abs, tag = 'smem constant byte address 0x4 - core index']
  #allocation1 [shape = 'u32[144,128]{1,0:T(1,128)}', space=vmem, size = 0x12000, scoped, tag = 'internal scratch']
  %s0 = inlined_call_operand.hbm [shape: bf16[2,10,10,64], index: 0, kind: input, shape index: {}]
  %s1 = inlined_call_operand.hbm [shape: bf16[640,128], index: 1, kind: input, shape index: {}]
  %s2 = inlined_call_operand.hbm [shape: f32[1,128], index: 2, kind: input, shape index: {}]
  %s3 = inlined_call_operand.hbm [shape: bf16[128,128], index: 3, kind: output, shape index: {}]
  %s4 = sld [smem:[#allocation0]]
  $region34: #{tpu_custom_call.1} parent=0
    _
  %s6 = ssub.s32 1, %s4
  %s7 = scalar_select 0, %s6, %s4
  $region1: #{tpu_custom_call.1} parent=0
    #allocation2 [shape = 'u8[81920]{0}', space=vmem, size = 0x14000, scoped, tag = 'input window, operand 0, single buffered']
    #allocation3 [shape = 's32[1]{0}', space=sflag, size = 0x4, scoped, tag = 'scoped memory for tpu_custom_call.1']
    #allocation4 [shape = 's32[1]{0}', space=sflag, size = 0x4, scoped, tag = 'scoped memory for tpu_custom_call.1']
    #allocation5 [shape = 'u8[163840]{0}', space=vmem, size = 0x28000, scoped, tag = 'input window, operand 1, single buffered']
    #allocation6 [shape = 's32[1]{0}', space=sflag, size = 0x4, scoped, tag = 'scoped memory for tpu_custom_call.1']
    #allocation7 [shape = 'u8[512]{0}', space=vmem, size = 0x400, scoped, tag = 'input window, operand 2, single buffered']
    #allocation8 [shape = 'u8[32768]{0}', space=vmem, size = 0x8000, scoped, tag = 'output window, operand 0, single buffered']
    %8 = vsyncpa [#allocation3], 0
    %9 = vsyncpa [#allocation6], 0
    %10 = vsyncpa [#allocation4], 0
    // Predicated region
    $region2: #{tpu_custom_call.1} parent=1 // pred_check
      _
    $region3: #{tpu_custom_call.1} parent=1 // pred_check_branch
      %12 = sbr.rel (0) target = $region5
    $region4: #{tpu_custom_call.1} parent=1 // pred_region
      %s14 = ssub.s32 2560, 2560
      %15 = vsyncadd [#allocation3], %s14
      %s16 = sshll.u32 [#allocation2], 4
      %s17 = int_to_ptr.vmem [resolvable:$true] %s16
      %22 = dma.hbm_to_vmem [thread:$0]  %s0, 2560, %s17, [#allocation3], 64, 64, 4
    $region5: #{tpu_custom_call.1} parent=1 // pred_fallthru
      _
    // Predicated region
    $region6: #{tpu_custom_call.1} parent=1 // pred_check
      _
    $region7: #{tpu_custom_call.1} parent=1 // pred_check_branch
      %24 = sbr.rel (0) target = $region9
    $region8: #{tpu_custom_call.1} parent=1 // pred_region
      %s26 = ssub.s32 5120, 5120
      %27 = vsyncadd [#allocation6], %s26
      %s28 = sshll.u32 [#allocation5], 4
      %s29 = int_to_ptr.vmem [resolvable:$true] %s28
      %34 = dma.hbm_to_vmem [thread:$0]  %s1, 5120, %s29, [#allocation6], 64, 64, 4
    $region9: #{tpu_custom_call.1} parent=1 // pred_fallthru
      _
    // Predicated region
    $region10: #{tpu_custom_call.1} parent=1 // pred_check
      _
    $region11: #{tpu_custom_call.1} parent=1 // pred_check_branch
      %36 = sbr.rel (0) target = $region13
    $region12: #{tpu_custom_call.1} parent=1 // pred_region
      %s38 = ssub.s32 16, 16
      %39 = vsyncadd [#allocation6], %s38
      %s41 = sshll.u32 [#allocation7], 4
      %s42 = int_to_ptr.vmem [resolvable:$true] %s41
      %44 = dma.hbm_to_vmem [thread:$0]  %s2, 16, %s42, [#allocation6]
    $region13: #{tpu_custom_call.1} parent=1 // pred_fallthru
      _
    // Predicated region
    $region14: #{tpu_custom_call.1} parent=1 // pred_check
      _
    $region15: #{tpu_custom_call.1} parent=1 // pred_check_branch
      %46 = sbr.rel (0) target = $region17
    $region16: #{tpu_custom_call.1} parent=1 // pred_region
      %47 = dma.done [#allocation3], 2560
    $region17: #{tpu_custom_call.1} parent=1 // pred_fallthru
      _
    // Predicated region
    $region18: #{tpu_custom_call.1} parent=1 // pred_check
      _
    $region19: #{tpu_custom_call.1} parent=1 // pred_check_branch
      %49 = sbr.rel (0) target = $region21
    $region20: #{tpu_custom_call.1} parent=1 // pred_region
      %50 = dma.done [#allocation6], 5120
    $region21: #{tpu_custom_call.1} parent=1 // pred_fallthru
      _
    // Predicated region
    $region22: #{tpu_custom_call.1} parent=1 // pred_check
      _
    $region23: #{tpu_custom_call.1} parent=1 // pred_check_branch
      %52 = sbr.rel (0) target = $region25
    $region24: #{tpu_custom_call.1} parent=1 // pred_region
      %53 = dma.done [#allocation6], 16
    $region25: #{tpu_custom_call.1} parent=1 // pred_fallthru
      _
    %v55 = vld [vmem:[#allocation2] sm:$0xf]
    %v56 = vld [vmem:[#allocation2 + $0x8] sm:$0xf]
    %v57 = vld [vmem:[#allocation2 + $0x10] sm:$0xf]
    %v58 = vld [vmem:[#allocation2 + $0x18] sm:$0xf]
    %v59 = vld [vmem:[#allocation2 + $0x20] sm:$0xf]
    %v60 = vld [vmem:[#allocation2 + $0x28] sm:$0xf]
    %v61 = vld [vmem:[#allocation2 + $0x30] sm:$0xf]
    %v62 = vld [vmem:[#allocation2 + $0x38] sm:$0xf]
    %v63 = vld [vmem:[#allocation2 + $0x50] sm:$0xf]
    %v64 = vld [vmem:[#allocation2 + $0x58] sm:$0xf]
    %v65 = vld [vmem:[#allocation2 + $0x60] sm:$0xf]
    %v66 = vld [vmem:[#allocation2 + $0x68] sm:$0xf]
    %v67 = vld [vmem:[#allocation2 + $0x70] sm:$0xf]
    %v68 = vld [vmem:[#allocation2 + $0x78] sm:$0xf]
    %v69 = vld [vmem:[#allocation2 + $0x80] sm:$0xf]
    %v70 = vld [vmem:[#allocation2 + $0x88] sm:$0xf]
    %v71 = vld [vmem:[#allocation5] sm:$0xf]
    %v72 = vld [vmem:[#allocation5 + $0x4] sm:$0xf]
    %v73 = vld [vmem:[#allocation5 + $0x8] sm:$0xf]
    %v74 = vld [vmem:[#allocation5 + $0xc] sm:$0xf]
    %v75 = vld [vmem:[#allocation5 + $0x10] sm:$0xf]
    %v76 = vld [vmem:[#allocation5 + $0x14] sm:$0xf]
    %v77 = vld [vmem:[#allocation5 + $0x18] sm:$0xf]
    %v78 = vld [vmem:[#allocation5 + $0x1c] sm:$0xf]
    %v79 = vld [vmem:[#allocation2 + $0x4] sm:$0x1]
    %v80 = vld [vmem:[#allocation2 + $0xc] sm:$0x1]
    %v81 = vld [vmem:[#allocation2 + $0x14] sm:$0x1]
    %v82 = vld [vmem:[#allocation2 + $0x1c] sm:$0x1]
    %v83 = vld [vmem:[#allocation2 + $0x24] sm:$0x1]
    %v84 = vld [vmem:[#allocation2 + $0x2c] sm:$0x1]
    %v85 = vld [vmem:[#allocation2 + $0x34] sm:$0x1]
    %v86 = vld [vmem:[#allocation2 + $0x3c] sm:$0x1]
    %v87 = vld [vmem:[#allocation2 + $0x54] sm:$0x1]
    %v88 = vld [vmem:[#allocation2 + $0x5c] sm:$0x1]
    %v89 = vld [vmem:[#allocation2 + $0x64] sm:$0x1]
    %v90 = vld [vmem:[#allocation2 + $0x6c] sm:$0x1]
    %v91 = vld [vmem:[#allocation2 + $0x74] sm:$0x1]
    %v92 = vld [vmem:[#allocation2 + $0x7c] sm:$0x1]
    %v93 = vld [vmem:[#allocation2 + $0x84] sm:$0x1]
    %v94 = vld [vmem:[#allocation2 + $0x8c] sm:$0x1]
    %vm95 = vsmask.f32 3328
    %vm96 = vsmask.f32 7440
    %vm97 = vmor %vm95, %vm96
    %v99 = vshrl.u32 %v55, 16
    %v101 = vrot.slane %v99, 4
    %v102 = vshll.u32 %v55, 16
    %v104 = vrot.slane %v102, 5
    %v105 = vor.u32 %v101, %v104
    %v106 = vrot.slane %v105, 4
    %v108 = vshll.u32 %v79, 16
    %v110 = vrot.slane %v108, 5
    %v111 = vsel %vm97, %v106, %v110
    %v113 = vshrl.u32 %v56, 16
    %v115 = vrot.slane %v113, 4
    %v116 = vshll.u32 %v56, 16
    %v118 = vrot.slane %v116, 5
    %v119 = vor.u32 %v115, %v118
    %v120 = vrot.slane %v119, 4
    %v122 = vshll.u32 %v80, 16
    %v124 = vrot.slane %v122, 5
    %v125 = vsel %vm97, %v120, %v124
    %v127 = vshrl.u32 %v57, 16
    %v129 = vrot.slane %v127, 4
    %v130 = vshll.u32 %v57, 16
    %v132 = vrot.slane %v130, 5
    %v133 = vor.u32 %v129, %v132
    %v134 = vrot.slane %v133, 4
    %v136 = vshll.u32 %v81, 16
    %v138 = vrot.slane %v136, 5
    %v139 = vsel %vm97, %v134, %v138
    %v141 = vshrl.u32 %v58, 16
    %v143 = vrot.slane %v141, 4
    %v144 = vshll.u32 %v58, 16
    %v146 = vrot.slane %v144, 5
    %v147 = vor.u32 %v143, %v146
    %v148 = vrot.slane %v147, 4
    %v150 = vshll.u32 %v82, 16
    %v152 = vrot.slane %v150, 5
    %v153 = vsel %vm97, %v148, %v152
    %v155 = vshrl.u32 %v59, 16
    %v157 = vrot.slane %v155, 4
    %v158 = vshll.u32 %v59, 16
    %v160 = vrot.slane %v158, 5
    %v161 = vor.u32 %v157, %v160
    %v162 = vrot.slane %v161, 4
    %v164 = vshll.u32 %v83, 16
    %v166 = vrot.slane %v164, 5
    %v167 = vsel %vm97, %v162, %v166
    %v169 = vshrl.u32 %v60, 16
    %v171 = vrot.slane %v169, 4
    %v172 = vshll.u32 %v60, 16
    %v174 = vrot.slane %v172, 5
    %v175 = vor.u32 %v171, %v174
    %v176 = vrot.slane %v175, 4
    %v178 = vshll.u32 %v84, 16
    %v180 = vrot.slane %v178, 5
    %v181 = vsel %vm97, %v176, %v180
    %v183 = vshrl.u32 %v61, 16
    %v185 = vrot.slane %v183, 4
    %v186 = vshll.u32 %v61, 16
    %v188 = vrot.slane %v186, 5
    %v189 = vor.u32 %v185, %v188
    %v190 = vrot.slane %v189, 4
    %v192 = vshll.u32 %v85, 16
    %v194 = vrot.slane %v192, 5
    %v195 = vsel %vm97, %v190, %v194
    %v197 = vshrl.u32 %v62, 16
    %v199 = vrot.slane %v197, 4
    %v200 = vshll.u32 %v62, 16
    %v202 = vrot.slane %v200, 5
    %v203 = vor.u32 %v199, %v202
    %v204 = vrot.slane %v203, 4
    %v206 = vshll.u32 %v86, 16
    %v208 = vrot.slane %v206, 5
    %v209 = vsel %vm97, %v204, %v208
    %v211 = vshrl.u32 %v63, 16
    %v213 = vrot.slane %v211, 4
    %v214 = vshll.u32 %v63, 16
    %v216 = vrot.slane %v214, 5
    %v217 = vor.u32 %v213, %v216
    %v218 = vrot.slane %v217, 4
    %v220 = vshll.u32 %v87, 16
    %v222 = vrot.slane %v220, 5
    %v223 = vsel %vm97, %v218, %v222
    %v225 = vshrl.u32 %v64, 16
    %v227 = vrot.slane %v225, 4
    %v228 = vshll.u32 %v64, 16
    %v230 = vrot.slane %v228, 5
    %v231 = vor.u32 %v227, %v230
    %v232 = vrot.slane %v231, 4
    %v234 = vshll.u32 %v88, 16
    %v236 = vrot.slane %v234, 5
    %v237 = vsel %vm97, %v232, %v236
    %v239 = vshrl.u32 %v65, 16
    %v241 = vrot.slane %v239, 4
    %v242 = vshll.u32 %v65, 16
    %v244 = vrot.slane %v242, 5
    %v245 = vor.u32 %v241, %v244
    %v246 = vrot.slane %v245, 4
    %v248 = vshll.u32 %v89, 16
    %v250 = vrot.slane %v248, 5
    %v251 = vsel %vm97, %v246, %v250
    %v253 = vshrl.u32 %v66, 16
    %v255 = vrot.slane %v253, 4
    %v256 = vshll.u32 %v66, 16
    %v258 = vrot.slane %v256, 5
    %v259 = vor.u32 %v255, %v258
    %v260 = vrot.slane %v259, 4
    %v262 = vshll.u32 %v90, 16
    %v264 = vrot.slane %v262, 5
    %v265 = vsel %vm97, %v260, %v264
    %v267 = vshrl.u32 %v67, 16
    %v269 = vrot.slane %v267, 4
    %v270 = vshll.u32 %v67, 16
    %v272 = vrot.slane %v270, 5
    %v273 = vor.u32 %v269, %v272
    %v274 = vrot.slane %v273, 4
    %v276 = vshll.u32 %v91, 16
    %v278 = vrot.slane %v276, 5
    %v279 = vsel %vm97, %v274, %v278
    %v281 = vshrl.u32 %v68, 16
    %v283 = vrot.slane %v281, 4
    %v284 = vshll.u32 %v68, 16
    %v286 = vrot.slane %v284, 5
    %v287 = vor.u32 %v283, %v286
    %v288 = vrot.slane %v287, 4
    %v290 = vshll.u32 %v92, 16
    %v292 = vrot.slane %v290, 5
    %v293 = vsel %vm97, %v288, %v292
    %v295 = vshrl.u32 %v69, 16
    %v297 = vrot.slane %v295, 4
    %v298 = vshll.u32 %v69, 16
    %v300 = vrot.slane %v298, 5
    %v301 = vor.u32 %v297, %v300
    %v302 = vrot.slane %v301, 4
    %v304 = vshll.u32 %v93, 16
    %v306 = vrot.slane %v304, 5
    %v307 = vsel %vm97, %v302, %v306
    %v309 = vshrl.u32 %v70, 16
    %v311 = vrot.slane %v309, 4
    %v312 = vshll.u32 %v70, 16
    %v314 = vrot.slane %v312, 5
    %v315 = vor.u32 %v311, %v314
    %v316 = vrot.slane %v315, 4
    %v318 = vshll.u32 %v94, 16
    %v320 = vrot.slane %v318, 5
    %v321 = vsel %vm97, %v316, %v320
    %v322 = vld [vmem:[#allocation5 + $0x20] sm:$0xf]
    %v323 = vld [vmem:[#allocation5 + $0x24] sm:$0xf]
    %v324 = vld [vmem:[#allocation5 + $0x28] sm:$0xf]
    %v325 = vld [vmem:[#allocation5 + $0x2c] sm:$0xf]
    %v326 = vld [vmem:[#allocation5 + $0x30] sm:$0xf]
    %v327 = vld [vmem:[#allocation5 + $0x34] sm:$0xf]
    %v328 = vld [vmem:[#allocation5 + $0x38] sm:$0xf]
    %v329 = vld [vmem:[#allocation5 + $0x3c] sm:$0xf]
    %v330 = vunpack.c.l.b16 %v111
    %v331 = vunpack.c.l.b16 %v125
    %v332 = vunpack.c.l.b16 %v139
    %v333 = vunpack.c.l.b16 %v153
    %v334 = vunpack.c.l.b16 %v167
    %v335 = vunpack.c.l.b16 %v181
    %v336 = vunpack.c.l.b16 %v195
    %v337 = vunpack.c.l.b16 %v209
    %v338 = vunpack.c.l.b16 %v223
    %v339 = vunpack.c.l.b16 %v237
    %v340 = vunpack.c.l.b16 %v251
    %v341 = vunpack.c.l.b16 %v265
    %v342 = vunpack.c.l.b16 %v279
    %v343 = vunpack.c.l.b16 %v293
    %v344 = vunpack.c.l.b16 %v307
    %v345 = vunpack.c.l.b16 %v321
    %v346 = vpack.c.b16 %v331, %v330
    %v347 = vpack.c.b16 %v333, %v332
    %v348 = vpack.c.b16 %v335, %v334
    %v349 = vpack.c.b16 %v337, %v336
    %v350 = vpack.c.b16 %v339, %v338
    %v351 = vpack.c.b16 %v341, %v340
    %v352 = vpack.c.b16 %v343, %v342
    %v353 = vpack.c.b16 %v345, %v344
    %v362 = vunpack.c.l.b16 %v322
    %v363 = vunpack.c.l.b16 %v323
    %v364 = vunpack.c.l.b16 %v324
    %v365 = vunpack.c.l.b16 %v325
    %v366 = vunpack.c.l.b16 %v326
    %v367 = vunpack.c.l.b16 %v327
    %v368 = vunpack.c.l.b16 %v328
    %v369 = vunpack.c.l.b16 %v329
    %v370 = vpack.c.b16 %v363, %v362
    %v371 = vpack.c.b16 %v365, %v364
    %v372 = vpack.c.b16 %v367, %v366
    %v373 = vpack.c.b16 %v369, %v368
    %vm378 = vcmask 523264
    %v380 = vsel %vm378, %v346, 0
    %v383 = vsel %vm378, %v347, 0
    %v386 = vsel %vm378, %v348, 0
    %v389 = vsel %vm378, %v349, 0
    %v392 = vsel %vm378, %v350, 0
    %v395 = vsel %vm378, %v351, 0
    %v398 = vsel %vm378, %v352, 0
    %v401 = vsel %vm378, %v353, 0
    %403 = vmatprep.subr.bf16.mxu0 0
    %404 = vmatpush1.bf16.msra.mxu0 %v370
    %405 = vmatprep.subr.bf16.mxu0 0
    %406 = vmatpush1.bf16.msra.mxu0 %v371
    %407 = vmatprep.subr.bf16.mxu0 0
    %408 = vmatpush1.bf16.msra.mxu0 %v372
    %409 = vmatprep.subr.bf16.mxu0 0
    %410 = vmatpush1.bf16.msra.mxu0 %v373
    %411 = vmatprep.subr.bf16.mxu0 0
    %412 = vmatpush1.bf16.msra.mxu0 0
    %413 = vmatprep.subr.bf16.mxu0 0
    %414 = vmatpush1.bf16.msra.mxu0 0
    %415 = vmatprep.subr.bf16.mxu0 0
    %416 = vmatpush1.bf16.msra.mxu0 0
    %417 = vmatprep.subr.bf16.mxu0 0
    %418 = vmatpush1.bf16.msra.mxu0 0
    %419 = vmatprep.subr.bf16.mxu0 0
    %420 = vmatpush1.bf16.msra.mxu0 0
    %421 = vmatprep.subr.bf16.mxu0 0
    %422 = vmatpush1.bf16.msra.mxu0 0
    %423 = vmatprep.subr.bf16.mxu0 0
    %424 = vmatpush1.bf16.msra.mxu0 0
    %425 = vmatprep.subr.bf16.mxu0 0
    %426 = vmatpush1.bf16.msra.mxu0 0
    %427 = vmatprep.subr.bf16.mxu0 0
    %428 = vmatpush1.bf16.msra.mxu0 0
    %429 = vmatprep.subr.bf16.mxu0 0
    %430 = vmatpush1.bf16.msra.mxu0 0
    %431 = vmatprep.subr.bf16.mxu0 0
    %432 = vmatpush1.bf16.msra.mxu0 0
    %433 = vmatprep.subr.bf16.mxu0 0
    %434 = vmatpush1.bf16.msra.mxu0 0
    %435 = vmatprep.mubr.bf16.mxu0 0
    %436 = vmatmul.mubr.bf16.gmra.mrb[0].mxu0 %v380
    %v437 = vpop.f32.mrb[0].mxu0
    %v438 = vadd.f32 0.0, %v437
    %v439 = vpop.f32.mrb[0].mxu0
    %v440 = vpop.f32.mrb[0].mxu0
    %v441 = vadd.f32 0.0, %v440
    %v442 = vpop.f32.mrb[0].mxu0
    %443 = vmatprep.mubr.bf16.mxu0 0
    %444 = vmatmul.mubr.bf16.gmra.mrb[0].mxu0 %v383
    %v445 = vpop.f32.mrb[0].mxu0
    %v446 = vadd.f32 0.0, %v445
    %v447 = vpop.f32.mrb[0].mxu0
    %v448 = vpop.f32.mrb[0].mxu0
    %v449 = vadd.f32 0.0, %v448
    %v450 = vpop.f32.mrb[0].mxu0
    %451 = vmatprep.mubr.bf16.mxu0 0
    %452 = vmatmul.mubr.bf16.gmra.mrb[0].mxu0 %v386
    %v453 = vpop.f32.mrb[0].mxu0
    %v454 = vadd.f32 0.0, %v453
    %v455 = vpop.f32.mrb[0].mxu0
    %v456 = vpop.f32.mrb[0].mxu0
    %v457 = vadd.f32 0.0, %v456
    %v458 = vpop.f32.mrb[0].mxu0
    %459 = vmatprep.mubr.bf16.mxu0 0
    %460 = vmatmul.mubr.bf16.gmra.mrb[0].mxu0 %v389
    %v461 = vpop.f32.mrb[0].mxu0
    %v462 = vadd.f32 0.0, %v461
    %v463 = vpop.f32.mrb[0].mxu0
    %v464 = vpop.f32.mrb[0].mxu0
    %v465 = vadd.f32 0.0, %v464
    %v466 = vpop.f32.mrb[0].mxu0
    %467 = vmatprep.mubr.bf16.mxu0 0
    %468 = vmatmul.mubr.bf16.gmra.mrb[0].mxu0 %v392
    %v469 = vpop.f32.mrb[0].mxu0
    %v470 = vadd.f32 0.0, %v469
    %v471 = vpop.f32.mrb[0].mxu0
    %v472 = vpop.f32.mrb[0].mxu0
    %v473 = vadd.f32 0.0, %v472
    %v474 = vpop.f32.mrb[0].mxu0
    %475 = vmatprep.mubr.bf16.mxu0 0
    %476 = vmatmul.mubr.bf16.gmra.mrb[0].mxu0 %v395
    %v477 = vpop.f32.mrb[0].mxu0
    %v478 = vadd.f32 0.0, %v477
    %v479 = vpop.f32.mrb[0].mxu0
    %v480 = vpop.f32.mrb[0].mxu0
    %v481 = vadd.f32 0.0, %v480
    %v482 = vpop.f32.mrb[0].mxu0
    %483 = vmatprep.mubr.bf16.mxu0 0
    %484 = vmatmul.mubr.bf16.gmra.mrb[0].mxu0 %v398
    %v485 = vpop.f32.mrb[0].mxu0
    %v486 = vadd.f32 0.0, %v485
    %v487 = vpop.f32.mrb[0].mxu0
    %v488 = vpop.f32.mrb[0].mxu0
    %v489 = vadd.f32 0.0, %v488
    %v490 = vpop.f32.mrb[0].mxu0
    %491 = vmatprep.mubr.bf16.mxu0 0
    %492 = vmatmul.mubr.bf16.gmra.mrb[0].mxu0 %v401
    %v493 = vpop.f32.mrb[0].mxu0
    %v494 = vadd.f32 0.0, %v493
    %v495 = vpop.f32.mrb[0].mxu0
    %v496 = vpop.f32.mrb[0].mxu0
    %v497 = vadd.f32 0.0, %v496
    %v498 = vpop.f32.mrb[0].mxu0
    %499 = vdwg.mxu0
    %v516 = vunpack.c.l.b16 %v55
    %v517 = vunpack.c.l.b16 %v56
    %v518 = vunpack.c.l.b16 %v57
    %v519 = vunpack.c.l.b16 %v58
    %v520 = vunpack.c.l.b16 %v59
    %v521 = vunpack.c.l.b16 %v60
    %v522 = vunpack.c.l.b16 %v61
    %v523 = vunpack.c.l.b16 %v62
    %v524 = vunpack.c.l.b16 %v63
    %v525 = vunpack.c.l.b16 %v64
    %v526 = vunpack.c.l.b16 %v65
    %v527 = vunpack.c.l.b16 %v66
    %v528 = vunpack.c.l.b16 %v67
    %v529 = vunpack.c.l.b16 %v68
    %v530 = vunpack.c.l.b16 %v69
    %v531 = vunpack.c.l.b16 %v70
    %v532 = vpack.c.b16 %v517, %v516
    %v533 = vpack.c.b16 %v519, %v518
    %v534 = vpack.c.b16 %v521, %v520
    %v535 = vpack.c.b16 %v523, %v522
    %v536 = vpack.c.b16 %v525, %v524
    %v537 = vpack.c.b16 %v527, %v526
    %v538 = vpack.c.b16 %v529, %v528
    %v539 = vpack.c.b16 %v531, %v530
    %v548 = vunpack.c.l.b16 %v71
    %v549 = vunpack.c.l.b16 %v72
    %v550 = vunpack.c.l.b16 %v73
    %v551 = vunpack.c.l.b16 %v74
    %v552 = vunpack.c.l.b16 %v75
    %v553 = vunpack.c.l.b16 %v76
    %v554 = vunpack.c.l.b16 %v77
    %v555 = vunpack.c.l.b16 %v78
    %v556 = vpack.c.b16 %v549, %v548
    %v557 = vpack.c.b16 %v551, %v550
    %v558 = vpack.c.b16 %v553, %v552
    %v559 = vpack.c.b16 %v555, %v554
    %v565 = vsel %vm378, %v532, 0
    %v568 = vsel %vm378, %v533, 0
    %v571 = vsel %vm378, %v534, 0
    %v574 = vsel %vm378, %v535, 0
    %v577 = vsel %vm378, %v536, 0
    %v580 = vsel %vm378, %v537, 0
    %v583 = vsel %vm378, %v538, 0
    %v586 = vsel %vm378, %v539, 0
    %588 = vmatprep.subr.bf16.mxu0 0
    %589 = vmatpush1.bf16.msra.mxu0 %v556
    %590 = vmatprep.subr.bf16.mxu0 0
    %591 = vmatpush1.bf16.msra.mxu0 %v557
    %592 = vmatprep.subr.bf16.mxu0 0
    %593 = vmatpush1.bf16.msra.mxu0 %v558
    %594 = vmatprep.subr.bf16.mxu0 0
    %595 = vmatpush1.bf16.msra.mxu0 %v559
    %596 = vmatprep.subr.bf16.mxu0 0
    %597 = vmatpush1.bf16.msra.mxu0 0
    %598 = vmatprep.subr.bf16.mxu0 0
    %599 = vmatpush1.bf16.msra.mxu0 0
    %600 = vmatprep.subr.bf16.mxu0 0
    %601 = vmatpush1.bf16.msra.mxu0 0
    %602 = vmatprep.subr.bf16.mxu0 0
    %603 = vmatpush1.bf16.msra.mxu0 0
    %604 = vmatprep.subr.bf16.mxu0 0
    %605 = vmatpush1.bf16.msra.mxu0 0
    %606 = vmatprep.subr.bf16.mxu0 0
    %607 = vmatpush1.bf16.msra.mxu0 0
    %608 = vmatprep.subr.bf16.mxu0 0
    %609 = vmatpush1.bf16.msra.mxu0 0
    %610 = vmatprep.subr.bf16.mxu0 0
    %611 = vmatpush1.bf16.msra.mxu0 0
    %612 = vmatprep.subr.bf16.mxu0 0
    %613 = vmatpush1.bf16.msra.mxu0 0
    %614 = vmatprep.subr.bf16.mxu0 0
    %615 = vmatpush1.bf16.msra.mxu0 0
    %616 = vmatprep.subr.bf16.mxu0 0
    %617 = vmatpush1.bf16.msra.mxu0 0
    %618 = vmatprep.subr.bf16.mxu0 0
    %619 = vmatpush1.bf16.msra.mxu0 0
    %620 = vmatprep.mubr.bf16.mxu0 0
    %621 = vmatmul.mubr.bf16.gmra.mrb[0].mxu0 %v565
    %v622 = vpop.f32.mrb[0].mxu0
    %v623 = vadd.f32 %v438, %v622
    %v624 = vpop.f32.mrb[0].mxu0
    %v625 = vpop.f32.mrb[0].mxu0
    %v626 = vadd.f32 %v441, %v625
    %v627 = vpop.f32.mrb[0].mxu0
    %628 = vmatprep.mubr.bf16.mxu0 0
    %629 = vmatmul.mubr.bf16.gmra.mrb[0].mxu0 %v568
    %v630 = vpop.f32.mrb[0].mxu0
    %v631 = vadd.f32 %v446, %v630
    %v632 = vpop.f32.mrb[0].mxu0
    %v633 = vpop.f32.mrb[0].mxu0
    %v634 = vadd.f32 %v449, %v633
    %v635 = vpop.f32.mrb[0].mxu0
    %636 = vmatprep.mubr.bf16.mxu0 0
    %637 = vmatmul.mubr.bf16.gmra.mrb[0].mxu0 %v571
    %v638 = vpop.f32.mrb[0].mxu0
    %v639 = vadd.f32 %v454, %v638
    %v640 = vpop.f32.mrb[0].mxu0
    %v641 = vpop.f32.mrb[0].mxu0
    %v642 = vadd.f32 %v457, %v641
    %v643 = vpop.f32.mrb[0].mxu0
    %644 = vmatprep.mubr.bf16.mxu0 0
    %645 = vmatmul.mubr.bf16.gmra.mrb[0].mxu0 %v574
    %v646 = vpop.f32.mrb[0].mxu0
    %v647 = vadd.f32 %v462, %v646
    %v648 = vpop.f32.mrb[0].mxu0
    %v649 = vpop.f32.mrb[0].mxu0
    %v650 = vadd.f32 %v465, %v649
    %v651 = vpop.f32.mrb[0].mxu0
    %652 = vmatprep.mubr.bf16.mxu0 0
    %653 = vmatmul.mubr.bf16.gmra.mrb[0].mxu0 %v577
    %v654 = vpop.f32.mrb[0].mxu0
    %v655 = vadd.f32 %v470, %v654
    %v656 = vpop.f32.mrb[0].mxu0
    %v657 = vpop.f32.mrb[0].mxu0
    %v658 = vadd.f32 %v473, %v657
    %v659 = vpop.f32.mrb[0].mxu0
    %660 = vmatprep.mubr.bf16.mxu0 0
    %661 = vmatmul.mubr.bf16.gmra.mrb[0].mxu0 %v580
    %v662 = vpop.f32.mrb[0].mxu0
    %v663 = vadd.f32 %v478, %v662
    %v664 = vpop.f32.mrb[0].mxu0
    %v665 = vpop.f32.mrb[0].mxu0
    %v666 = vadd.f32 %v481, %v665
    %v667 = vpop.f32.mrb[0].mxu0
    %668 = vmatprep.mubr.bf16.mxu0 0
    %669 = vmatmul.mubr.bf16.gmra.mrb[0].mxu0 %v583
    %v670 = vpop.f32.mrb[0].mxu0
    %v671 = vadd.f32 %v486, %v670
    %v672 = vpop.f32.mrb[0].mxu0
    %v673 = vpop.f32.mrb[0].mxu0
    %v674 = vadd.f32 %v489, %v673
    %v675 = vpop.f32.mrb[0].mxu0
    %676 = vmatprep.mubr.bf16.mxu0 0
    %677 = vmatmul.mubr.bf16.gmra.mrb[0].mxu0 %v586
    %v678 = vpop.f32.mrb[0].mxu0
    %v679 = vadd.f32 %v494, %v678
    %v680 = vpop.f32.mrb[0].mxu0
    %v681 = vpop.f32.mrb[0].mxu0
    %v682 = vadd.f32 %v497, %v681
    %v683 = vpop.f32.mrb[0].mxu0
    %684 = vdwg.mxu0
    %v685 = vld [vmem:[#allocation2] sm:$0xe]
    %v686 = vld [vmem:[#allocation2 + $0x8] sm:$0xe]
    %v687 = vld [vmem:[#allocation2 + $0x10] sm:$0xe]
    %v688 = vld [vmem:[#allocation2 + $0x18] sm:$0xe]
    %v689 = vld [vmem:[#allocation2 + $0x20] sm:$0xe]
    %v690 = vld [vmem:[#allocation2 + $0x28] sm:$0xe]
    %v691 = vld [vmem:[#allocation2 + $0x30] sm:$0xe]
    %v692 = vld [vmem:[#allocation2 + $0x38] sm:$0xe]
    %v693 = vld [vmem:[#allocation2 + $0x50] sm:$0xe]
    %v694 = vld [vmem:[#allocation2 + $0x58] sm:$0xe]
    %v695 = vld [vmem:[#allocation2 + $0x60] sm:$0xe]
    %v696 = vld [vmem:[#allocation2 + $0x68] sm:$0xe]
    %v697 = vld [vmem:[#allocation2 + $0x70] sm:$0xe]
    %v698 = vld [vmem:[#allocation2 + $0x78] sm:$0xe]
    %v699 = vld [vmem:[#allocation2 + $0x80] sm:$0xe]
    %v700 = vld [vmem:[#allocation2 + $0x88] sm:$0xe]
    %vm733 = vcmask 1042432
    %vm734 = vcmask 1046532
    %vm735 = vmor %vm733, %vm734
    %v736 = vrot.slane %v685, 5
    %v737 = vrot.slane %v736, 4
    %v738 = vrot.slane %v79, 5
    %v739 = vsel %vm735, %v737, %v738
    %v740 = vrot.slane %v686, 5
    %v741 = vrot.slane %v740, 4
    %v742 = vrot.slane %v80, 5
    %v743 = vsel %vm735, %v741, %v742
    %v744 = vrot.slane %v687, 5
    %v745 = vrot.slane %v744, 4
    %v746 = vrot.slane %v81, 5
    %v747 = vsel %vm735, %v745, %v746
    %v748 = vrot.slane %v688, 5
    %v749 = vrot.slane %v748, 4
    %v750 = vrot.slane %v82, 5
    %v751 = vsel %vm735, %v749, %v750
    %v752 = vrot.slane %v689, 5
    %v753 = vrot.slane %v752, 4
    %v754 = vrot.slane %v83, 5
    %v755 = vsel %vm735, %v753, %v754
    %v756 = vrot.slane %v690, 5
    %v757 = vrot.slane %v756, 4
    %v758 = vrot.slane %v84, 5
    %v759 = vsel %vm735, %v757, %v758
    %v760 = vrot.slane %v691, 5
    %v761 = vrot.slane %v760, 4
    %v762 = vrot.slane %v85, 5
    %v763 = vsel %vm735, %v761, %v762
    %v764 = vrot.slane %v692, 5
    %v765 = vrot.slane %v764, 4
    %v766 = vrot.slane %v86, 5
    %v767 = vsel %vm735, %v765, %v766
    %v768 = vrot.slane %v693, 5
    %v769 = vrot.slane %v768, 4
    %v770 = vrot.slane %v87, 5
    %v771 = vsel %vm735, %v769, %v770
    %v772 = vrot.slane %v694, 5
    %v773 = vrot.slane %v772, 4
    %v774 = vrot.slane %v88, 5
    %v775 = vsel %vm735, %v773, %v774
    %v776 = vrot.slane %v695, 5
    %v777 = vrot.slane %v776, 4
    %v778 = vrot.slane %v89, 5
    %v779 = vsel %vm735, %v777, %v778
    %v780 = vrot.slane %v696, 5
    %v781 = vrot.slane %v780, 4
    %v782 = vrot.slane %v90, 5
    %v783 = vsel %vm735, %v781, %v782
    %v784 = vrot.slane %v697, 5
    %v785 = vrot.slane %v784, 4
    %v786 = vrot.slane %v91, 5
    %v787 = vsel %vm735, %v785, %v786
    %v788 = vrot.slane %v698, 5
    %v789 = vrot.slane %v788, 4
    %v790 = vrot.slane %v92, 5
    %v791 = vsel %vm735, %v789, %v790
    %v792 = vrot.slane %v699, 5
    %v793 = vrot.slane %v792, 4
    %v794 = vrot.slane %v93, 5
    %v795 = vsel %vm735, %v793, %v794
    %v796 = vrot.slane %v700, 5
    %v797 = vrot.slane %v796, 4
    %v798 = vrot.slane %v94, 5
    %v799 = vsel %vm735, %v797, %v798
    %v800 = vld [vmem:[#allocation5 + $0x40] sm:$0xf]
    %v801 = vld [vmem:[#allocation5 + $0x44] sm:$0xf]
    %v802 = vld [vmem:[#allocation5 + $0x48] sm:$0xf]
    %v803 = vld [vmem:[#allocation5 + $0x4c] sm:$0xf]
    %v804 = vld [vmem:[#allocation5 + $0x50] sm:$0xf]
    %v805 = vld [vmem:[#allocation5 + $0x54] sm:$0xf]
    %v806 = vld [vmem:[#allocation5 + $0x58] sm:$0xf]
    %v807 = vld [vmem:[#allocation5 + $0x5c] sm:$0xf]
    %v808 = vunpack.c.l.b16 %v739
    %v809 = vunpack.c.l.b16 %v743
    %v810 = vunpack.c.l.b16 %v747
    %v811 = vunpack.c.l.b16 %v751
    %v812 = vunpack.c.l.b16 %v755
    %v813 = vunpack.c.l.b16 %v759
    %v814 = vunpack.c.l.b16 %v763
    %v815 = vunpack.c.l.b16 %v767
    %v816 = vunpack.c.l.b16 %v771
    %v817 = vunpack.c.l.b16 %v775
    %v818 = vunpack.c.l.b16 %v779
    %v819 = vunpack.c.l.b16 %v783
    %v820 = vunpack.c.l.b16 %v787
    %v821 = vunpack.c.l.b16 %v791
    %v822 = vunpack.c.l.b16 %v795
    %v823 = vunpack.c.l.b16 %v799
    %v824 = vpack.c.b16 %v809, %v808
    %v825 = vpack.c.b16 %v811, %v810
    %v826 = vpack.c.b16 %v813, %v812
    %v827 = vpack.c.b16 %v815, %v814
    %v828 = vpack.c.b16 %v817, %v816
    %v829 = vpack.c.b16 %v819, %v818
    %v830 = vpack.c.b16 %v821, %v820
    %v831 = vpack.c.b16 %v823, %v822
    %v840 = vunpack.c.l.b16 %v800
    %v841 = vunpack.c.l.b16 %v801
    %v842 = vunpack.c.l.b16 %v802
    %v843 = vunpack.c.l.b16 %v803
    %v844 = vunpack.c.l.b16 %v804
    %v845 = vunpack.c.l.b16 %v805
    %v846 = vunpack.c.l.b16 %v806
    %v847 = vunpack.c.l.b16 %v807
    %v848 = vpack.c.b16 %v841, %v840
    %v849 = vpack.c.b16 %v843, %v842
    %v850 = vpack.c.b16 %v845, %v844
    %v851 = vpack.c.b16 %v847, %v846
    %v857 = vsel %vm378, %v824, 0
    %v860 = vsel %vm378, %v825, 0
    %v863 = vsel %vm378, %v826, 0
    %v866 = vsel %vm378, %v827, 0
    %v869 = vsel %vm378, %v828, 0
    %v872 = vsel %vm378, %v829, 0
    %v875 = vsel %vm378, %v830, 0
    %v878 = vsel %vm378, %v831, 0
    %880 = vmatprep.subr.bf16.mxu0 0
    %881 = vmatpush1.bf16.msra.mxu0 %v848
    %882 = vmatprep.subr.bf16.mxu0 0
    %883 = vmatpush1.bf16.msra.mxu0 %v849
    %884 = vmatprep.subr.bf16.mxu0 0
    %885 = vmatpush1.bf16.msra.mxu0 %v850
    %886 = vmatprep.subr.bf16.mxu0 0
    %887 = vmatpush1.bf16.msra.mxu0 %v851
    %888 = vmatprep.subr.bf16.mxu0 0
    %889 = vmatpush1.bf16.msra.mxu0 0
    %890 = vmatprep.subr.bf16.mxu0 0
    %891 = vmatpush1.bf16.msra.mxu0 0
    %892 = vmatprep.subr.bf16.mxu0 0
    %893 = vmatpush1.bf16.msra.mxu0 0
    %894 = vmatprep.subr.bf16.mxu0 0
    %895 = vmatpush1.bf16.msra.mxu0 0
    %896 = vmatprep.subr.bf16.mxu0 0
    %897 = vmatpush1.bf16.msra.mxu0 0
    %898 = vmatprep.subr.bf16.mxu0 0
    %899 = vmatpush1.bf16.msra.mxu0 0
    %900 = vmatprep.subr.bf16.mxu0 0
    %901 = vmatpush1.bf16.msra.mxu0 0
    %902 = vmatprep.subr.bf16.mxu0 0
    %903 = vmatpush1.bf16.msra.mxu0 0
    %904 = vmatprep.subr.bf16.mxu0 0
    %905 = vmatpush1.bf16.msra.mxu0 0
    %906 = vmatprep.subr.bf16.mxu0 0
    %907 = vmatpush1.bf16.msra.mxu0 0
    %908 = vmatprep.subr.bf16.mxu0 0
    %909 = vmatpush1.bf16.msra.mxu0 0
    %910 = vmatprep.subr.bf16.mxu0 0
    %911 = vmatpush1.bf16.msra.mxu0 0
    %912 = vmatprep.mubr.bf16.mxu0 0
    %913 = vmatmul.mubr.bf16.gmra.mrb[0].mxu0 %v857
    %v914 = vpop.f32.mrb[0].mxu0
    %v915 = vadd.f32 0.0, %v914
    %v916 = vpop.f32.mrb[0].mxu0
    %v917 = vpop.f32.mrb[0].mxu0
    %v918 = vadd.f32 0.0, %v917
    %v919 = vpop.f32.mrb[0].mxu0
    %920 = vmatprep.mubr.bf16.mxu0 0
    %921 = vmatmul.mubr.bf16.gmra.mrb[0].mxu0 %v860
    %v922 = vpop.f32.mrb[0].mxu0
    %v923 = vadd.f32 0.0, %v922
    %v924 = vpop.f32.mrb[0].mxu0
    %v925 = vpop.f32.mrb[0].mxu0
    %v926 = vadd.f32 0.0, %v925
    %v927 = vpop.f32.mrb[0].mxu0
    %928 = vmatprep.mubr.bf16.mxu0 0
    %929 = vmatmul.mubr.bf16.gmra.mrb[0].mxu0 %v863
    %v930 = vpop.f32.mrb[0].mxu0
    %v931 = vadd.f32 0.0, %v930
    %v932 = vpop.f32.mrb[0].mxu0
    %v933 = vpop.f32.mrb[0].mxu0
    %v934 = vadd.f32 0.0, %v933
    %v935 = vpop.f32.mrb[0].mxu0
    %936 = vmatprep.mubr.bf16.mxu0 0
    %937 = vmatmul.mubr.bf16.gmra.mrb[0].mxu0 %v866
    %v938 = vpop.f32.mrb[0].mxu0
    %v939 = vadd.f32 0.0, %v938
    %v940 = vpop.f32.mrb[0].mxu0
    %v941 = vpop.f32.mrb[0].mxu0
    %v942 = vadd.f32 0.0, %v941
    %v943 = vpop.f32.mrb[0].mxu0
    %944 = vmatprep.mubr.bf16.mxu0 0
    %945 = vmatmul.mubr.bf16.gmra.mrb[0].mxu0 %v869
    %v946 = vpop.f32.mrb[0].mxu0
    %v947 = vadd.f32 0.0, %v946
    %v948 = vpop.f32.mrb[0].mxu0
    %v949 = vpop.f32.mrb[0].mxu0
    %v950 = vadd.f32 0.0, %v949
    %v951 = vpop.f32.mrb[0].mxu0
    %952 = vmatprep.mubr.bf16.mxu0 0
    %953 = vmatmul.mubr.bf16.gmra.mrb[0].mxu0 %v872
    %v954 = vpop.f32.mrb[0].mxu0
    %v955 = vadd.f32 0.0, %v954
    %v956 = vpop.f32.mrb[0].mxu0
    %v957 = vpop.f32.mrb[0].mxu0
    %v958 = vadd.f32 0.0, %v957
    %v959 = vpop.f32.mrb[0].mxu0
    %960 = vmatprep.mubr.bf16.mxu0 0
    %961 = vmatmul.mubr.bf16.gmra.mrb[0].mxu0 %v875
    %v962 = vpop.f32.mrb[0].mxu0
    %v963 = vadd.f32 0.0, %v962
    %v964 = vpop.f32.mrb[0].mxu0
    %v965 = vpop.f32.mrb[0].mxu0
    %v966 = vadd.f32 0.0, %v965
    %v967 = vpop.f32.mrb[0].mxu0
    %968 = vmatprep.mubr.bf16.mxu0 0
    %969 = vmatmul.mubr.bf16.gmra.mrb[0].mxu0 %v878
    %v970 = vpop.f32.mrb[0].mxu0
    %v971 = vadd.f32 0.0, %v970
    %v972 = vpop.f32.mrb[0].mxu0
    %v973 = vpop.f32.mrb[0].mxu0
    %v974 = vadd.f32 0.0, %v973
    %v975 = vpop.f32.mrb[0].mxu0
    %976 = vdwg.mxu0
    %v977 = vadd.f32 %v623, %v915
    %v978 = vadd.f32 %v626, %v918
    %v979 = vadd.f32 %v631, %v923
    %v980 = vadd.f32 %v634, %v926
    %v981 = vadd.f32 %v639, %v931
    %v982 = vadd.f32 %v642, %v934
    %v983 = vadd.f32 %v647, %v939
    %v984 = vadd.f32 %v650, %v942
    %v985 = vadd.f32 %v655, %v947
    %v986 = vadd.f32 %v658, %v950
    %v987 = vadd.f32 %v663, %v955
    %v988 = vadd.f32 %v666, %v958
    %v989 = vadd.f32 %v671, %v963
    %v990 = vadd.f32 %v674, %v966
    %v991 = vadd.f32 %v679, %v971
    %v992 = vadd.f32 %v682, %v974
    %s993 = scalar_lea.vmem [#allocation2], 8
    %v994 = vld [vmem:[%s993] sm:$0xf]
    %v995 = vld [vmem:[%s993 + $0x8] sm:$0xf]
    %v996 = vld [vmem:[%s993 + $0x10] sm:$0xf]
    %v997 = vld [vmem:[%s993 + $0x18] sm:$0xf]
    %v998 = vld [vmem:[%s993 + $0x20] sm:$0xf]
    %v999 = vld [vmem:[%s993 + $0x28] sm:$0xf]
    %v1000 = vld [vmem:[%s993 + $0x30] sm:$0xf]
    %v1001 = vld [vmem:[%s993 + $0x38] sm:$0xf]
    %v1002 = vld [vmem:[%s993 + $0x50] sm:$0xf]
    %v1003 = vld [vmem:[%s993 + $0x58] sm:$0xf]
    %v1004 = vld [vmem:[%s993 + $0x60] sm:$0xf]
    %v1005 = vld [vmem:[%s993 + $0x68] sm:$0xf]
    %v1006 = vld [vmem:[%s993 + $0x70] sm:$0xf]
    %v1007 = vld [vmem:[%s993 + $0x78] sm:$0xf]
    %v1008 = vld [vmem:[%s993 + $0x80] sm:$0xf]
    %v1009 = vld [vmem:[%s993 + $0x88] sm:$0xf]
    %v1010 = vld [vmem:[#allocation5 + $0x60] sm:$0xf]
    %v1011 = vld [vmem:[#allocation5 + $0x64] sm:$0xf]
    %v1012 = vld [vmem:[#allocation5 + $0x68] sm:$0xf]
    %v1013 = vld [vmem:[#allocation5 + $0x6c] sm:$0xf]
    %v1014 = vld [vmem:[#allocation5 + $0x70] sm:$0xf]
    %v1015 = vld [vmem:[#allocation5 + $0x74] sm:$0xf]
    %v1016 = vld [vmem:[#allocation5 + $0x78] sm:$0xf]
    %v1017 = vld [vmem:[#allocation5 + $0x7c] sm:$0xf]
    %v1034 = vunpack.c.l.b16 %v994
    %v1035 = vunpack.c.l.b16 %v995
    %v1036 = vunpack.c.l.b16 %v996
    %v1037 = vunpack.c.l.b16 %v997
    %v1038 = vunpack.c.l.b16 %v998
    %v1039 = vunpack.c.l.b16 %v999
    %v1040 = vunpack.c.l.b16 %v1000
    %v1041 = vunpack.c.l.b16 %v1001
    %v1042 = vunpack.c.l.b16 %v1002
    %v1043 = vunpack.c.l.b16 %v1003
    %v1044 = vunpack.c.l.b16 %v1004
    %v1045 = vunpack.c.l.b16 %v1005
    %v1046 = vunpack.c.l.b16 %v1006
    %v1047 = vunpack.c.l.b16 %v1007
    %v1048 = vunpack.c.l.b16 %v1008
    %v1049 = vunpack.c.l.b16 %v1009
    %v1050 = vpack.c.b16 %v1035, %v1034
    %v1051 = vpack.c.b16 %v1037, %v1036
    %v1052 = vpack.c.b16 %v1039, %v1038
    %v1053 = vpack.c.b16 %v1041, %v1040
    %v1054 = vpack.c.b16 %v1043, %v1042
    %v1055 = vpack.c.b16 %v1045, %v1044
    %v1056 = vpack.c.b16 %v1047, %v1046
    %v1057 = vpack.c.b16 %v1049, %v1048
    %v1066 = vunpack.c.l.b16 %v1010
    %v1067 = vunpack.c.l.b16 %v1011
    %v1068 = vunpack.c.l.b16 %v1012
    %v1069 = vunpack.c.l.b16 %v1013
    %v1070 = vunpack.c.l.b16 %v1014
    %v1071 = vunpack.c.l.b16 %v1015
    %v1072 = vunpack.c.l.b16 %v1016
    %v1073 = vunpack.c.l.b16 %v1017
    %v1074 = vpack.c.b16 %v1067, %v1066
    %v1075 = vpack.c.b16 %v1069, %v1068
    %v1076 = vpack.c.b16 %v1071, %v1070
    %v1077 = vpack.c.b16 %v1073, %v1072
    %v1083 = vsel %vm378, %v1050, 0
    %v1086 = vsel %vm378, %v1051, 0
    %v1089 = vsel %vm378, %v1052, 0
    %v1092 = vsel %vm378, %v1053, 0
    %v1095 = vsel %vm378, %v1054, 0
    %v1098 = vsel %vm378, %v1055, 0
    %v1101 = vsel %vm378, %v1056, 0
    %v1104 = vsel %vm378, %v1057, 0
    %1106 = vmatprep.subr.bf16.mxu0 0
    %1107 = vmatpush1.bf16.msra.mxu0 %v1074
    %1108 = vmatprep.subr.bf16.mxu0 0
    %1109 = vmatpush1.bf16.msra.mxu0 %v1075
    %1110 = vmatprep.subr.bf16.mxu0 0
    %1111 = vmatpush1.bf16.msra.mxu0 %v1076
    %1112 = vmatprep.subr.bf16.mxu0 0
    %1113 = vmatpush1.bf16.msra.mxu0 %v1077
    %1114 = vmatprep.subr.bf16.mxu0 0
    %1115 = vmatpush1.bf16.msra.mxu0 0
    %1116 = vmatprep.subr.bf16.mxu0 0
    %1117 = vmatpush1.bf16.msra.mxu0 0
    %1118 = vmatprep.subr.bf16.mxu0 0
    %1119 = vmatpush1.bf16.msra.mxu0 0
    %1120 = vmatprep.subr.bf16.mxu0 0
    %1121 = vmatpush1.bf16.msra.mxu0 0
    %1122 = vmatprep.subr.bf16.mxu0 0
    %1123 = vmatpush1.bf16.msra.mxu0 0
    %1124 = vmatprep.subr.bf16.mxu0 0
    %1125 = vmatpush1.bf16.msra.mxu0 0
    %1126 = vmatprep.subr.bf16.mxu0 0
    %1127 = vmatpush1.bf16.msra.mxu0 0
    %1128 = vmatprep.subr.bf16.mxu0 0
    %1129 = vmatpush1.bf16.msra.mxu0 0
    %1130 = vmatprep.subr.bf16.mxu0 0
    %1131 = vmatpush1.bf16.msra.mxu0 0
    %1132 = vmatprep.subr.bf16.mxu0 0
    %1133 = vmatpush1.bf16.msra.mxu0 0
    %1134 = vmatprep.subr.bf16.mxu0 0
    %1135 = vmatpush1.bf16.msra.mxu0 0
    %1136 = vmatprep.subr.bf16.mxu0 0
    %1137 = vmatpush1.bf16.msra.mxu0 0
    %1138 = vmatprep.mubr.bf16.mxu0 0
    %1139 = vmatmul.mubr.bf16.gmra.mrb[0].mxu0 %v1083
    %v1140 = vpop.f32.mrb[0].mxu0
    %v1141 = vadd.f32 0.0, %v1140
    %v1142 = vpop.f32.mrb[0].mxu0
    %v1143 = vpop.f32.mrb[0].mxu0
    %v1144 = vadd.f32 0.0, %v1143
    %v1145 = vpop.f32.mrb[0].mxu0
    %1146 = vmatprep.mubr.bf16.mxu0 0
    %1147 = vmatmul.mubr.bf16.gmra.mrb[0].mxu0 %v1086
    %v1148 = vpop.f32.mrb[0].mxu0
    %v1149 = vadd.f32 0.0, %v1148
    %v1150 = vpop.f32.mrb[0].mxu0
    %v1151 = vpop.f32.mrb[0].mxu0
    %v1152 = vadd.f32 0.0, %v1151
    %v1153 = vpop.f32.mrb[0].mxu0
    %1154 = vmatprep.mubr.bf16.mxu0 0
    %1155 = vmatmul.mubr.bf16.gmra.mrb[0].mxu0 %v1089
    %v1156 = vpop.f32.mrb[0].mxu0
    %v1157 = vadd.f32 0.0, %v1156
    %v1158 = vpop.f32.mrb[0].mxu0
    %v1159 = vpop.f32.mrb[0].mxu0
    %v1160 = vadd.f32 0.0, %v1159
    %v1161 = vpop.f32.mrb[0].mxu0
    %1162 = vmatprep.mubr.bf16.mxu0 0
    %1163 = vmatmul.mubr.bf16.gmra.mrb[0].mxu0 %v1092
    %v1164 = vpop.f32.mrb[0].mxu0
    %v1165 = vadd.f32 0.0, %v1164
    %v1166 = vpop.f32.mrb[0].mxu0
    %v1167 = vpop.f32.mrb[0].mxu0
    %v1168 = vadd.f32 0.0, %v1167
    %v1169 = vpop.f32.mrb[0].mxu0
    %1170 = vmatprep.mubr.bf16.mxu0 0
    %1171 = vmatmul.mubr.bf16.gmra.mrb[0].mxu0 %v1095
    %v1172 = vpop.f32.mrb[0].mxu0
    %v1173 = vadd.f32 0.0, %v1172
    %v1174 = vpop.f32.mrb[0].mxu0
    %v1175 = vpop.f32.mrb[0].mxu0
    %v1176 = vadd.f32 0.0, %v1175
    %v1177 = vpop.f32.mrb[0].mxu0
    %1178 = vmatprep.mubr.bf16.mxu0 0
    %1179 = vmatmul.mubr.bf16.gmra.mrb[0].mxu0 %v1098
    %v1180 = vpop.f32.mrb[0].mxu0
    %v1181 = vadd.f32 0.0, %v1180
    %v1182 = vpop.f32.mrb[0].mxu0
    %v1183 = vpop.f32.mrb[0].mxu0
    %v1184 = vadd.f32 0.0, %v1183
    %v1185 = vpop.f32.mrb[0].mxu0
    %1186 = vmatprep.mubr.bf16.mxu0 0
    %1187 = vmatmul.mubr.bf16.gmra.mrb[0].mxu0 %v1101
    %v1188 = vpop.f32.mrb[0].mxu0
    %v1189 = vadd.f32 0.0, %v1188
    %v1190 = vpop.f32.mrb[0].mxu0
    %v1191 = vpop.f32.mrb[0].mxu0
    %v1192 = vadd.f32 0.0, %v1191
    %v1193 = vpop.f32.mrb[0].mxu0
    %1194 = vmatprep.mubr.bf16.mxu0 0
    %1195 = vmatmul.mubr.bf16.gmra.mrb[0].mxu0 %v1104
    %v1196 = vpop.f32.mrb[0].mxu0
    %v1197 = vadd.f32 0.0, %v1196
    %v1198 = vpop.f32.mrb[0].mxu0
    %v1199 = vpop.f32.mrb[0].mxu0
    %v1200 = vadd.f32 0.0, %v1199
    %v1201 = vpop.f32.mrb[0].mxu0
    %1202 = vdwg.mxu0
    %v1203 = vadd.f32 %v977, %v1141
    %v1204 = vadd.f32 %v978, %v1144
    %v1205 = vadd.f32 %v979, %v1149
    %v1206 = vadd.f32 %v980, %v1152
    %v1207 = vadd.f32 %v981, %v1157
    %v1208 = vadd.f32 %v982, %v1160
    %v1209 = vadd.f32 %v983, %v1165
    %v1210 = vadd.f32 %v984, %v1168
    %v1211 = vadd.f32 %v985, %v1173
    %v1212 = vadd.f32 %v986, %v1176
    %v1213 = vadd.f32 %v987, %v1181
    %v1214 = vadd.f32 %v988, %v1184
    %v1215 = vadd.f32 %v989, %v1189
    %v1216 = vadd.f32 %v990, %v1192
    %v1217 = vadd.f32 %v991, %v1197
    %v1218 = vadd.f32 %v992, %v1200
    %v1219 = vld [vmem:[%s993] sm:$0xf]
    %v1220 = vld [vmem:[%s993 + $0x4] sm:$0x1]
    %v1221 = vld [vmem:[%s993 + $0x8] sm:$0xf]
    %v1222 = vld [vmem:[%s993 + $0xc] sm:$0x1]
    %v1223 = vld [vmem:[%s993 + $0x10] sm:$0xf]
    %v1224 = vld [vmem:[%s993 + $0x14] sm:$0x1]
    %v1225 = vld [vmem:[%s993 + $0x18] sm:$0xf]
    %v1226 = vld [vmem:[%s993 + $0x1c] sm:$0x1]
    %v1227 = vld [vmem:[%s993 + $0x20] sm:$0xf]
    %v1228 = vld [vmem:[%s993 + $0x24] sm:$0x1]
    %v1229 = vld [vmem:[%s993 + $0x28] sm:$0xf]
    %v1230 = vld [vmem:[%s993 + $0x2c] sm:$0x1]
    %v1231 = vld [vmem:[%s993 + $0x30] sm:$0xf]
    %v1232 = vld [vmem:[%s993 + $0x34] sm:$0x1]
    %v1233 = vld [vmem:[%s993 + $0x38] sm:$0xf]
    %v1234 = vld [vmem:[%s993 + $0x3c] sm:$0x1]
    %v1235 = vld [vmem:[%s993 + $0x50] sm:$0xf]
    %v1236 = vld [vmem:[%s993 + $0x54] sm:$0x1]
    %v1237 = vld [vmem:[%s993 + $0x58] sm:$0xf]
    %v1238 = vld [vmem:[%s993 + $0x5c] sm:$0x1]
    %v1239 = vld [vmem:[%s993 + $0x60] sm:$0xf]
    %v1240 = vld [vmem:[%s993 + $0x64] sm:$0x1]
    %v1241 = vld [vmem:[%s993 + $0x68] sm:$0xf]
    %v1242 = vld [vmem:[%s993 + $0x6c] sm:$0x1]
    %v1243 = vld [vmem:[%s993 + $0x70] sm:$0xf]
    %v1244 = vld [vmem:[%s993 + $0x74] sm:$0x1]
    %v1245 = vld [vmem:[%s993 + $0x78] sm:$0xf]
    %v1246 = vld [vmem:[%s993 + $0x7c] sm:$0x1]
    %v1247 = vld [vmem:[%s993 + $0x80] sm:$0xf]
    %v1248 = vld [vmem:[%s993 + $0x84] sm:$0x1]
    %v1249 = vld [vmem:[%s993 + $0x88] sm:$0xf]
    %v1250 = vld [vmem:[%s993 + $0x8c] sm:$0x1]
    %v1252 = vshrl.u32 %v1219, 16
    %v1254 = vrot.slane %v1252, 4
    %v1255 = vshll.u32 %v1219, 16
    %v1257 = vrot.slane %v1255, 5
    %v1258 = vor.u32 %v1254, %v1257
    %v1259 = vrot.slane %v1258, 4
    %v1261 = vshll.u32 %v1220, 16
    %v1263 = vrot.slane %v1261, 5
    %v1264 = vsel %vm97, %v1259, %v1263
    %v1266 = vshrl.u32 %v1221, 16
    %v1268 = vrot.slane %v1266, 4
    %v1269 = vshll.u32 %v1221, 16
    %v1271 = vrot.slane %v1269, 5
    %v1272 = vor.u32 %v1268, %v1271
    %v1273 = vrot.slane %v1272, 4
    %v1275 = vshll.u32 %v1222, 16
    %v1277 = vrot.slane %v1275, 5
    %v1278 = vsel %vm97, %v1273, %v1277
    %v1280 = vshrl.u32 %v1223, 16
    %v1282 = vrot.slane %v1280, 4
    %v1283 = vshll.u32 %v1223, 16
    %v1285 = vrot.slane %v1283, 5
    %v1286 = vor.u32 %v1282, %v1285
    %v1287 = vrot.slane %v1286, 4
    %v1289 = vshll.u32 %v1224, 16
    %v1291 = vrot.slane %v1289, 5
    %v1292 = vsel %vm97, %v1287, %v1291
    %v1294 = vshrl.u32 %v1225, 16
    %v1296 = vrot.slane %v1294, 4
    %v1297 = vshll.u32 %v1225, 16
    %v1299 = vrot.slane %v1297, 5
    %v1300 = vor.u32 %v1296, %v1299
    %v1301 = vrot.slane %v1300, 4
    %v1303 = vshll.u32 %v1226, 16
    %v1305 = vrot.slane %v1303, 5
    %v1306 = vsel %vm97, %v1301, %v1305
    %v1308 = vshrl.u32 %v1227, 16
    %v1310 = vrot.slane %v1308, 4
    %v1311 = vshll.u32 %v1227, 16
    %v1313 = vrot.slane %v1311, 5
    %v1314 = vor.u32 %v1310, %v1313
    %v1315 = vrot.slane %v1314, 4
    %v1317 = vshll.u32 %v1228, 16
    %v1319 = vrot.slane %v1317, 5
    %v1320 = vsel %vm97, %v1315, %v1319
    %v1322 = vshrl.u32 %v1229, 16
    %v1324 = vrot.slane %v1322, 4
    %v1325 = vshll.u32 %v1229, 16
    %v1327 = vrot.slane %v1325, 5
    %v1328 = vor.u32 %v1324, %v1327
    %v1329 = vrot.slane %v1328, 4
    %v1331 = vshll.u32 %v1230, 16
    %v1333 = vrot.slane %v1331, 5
    %v1334 = vsel %vm97, %v1329, %v1333
    %v1336 = vshrl.u32 %v1231, 16
    %v1338 = vrot.slane %v1336, 4
    %v1339 = vshll.u32 %v1231, 16
    %v1341 = vrot.slane %v1339, 5
    %v1342 = vor.u32 %v1338, %v1341
    %v1343 = vrot.slane %v1342, 4
    %v1345 = vshll.u32 %v1232, 16
    %v1347 = vrot.slane %v1345, 5
    %v1348 = vsel %vm97, %v1343, %v1347
    %v1350 = vshrl.u32 %v1233, 16
    %v1352 = vrot.slane %v1350, 4
    %v1353 = vshll.u32 %v1233, 16
    %v1355 = vrot.slane %v1353, 5
    %v1356 = vor.u32 %v1352, %v1355
    %v1357 = vrot.slane %v1356, 4
    %v1359 = vshll.u32 %v1234, 16
    %v1361 = vrot.slane %v1359, 5
    %v1362 = vsel %vm97, %v1357, %v1361
    %v1364 = vshrl.u32 %v1235, 16
    %v1366 = vrot.slane %v1364, 4
    %v1367 = vshll.u32 %v1235, 16
    %v1369 = vrot.slane %v1367, 5
    %v1370 = vor.u32 %v1366, %v1369
    %v1371 = vrot.slane %v1370, 4
    %v1373 = vshll.u32 %v1236, 16
    %v1375 = vrot.slane %v1373, 5
    %v1376 = vsel %vm97, %v1371, %v1375
    %v1378 = vshrl.u32 %v1237, 16
    %v1380 = vrot.slane %v1378, 4
    %v1381 = vshll.u32 %v1237, 16
    %v1383 = vrot.slane %v1381, 5
    %v1384 = vor.u32 %v1380, %v1383
    %v1385 = vrot.slane %v1384, 4
    %v1387 = vshll.u32 %v1238, 16
    %v1389 = vrot.slane %v1387, 5
    %v1390 = vsel %vm97, %v1385, %v1389
    %v1392 = vshrl.u32 %v1239, 16
    %v1394 = vrot.slane %v1392, 4
    %v1395 = vshll.u32 %v1239, 16
    %v1397 = vrot.slane %v1395, 5
    %v1398 = vor.u32 %v1394, %v1397
    %v1399 = vrot.slane %v1398, 4
    %v1401 = vshll.u32 %v1240, 16
    %v1403 = vrot.slane %v1401, 5
    %v1404 = vsel %vm97, %v1399, %v1403
    %v1406 = vshrl.u32 %v1241, 16
    %v1408 = vrot.slane %v1406, 4
    %v1409 = vshll.u32 %v1241, 16
    %v1411 = vrot.slane %v1409, 5
    %v1412 = vor.u32 %v1408, %v1411
    %v1413 = vrot.slane %v1412, 4
    %v1415 = vshll.u32 %v1242, 16
    %v1417 = vrot.slane %v1415, 5
    %v1418 = vsel %vm97, %v1413, %v1417
    %v1420 = vshrl.u32 %v1243, 16
    %v1422 = vrot.slane %v1420, 4
    %v1423 = vshll.u32 %v1243, 16
    %v1425 = vrot.slane %v1423, 5
    %v1426 = vor.u32 %v1422, %v1425
    %v1427 = vrot.slane %v1426, 4
    %v1429 = vshll.u32 %v1244, 16
    %v1431 = vrot.slane %v1429, 5
    %v1432 = vsel %vm97, %v1427, %v1431
    %v1434 = vshrl.u32 %v1245, 16
    %v1436 = vrot.slane %v1434, 4
    %v1437 = vshll.u32 %v1245, 16
    %v1439 = vrot.slane %v1437, 5
    %v1440 = vor.u32 %v1436, %v1439
    %v1441 = vrot.slane %v1440, 4
    %v1443 = vshll.u32 %v1246, 16
    %v1445 = vrot.slane %v1443, 5
    %v1446 = vsel %vm97, %v1441, %v1445
    %v1448 = vshrl.u32 %v1247, 16
    %v1450 = vrot.slane %v1448, 4
    %v1451 = vshll.u32 %v1247, 16
    %v1453 = vrot.slane %v1451, 5
    %v1454 = vor.u32 %v1450, %v1453
    %v1455 = vrot.slane %v1454, 4
    %v1457 = vshll.u32 %v1248, 16
    %v1459 = vrot.slane %v1457, 5
    %v1460 = vsel %vm97, %v1455, %v1459
    %v1462 = vshrl.u32 %v1249, 16
    %v1464 = vrot.slane %v1462, 4
    %v1465 = vshll.u32 %v1249, 16
    %v1467 = vrot.slane %v1465, 5
    %v1468 = vor.u32 %v1464, %v1467
    %v1469 = vrot.slane %v1468, 4
    %v1471 = vshll.u32 %v1250, 16
    %v1473 = vrot.slane %v1471, 5
    %v1474 = vsel %vm97, %v1469, %v1473
    %v1475 = vld [vmem:[#allocation5 + $0x80] sm:$0xf]
    %v1476 = vld [vmem:[#allocation5 + $0x84] sm:$0xf]
    %v1477 = vld [vmem:[#allocation5 + $0x88] sm:$0xf]
    %v1478 = vld [vmem:[#allocation5 + $0x8c] sm:$0xf]
    %v1479 = vld [vmem:[#allocation5 + $0x90] sm:$0xf]
    %v1480 = vld [vmem:[#allocation5 + $0x94] sm:$0xf]
    %v1481 = vld [vmem:[#allocation5 + $0x98] sm:$0xf]
    %v1482 = vld [vmem:[#allocation5 + $0x9c] sm:$0xf]
    %v1483 = vunpack.c.l.b16 %v1264
    %v1484 = vunpack.c.l.b16 %v1278
    %v1485 = vunpack.c.l.b16 %v1292
    %v1486 = vunpack.c.l.b16 %v1306
    %v1487 = vunpack.c.l.b16 %v1320
    %v1488 = vunpack.c.l.b16 %v1334
    %v1489 = vunpack.c.l.b16 %v1348
    %v1490 = vunpack.c.l.b16 %v1362
    %v1491 = vunpack.c.l.b16 %v1376
    %v1492 = vunpack.c.l.b16 %v1390
    %v1493 = vunpack.c.l.b16 %v1404
    %v1494 = vunpack.c.l.b16 %v1418
    %v1495 = vunpack.c.l.b16 %v1432
    %v1496 = vunpack.c.l.b16 %v1446
    %v1497 = vunpack.c.l.b16 %v1460
    %v1498 = vunpack.c.l.b16 %v1474
    %v1499 = vpack.c.b16 %v1484, %v1483
    %v1500 = vpack.c.b16 %v1486, %v1485
    %v1501 = vpack.c.b16 %v1488, %v1487
    %v1502 = vpack.c.b16 %v1490, %v1489
    %v1503 = vpack.c.b16 %v1492, %v1491
    %v1504 = vpack.c.b16 %v1494, %v1493
    %v1505 = vpack.c.b16 %v1496, %v1495
    %v1506 = vpack.c.b16 %v1498, %v1497
    %v1515 = vunpack.c.l.b16 %v1475
    %v1516 = vunpack.c.l.b16 %v1476
    %v1517 = vunpack.c.l.b16 %v1477
    %v1518 = vunpack.c.l.b16 %v1478
    %v1519 = vunpack.c.l.b16 %v1479
    %v1520 = vunpack.c.l.b16 %v1480
    %v1521 = vunpack.c.l.b16 %v1481
    %v1522 = vunpack.c.l.b16 %v1482
    %v1523 = vpack.c.b16 %v1516, %v1515
    %v1524 = vpack.c.b16 %v1518, %v1517
    %v1525 = vpack.c.b16 %v1520, %v1519
    %v1526 = vpack.c.b16 %v1522, %v1521
    %v1532 = vsel %vm378, %v1499, 0
    %v1535 = vsel %vm378, %v1500, 0
    %v1538 = vsel %vm378, %v1501, 0
    %v1541 = vsel %vm378, %v1502, 0
    %v1544 = vsel %vm378, %v1503, 0
    %v1547 = vsel %vm378, %v1504, 0
    %v1550 = vsel %vm378, %v1505, 0
    %v1553 = vsel %vm378, %v1506, 0
    %1555 = vmatprep.subr.bf16.mxu0 0
    %1556 = vmatpush1.bf16.msra.mxu0 %v1523
    %1557 = vmatprep.subr.bf16.mxu0 0
    %1558 = vmatpush1.bf16.msra.mxu0 %v1524
    %1559 = vmatprep.subr.bf16.mxu0 0
    %1560 = vmatpush1.bf16.msra.mxu0 %v1525
    %1561 = vmatprep.subr.bf16.mxu0 0
    %1562 = vmatpush1.bf16.msra.mxu0 %v1526
    %1563 = vmatprep.subr.bf16.mxu0 0
    %1564 = vmatpush1.bf16.msra.mxu0 0
    %1565 = vmatprep.subr.bf16.mxu0 0
    %1566 = vmatpush1.bf16.msra.mxu0 0
    %1567 = vmatprep.subr.bf16.mxu0 0
    %1568 = vmatpush1.bf16.msra.mxu0 0
    %1569 = vmatprep.subr.bf16.mxu0 0
    %1570 = vmatpush1.bf16.msra.mxu0 0
    %1571 = vmatprep.subr.bf16.mxu0 0
    %1572 = vmatpush1.bf16.msra.mxu0 0
    %1573 = vmatprep.subr.bf16.mxu0 0
    %1574 = vmatpush1.bf16.msra.mxu0 0
    %1575 = vmatprep.subr.bf16.mxu0 0
    %1576 = vmatpush1.bf16.msra.mxu0 0
    %1577 = vmatprep.subr.bf16.mxu0 0
    %1578 = vmatpush1.bf16.msra.mxu0 0
    %1579 = vmatprep.subr.bf16.mxu0 0
    %1580 = vmatpush1.bf16.msra.mxu0 0
    %1581 = vmatprep.subr.bf16.mxu0 0
    %1582 = vmatpush1.bf16.msra.mxu0 0
    %1583 = vmatprep.subr.bf16.mxu0 0
    %1584 = vmatpush1.bf16.msra.mxu0 0
    %1585 = vmatprep.subr.bf16.mxu0 0
    %1586 = vmatpush1.bf16.msra.mxu0 0
    %1587 = vmatprep.mubr.bf16.mxu0 0
    %1588 = vmatmul.mubr.bf16.gmra.mrb[0].mxu0 %v1532
    %v1589 = vpop.f32.mrb[0].mxu0
    %v1590 = vadd.f32 0.0, %v1589
    %v1591 = vpop.f32.mrb[0].mxu0
    %v1592 = vpop.f32.mrb[0].mxu0
    %v1593 = vadd.f32 0.0, %v1592
    %v1594 = vpop.f32.mrb[0].mxu0
    %1595 = vmatprep.mubr.bf16.mxu0 0
    %1596 = vmatmul.mubr.bf16.gmra.mrb[0].mxu0 %v1535
    %v1597 = vpop.f32.mrb[0].mxu0
    %v1598 = vadd.f32 0.0, %v1597
    %v1599 = vpop.f32.mrb[0].mxu0
    %v1600 = vpop.f32.mrb[0].mxu0
    %v1601 = vadd.f32 0.0, %v1600
    %v1602 = vpop.f32.mrb[0].mxu0
    %1603 = vmatprep.mubr.bf16.mxu0 0
    %1604 = vmatmul.mubr.bf16.gmra.mrb[0].mxu0 %v1538
    %v1605 = vpop.f32.mrb[0].mxu0
    %v1606 = vadd.f32 0.0, %v1605
    %v1607 = vpop.f32.mrb[0].mxu0
    %v1608 = vpop.f32.mrb[0].mxu0
    %v1609 = vadd.f32 0.0, %v1608
    %v1610 = vpop.f32.mrb[0].mxu0
    %1611 = vmatprep.mubr.bf16.mxu0 0
    %1612 = vmatmul.mubr.bf16.gmra.mrb[0].mxu0 %v1541
    %v1613 = vpop.f32.mrb[0].mxu0
    %v1614 = vadd.f32 0.0, %v1613
    %v1615 = vpop.f32.mrb[0].mxu0
    %v1616 = vpop.f32.mrb[0].mxu0
    %v1617 = vadd.f32 0.0, %v1616
    %v1618 = vpop.f32.mrb[0].mxu0
    %1619 = vmatprep.mubr.bf16.mxu0 0
    %1620 = vmatmul.mubr.bf16.gmra.mrb[0].mxu0 %v1544
    %v1621 = vpop.f32.mrb[0].mxu0
    %v1622 = vadd.f32 0.0, %v1621
    %v1623 = vpop.f32.mrb[0].mxu0
    %v1624 = vpop.f32.mrb[0].mxu0
    %v1625 = vadd.f32 0.0, %v1624
    %v1626 = vpop.f32.mrb[0].mxu0
    %1627 = vmatprep.mubr.bf16.mxu0 0
    %1628 = vmatmul.mubr.bf16.gmra.mrb[0].mxu0 %v1547
    %v1629 = vpop.f32.mrb[0].mxu0
    %v1630 = vadd.f32 0.0, %v1629
    %v1631 = vpop.f32.mrb[0].mxu0
    %v1632 = vpop.f32.mrb[0].mxu0
    %v1633 = vadd.f32 0.0, %v1632
    %v1634 = vpop.f32.mrb[0].mxu0
    %1635 = vmatprep.mubr.bf16.mxu0 0
    %1636 = vmatmul.mubr.bf16.gmra.mrb[0].mxu0 %v1550
    %v1637 = vpop.f32.mrb[0].mxu0
    %v1638 = vadd.f32 0.0, %v1637
    %v1639 = vpop.f32.mrb[0].mxu0
    %v1640 = vpop.f32.mrb[0].mxu0
    %v1641 = vadd.f32 0.0, %v1640
    %v1642 = vpop.f32.mrb[0].mxu0
    %1643 = vmatprep.mubr.bf16.mxu0 0
    %1644 = vmatmul.mubr.bf16.gmra.mrb[0].mxu0 %v1553
    %v1645 = vpop.f32.mrb[0].mxu0
    %v1646 = vadd.f32 0.0, %v1645
    %v1647 = vpop.f32.mrb[0].mxu0
    %v1648 = vpop.f32.mrb[0].mxu0
    %v1649 = vadd.f32 0.0, %v1648
    %v1650 = vpop.f32.mrb[0].mxu0
    %1651 = vdwg.mxu0
    %v1652 = vadd.f32 %v1203, %v1590
    %v1653 = vadd.f32 %v1204, %v1593
    %v1654 = vadd.f32 %v1205, %v1598
    %v1655 = vadd.f32 %v1206, %v1601
    %v1656 = vadd.f32 %v1207, %v1606
    %v1657 = vadd.f32 %v1208, %v1609
    %v1658 = vadd.f32 %v1209, %v1614
    %v1659 = vadd.f32 %v1210, %v1617
    %v1660 = vadd.f32 %v1211, %v1622
    %v1661 = vadd.f32 %v1212, %v1625
    %v1662 = vadd.f32 %v1213, %v1630
    %v1663 = vadd.f32 %v1214, %v1633
    %v1664 = vadd.f32 %v1215, %v1638
    %v1665 = vadd.f32 %v1216, %v1641
    %v1666 = vadd.f32 %v1217, %v1646
    %v1667 = vadd.f32 %v1218, %v1649
    %v1668 = vld [vmem:[%s993] sm:$0xe]
    %v1669 = vld [vmem:[%s993 + $0x8] sm:$0xe]
    %v1670 = vld [vmem:[%s993 + $0x10] sm:$0xe]
    %v1671 = vld [vmem:[%s993 + $0x18] sm:$0xe]
    %v1672 = vld [vmem:[%s993 + $0x20] sm:$0xe]
    %v1673 = vld [vmem:[%s993 + $0x28] sm:$0xe]
    %v1674 = vld [vmem:[%s993 + $0x30] sm:$0xe]
    %v1675 = vld [vmem:[%s993 + $0x38] sm:$0xe]
    %v1676 = vld [vmem:[%s993 + $0x50] sm:$0xe]
    %v1677 = vld [vmem:[%s993 + $0x58] sm:$0xe]
    %v1678 = vld [vmem:[%s993 + $0x60] sm:$0xe]
    %v1679 = vld [vmem:[%s993 + $0x68] sm:$0xe]
    %v1680 = vld [vmem:[%s993 + $0x70] sm:$0xe]
    %v1681 = vld [vmem:[%s993 + $0x78] sm:$0xe]
    %v1682 = vld [vmem:[%s993 + $0x80] sm:$0xe]
    %v1683 = vld [vmem:[%s993 + $0x88] sm:$0xe]
    %v1716 = vrot.slane %v1668, 5
    %v1717 = vrot.slane %v1716, 4
    %v1718 = vrot.slane %v1220, 5
    %v1719 = vsel %vm735, %v1717, %v1718
    %v1720 = vrot.slane %v1669, 5
    %v1721 = vrot.slane %v1720, 4
    %v1722 = vrot.slane %v1222, 5
    %v1723 = vsel %vm735, %v1721, %v1722
    %v1724 = vrot.slane %v1670, 5
    %v1725 = vrot.slane %v1724, 4
    %v1726 = vrot.slane %v1224, 5
    %v1727 = vsel %vm735, %v1725, %v1726
    %v1728 = vrot.slane %v1671, 5
    %v1729 = vrot.slane %v1728, 4
    %v1730 = vrot.slane %v1226, 5
    %v1731 = vsel %vm735, %v1729, %v1730
    %v1732 = vrot.slane %v1672, 5
    %v1733 = vrot.slane %v1732, 4
    %v1734 = vrot.slane %v1228, 5
    %v1735 = vsel %vm735, %v1733, %v1734
    %v1736 = vrot.slane %v1673, 5
    %v1737 = vrot.slane %v1736, 4
    %v1738 = vrot.slane %v1230, 5
    %v1739 = vsel %vm735, %v1737, %v1738
    %v1740 = vrot.slane %v1674, 5
    %v1741 = vrot.slane %v1740, 4
    %v1742 = vrot.slane %v1232, 5
    %v1743 = vsel %vm735, %v1741, %v1742
    %v1744 = vrot.slane %v1675, 5
    %v1745 = vrot.slane %v1744, 4
    %v1746 = vrot.slane %v1234, 5
    %v1747 = vsel %vm735, %v1745, %v1746
    %v1748 = vrot.slane %v1676, 5
    %v1749 = vrot.slane %v1748, 4
    %v1750 = vrot.slane %v1236, 5
    %v1751 = vsel %vm735, %v1749, %v1750
    %v1752 = vrot.slane %v1677, 5
    %v1753 = vrot.slane %v1752, 4
    %v1754 = vrot.slane %v1238, 5
    %v1755 = vsel %vm735, %v1753, %v1754
    %v1756 = vrot.slane %v1678, 5
    %v1757 = vrot.slane %v1756, 4
    %v1758 = vrot.slane %v1240, 5
    %v1759 = vsel %vm735, %v1757, %v1758
    %v1760 = vrot.slane %v1679, 5
    %v1761 = vrot.slane %v1760, 4
    %v1762 = vrot.slane %v1242, 5
    %v1763 = vsel %vm735, %v1761, %v1762
    %v1764 = vrot.slane %v1680, 5
    %v1765 = vrot.slane %v1764, 4
    %v1766 = vrot.slane %v1244, 5
    %v1767 = vsel %vm735, %v1765, %v1766
    %v1768 = vrot.slane %v1681, 5
    %v1769 = vrot.slane %v1768, 4
    %v1770 = vrot.slane %v1246, 5
    %v1771 = vsel %vm735, %v1769, %v1770
    %v1772 = vrot.slane %v1682, 5
    %v1773 = vrot.slane %v1772, 4
    %v1774 = vrot.slane %v1248, 5
    %v1775 = vsel %vm735, %v1773, %v1774
    %v1776 = vrot.slane %v1683, 5
    %v1777 = vrot.slane %v1776, 4
    %v1778 = vrot.slane %v1250, 5
    %v1779 = vsel %vm735, %v1777, %v1778
    %v1780 = vld [vmem:[#allocation5 + $0xa0] sm:$0xf]
    %v1781 = vld [vmem:[#allocation5 + $0xa4] sm:$0xf]
    %v1782 = vld [vmem:[#allocation5 + $0xa8] sm:$0xf]
    %v1783 = vld [vmem:[#allocation5 + $0xac] sm:$0xf]
    %v1784 = vld [vmem:[#allocation5 + $0xb0] sm:$0xf]
    %v1785 = vld [vmem:[#allocation5 + $0xb4] sm:$0xf]
    %v1786 = vld [vmem:[#allocation5 + $0xb8] sm:$0xf]
    %v1787 = vld [vmem:[#allocation5 + $0xbc] sm:$0xf]
    %v1788 = vunpack.c.l.b16 %v1719
    %v1789 = vunpack.c.l.b16 %v1723
    %v1790 = vunpack.c.l.b16 %v1727
    %v1791 = vunpack.c.l.b16 %v1731
    %v1792 = vunpack.c.l.b16 %v1735
    %v1793 = vunpack.c.l.b16 %v1739
    %v1794 = vunpack.c.l.b16 %v1743
    %v1795 = vunpack.c.l.b16 %v1747
    %v1796 = vunpack.c.l.b16 %v1751
    %v1797 = vunpack.c.l.b16 %v1755
    %v1798 = vunpack.c.l.b16 %v1759
    %v1799 = vunpack.c.l.b16 %v1763
    %v1800 = vunpack.c.l.b16 %v1767
    %v1801 = vunpack.c.l.b16 %v1771
    %v1802 = vunpack.c.l.b16 %v1775
    %v1803 = vunpack.c.l.b16 %v1779
    %v1804 = vpack.c.b16 %v1789, %v1788
    %v1805 = vpack.c.b16 %v1791, %v1790
    %v1806 = vpack.c.b16 %v1793, %v1792
    %v1807 = vpack.c.b16 %v1795, %v1794
    %v1808 = vpack.c.b16 %v1797, %v1796
    %v1809 = vpack.c.b16 %v1799, %v1798
    %v1810 = vpack.c.b16 %v1801, %v1800
    %v1811 = vpack.c.b16 %v1803, %v1802
    %v1820 = vunpack.c.l.b16 %v1780
    %v1821 = vunpack.c.l.b16 %v1781
    %v1822 = vunpack.c.l.b16 %v1782
    %v1823 = vunpack.c.l.b16 %v1783
    %v1824 = vunpack.c.l.b16 %v1784
    %v1825 = vunpack.c.l.b16 %v1785
    %v1826 = vunpack.c.l.b16 %v1786
    %v1827 = vunpack.c.l.b16 %v1787
    %v1828 = vpack.c.b16 %v1821, %v1820
    %v1829 = vpack.c.b16 %v1823, %v1822
    %v1830 = vpack.c.b16 %v1825, %v1824
    %v1831 = vpack.c.b16 %v1827, %v1826
    %v1837 = vsel %vm378, %v1804, 0
    %v1840 = vsel %vm378, %v1805, 0
    %v1843 = vsel %vm378, %v1806, 0
    %v1846 = vsel %vm378, %v1807, 0
    %v1849 = vsel %vm378, %v1808, 0
    %v1852 = vsel %vm378, %v1809, 0
    %v1855 = vsel %vm378, %v1810, 0
    %v1858 = vsel %vm378, %v1811, 0
    %1860 = vmatprep.subr.bf16.mxu0 0
    %1861 = vmatpush1.bf16.msra.mxu0 %v1828
    %1862 = vmatprep.subr.bf16.mxu0 0
    %1863 = vmatpush1.bf16.msra.mxu0 %v1829
    %1864 = vmatprep.subr.bf16.mxu0 0
    %1865 = vmatpush1.bf16.msra.mxu0 %v1830
    %1866 = vmatprep.subr.bf16.mxu0 0
    %1867 = vmatpush1.bf16.msra.mxu0 %v1831
    %1868 = vmatprep.subr.bf16.mxu0 0
    %1869 = vmatpush1.bf16.msra.mxu0 0
    %1870 = vmatprep.subr.bf16.mxu0 0
    %1871 = vmatpush1.bf16.msra.mxu0 0
    %1872 = vmatprep.subr.bf16.mxu0 0
    %1873 = vmatpush1.bf16.msra.mxu0 0
    %1874 = vmatprep.subr.bf16.mxu0 0
    %1875 = vmatpush1.bf16.msra.mxu0 0
    %1876 = vmatprep.subr.bf16.mxu0 0
    %1877 = vmatpush1.bf16.msra.mxu0 0
    %1878 = vmatprep.subr.bf16.mxu0 0
    %1879 = vmatpush1.bf16.msra.mxu0 0
    %1880 = vmatprep.subr.bf16.mxu0 0
    %1881 = vmatpush1.bf16.msra.mxu0 0
    %1882 = vmatprep.subr.bf16.mxu0 0
    %1883 = vmatpush1.bf16.msra.mxu0 0
    %1884 = vmatprep.subr.bf16.mxu0 0
    %1885 = vmatpush1.bf16.msra.mxu0 0
    %1886 = vmatprep.subr.bf16.mxu0 0
    %1887 = vmatpush1.bf16.msra.mxu0 0
    %1888 = vmatprep.subr.bf16.mxu0 0
    %1889 = vmatpush1.bf16.msra.mxu0 0
    %1890 = vmatprep.subr.bf16.mxu0 0
    %1891 = vmatpush1.bf16.msra.mxu0 0
    %1892 = vmatprep.mubr.bf16.mxu0 0
    %1893 = vmatmul.mubr.bf16.gmra.mrb[0].mxu0 %v1837
    %v1894 = vpop.f32.mrb[0].mxu0
    %v1895 = vadd.f32 0.0, %v1894
    %v1896 = vpop.f32.mrb[0].mxu0
    %v1897 = vpop.f32.mrb[0].mxu0
    %v1898 = vadd.f32 0.0, %v1897
    %v1899 = vpop.f32.mrb[0].mxu0
    %1900 = vmatprep.mubr.bf16.mxu0 0
    %1901 = vmatmul.mubr.bf16.gmra.mrb[0].mxu0 %v1840
    %v1902 = vpop.f32.mrb[0].mxu0
    %v1903 = vadd.f32 0.0, %v1902
    %v1904 = vpop.f32.mrb[0].mxu0
    %v1905 = vpop.f32.mrb[0].mxu0
    %v1906 = vadd.f32 0.0, %v1905
    %v1907 = vpop.f32.mrb[0].mxu0
    %1908 = vmatprep.mubr.bf16.mxu0 0
    %1909 = vmatmul.mubr.bf16.gmra.mrb[0].mxu0 %v1843
    %v1910 = vpop.f32.mrb[0].mxu0
    %v1911 = vadd.f32 0.0, %v1910
    %v1912 = vpop.f32.mrb[0].mxu0
    %v1913 = vpop.f32.mrb[0].mxu0
    %v1914 = vadd.f32 0.0, %v1913
    %v1915 = vpop.f32.mrb[0].mxu0
    %1916 = vmatprep.mubr.bf16.mxu0 0
    %1917 = vmatmul.mubr.bf16.gmra.mrb[0].mxu0 %v1846
    %v1918 = vpop.f32.mrb[0].mxu0
    %v1919 = vadd.f32 0.0, %v1918
    %v1920 = vpop.f32.mrb[0].mxu0
    %v1921 = vpop.f32.mrb[0].mxu0
    %v1922 = vadd.f32 0.0, %v1921
    %v1923 = vpop.f32.mrb[0].mxu0
    %1924 = vmatprep.mubr.bf16.mxu0 0
    %1925 = vmatmul.mubr.bf16.gmra.mrb[0].mxu0 %v1849
    %v1926 = vpop.f32.mrb[0].mxu0
    %v1927 = vadd.f32 0.0, %v1926
    %v1928 = vpop.f32.mrb[0].mxu0
    %v1929 = vpop.f32.mrb[0].mxu0
    %v1930 = vadd.f32 0.0, %v1929
    %v1931 = vpop.f32.mrb[0].mxu0
    %1932 = vmatprep.mubr.bf16.mxu0 0
    %1933 = vmatmul.mubr.bf16.gmra.mrb[0].mxu0 %v1852
    %v1934 = vpop.f32.mrb[0].mxu0
    %v1935 = vadd.f32 0.0, %v1934
    %v1936 = vpop.f32.mrb[0].mxu0
    %v1937 = vpop.f32.mrb[0].mxu0
    %v1938 = vadd.f32 0.0, %v1937
    %v1939 = vpop.f32.mrb[0].mxu0
    %1940 = vmatprep.mubr.bf16.mxu0 0
    %1941 = vmatmul.mubr.bf16.gmra.mrb[0].mxu0 %v1855
    %v1942 = vpop.f32.mrb[0].mxu0
    %v1943 = vadd.f32 0.0, %v1942
    %v1944 = vpop.f32.mrb[0].mxu0
    %v1945 = vpop.f32.mrb[0].mxu0
    %v1946 = vadd.f32 0.0, %v1945
    %v1947 = vpop.f32.mrb[0].mxu0
    %1948 = vmatprep.mubr.bf16.mxu0 0
    %1949 = vmatmul.mubr.bf16.gmra.mrb[0].mxu0 %v1858
    %v1950 = vpop.f32.mrb[0].mxu0
    %v1951 = vadd.f32 0.0, %v1950
    %v1952 = vpop.f32.mrb[0].mxu0
    %v1953 = vpop.f32.mrb[0].mxu0
    %v1954 = vadd.f32 0.0, %v1953
    %v1955 = vpop.f32.mrb[0].mxu0
    %1956 = vdwg.mxu0
    %v1957 = vadd.f32 %v1652, %v1895
    %v1958 = vadd.f32 %v1653, %v1898
    %v1959 = vadd.f32 %v1654, %v1903
    %v1960 = vadd.f32 %v1655, %v1906
    %v1961 = vadd.f32 %v1656, %v1911
    %v1962 = vadd.f32 %v1657, %v1914
    %v1963 = vadd.f32 %v1658, %v1919
    %v1964 = vadd.f32 %v1659, %v1922
    %v1965 = vadd.f32 %v1660, %v1927
    %v1966 = vadd.f32 %v1661, %v1930
    %v1967 = vadd.f32 %v1662, %v1935
    %v1968 = vadd.f32 %v1663, %v1938
    %v1969 = vadd.f32 %v1664, %v1943
    %v1970 = vadd.f32 %v1665, %v1946
    %v1971 = vadd.f32 %v1666, %v1951
    %v1972 = vadd.f32 %v1667, %v1954
    %s1973 = scalar_lea.vmem [#allocation2], 16
    %v1974 = vld [vmem:[%s1973] sm:$0xf]
    %v1975 = vld [vmem:[%s1973 + $0x8] sm:$0xf]
    %v1976 = vld [vmem:[%s1973 + $0x10] sm:$0xf]
    %v1977 = vld [vmem:[%s1973 + $0x18] sm:$0xf]
    %v1978 = vld [vmem:[%s1973 + $0x20] sm:$0xf]
    %v1979 = vld [vmem:[%s1973 + $0x28] sm:$0xf]
    %v1980 = vld [vmem:[%s1973 + $0x30] sm:$0xf]
    %v1981 = vld [vmem:[%s1973 + $0x38] sm:$0xf]
    %v1982 = vld [vmem:[%s1973 + $0x50] sm:$0xf]
    %v1983 = vld [vmem:[%s1973 + $0x58] sm:$0xf]
    %v1984 = vld [vmem:[%s1973 + $0x60] sm:$0xf]
    %v1985 = vld [vmem:[%s1973 + $0x68] sm:$0xf]
    %v1986 = vld [vmem:[%s1973 + $0x70] sm:$0xf]
    %v1987 = vld [vmem:[%s1973 + $0x78] sm:$0xf]
    %v1988 = vld [vmem:[%s1973 + $0x80] sm:$0xf]
    %v1989 = vld [vmem:[%s1973 + $0x88] sm:$0xf]
    %v1990 = vld [vmem:[#allocation5 + $0xc0] sm:$0xf]
    %v1991 = vld [vmem:[#allocation5 + $0xc4] sm:$0xf]
    %v1992 = vld [vmem:[#allocation5 + $0xc8] sm:$0xf]
    %v1993 = vld [vmem:[#allocation5 + $0xcc] sm:$0xf]
    %v1994 = vld [vmem:[#allocation5 + $0xd0] sm:$0xf]
    %v1995 = vld [vmem:[#allocation5 + $0xd4] sm:$0xf]
    %v1996 = vld [vmem:[#allocation5 + $0xd8] sm:$0xf]
    %v1997 = vld [vmem:[#allocation5 + $0xdc] sm:$0xf]
    %v2014 = vunpack.c.l.b16 %v1974
    %v2015 = vunpack.c.l.b16 %v1975
    %v2016 = vunpack.c.l.b16 %v1976
    %v2017 = vunpack.c.l.b16 %v1977
    %v2018 = vunpack.c.l.b16 %v1978
    %v2019 = vunpack.c.l.b16 %v1979
    %v2020 = vunpack.c.l.b16 %v1980
    %v2021 = vunpack.c.l.b16 %v1981
    %v2022 = vunpack.c.l.b16 %v1982
    %v2023 = vunpack.c.l.b16 %v1983
    %v2024 = vunpack.c.l.b16 %v1984
    %v2025 = vunpack.c.l.b16 %v1985
    %v2026 = vunpack.c.l.b16 %v1986
    %v2027 = vunpack.c.l.b16 %v1987
    %v2028 = vunpack.c.l.b16 %v1988
    %v2029 = vunpack.c.l.b16 %v1989
    %v2030 = vpack.c.b16 %v2015, %v2014
    %v2031 = vpack.c.b16 %v2017, %v2016
    %v2032 = vpack.c.b16 %v2019, %v2018
    %v2033 = vpack.c.b16 %v2021, %v2020
    %v2034 = vpack.c.b16 %v2023, %v2022
    %v2035 = vpack.c.b16 %v2025, %v2024
    %v2036 = vpack.c.b16 %v2027, %v2026
    %v2037 = vpack.c.b16 %v2029, %v2028
    %v2046 = vunpack.c.l.b16 %v1990
    %v2047 = vunpack.c.l.b16 %v1991
    %v2048 = vunpack.c.l.b16 %v1992
    %v2049 = vunpack.c.l.b16 %v1993
    %v2050 = vunpack.c.l.b16 %v1994
    %v2051 = vunpack.c.l.b16 %v1995
    %v2052 = vunpack.c.l.b16 %v1996
    %v2053 = vunpack.c.l.b16 %v1997
    %v2054 = vpack.c.b16 %v2047, %v2046
    %v2055 = vpack.c.b16 %v2049, %v2048
    %v2056 = vpack.c.b16 %v2051, %v2050
    %v2057 = vpack.c.b16 %v2053, %v2052
    %v2063 = vsel %vm378, %v2030, 0
    %v2066 = vsel %vm378, %v2031, 0
    %v2069 = vsel %vm378, %v2032, 0
    %v2072 = vsel %vm378, %v2033, 0
    %v2075 = vsel %vm378, %v2034, 0
    %v2078 = vsel %vm378, %v2035, 0
    %v2081 = vsel %vm378, %v2036, 0
    %v2084 = vsel %vm378, %v2037, 0
    %2086 = vmatprep.subr.bf16.mxu0 0
    %2087 = vmatpush1.bf16.msra.mxu0 %v2054
    %2088 = vmatprep.subr.bf16.mxu0 0
    %2089 = vmatpush1.bf16.msra.mxu0 %v2055
    %2090 = vmatprep.subr.bf16.mxu0 0
    %2091 = vmatpush1.bf16.msra.mxu0 %v2056
    %2092 = vmatprep.subr.bf16.mxu0 0
    %2093 = vmatpush1.bf16.msra.mxu0 %v2057
    %2094 = vmatprep.subr.bf16.mxu0 0
    %2095 = vmatpush1.bf16.msra.mxu0 0
    %2096 = vmatprep.subr.bf16.mxu0 0
    %2097 = vmatpush1.bf16.msra.mxu0 0
    %2098 = vmatprep.subr.bf16.mxu0 0
    %2099 = vmatpush1.bf16.msra.mxu0 0
    %2100 = vmatprep.subr.bf16.mxu0 0
    %2101 = vmatpush1.bf16.msra.mxu0 0
    %2102 = vmatprep.subr.bf16.mxu0 0
    %2103 = vmatpush1.bf16.msra.mxu0 0
    %2104 = vmatprep.subr.bf16.mxu0 0
    %2105 = vmatpush1.bf16.msra.mxu0 0
    %2106 = vmatprep.subr.bf16.mxu0 0
    %2107 = vmatpush1.bf16.msra.mxu0 0
    %2108 = vmatprep.subr.bf16.mxu0 0
    %2109 = vmatpush1.bf16.msra.mxu0 0
    %2110 = vmatprep.subr.bf16.mxu0 0
    %2111 = vmatpush1.bf16.msra.mxu0 0
    %2112 = vmatprep.subr.bf16.mxu0 0
    %2113 = vmatpush1.bf16.msra.mxu0 0
    %2114 = vmatprep.subr.bf16.mxu0 0
    %2115 = vmatpush1.bf16.msra.mxu0 0
    %2116 = vmatprep.subr.bf16.mxu0 0
    %2117 = vmatpush1.bf16.msra.mxu0 0
    %2118 = vmatprep.mubr.bf16.mxu0 0
    %2119 = vmatmul.mubr.bf16.gmra.mrb[0].mxu0 %v2063
    %v2120 = vpop.f32.mrb[0].mxu0
    %v2121 = vadd.f32 0.0, %v2120
    %v2122 = vpop.f32.mrb[0].mxu0
    %v2123 = vpop.f32.mrb[0].mxu0
    %v2124 = vadd.f32 0.0, %v2123
    %v2125 = vpop.f32.mrb[0].mxu0
    %2126 = vmatprep.mubr.bf16.mxu0 0
    %2127 = vmatmul.mubr.bf16.gmra.mrb[0].mxu0 %v2066
    %v2128 = vpop.f32.mrb[0].mxu0
    %v2129 = vadd.f32 0.0, %v2128
    %v2130 = vpop.f32.mrb[0].mxu0
    %v2131 = vpop.f32.mrb[0].mxu0
    %v2132 = vadd.f32 0.0, %v2131
    %v2133 = vpop.f32.mrb[0].mxu0
    %2134 = vmatprep.mubr.bf16.mxu0 0
    %2135 = vmatmul.mubr.bf16.gmra.mrb[0].mxu0 %v2069
    %v2136 = vpop.f32.mrb[0].mxu0
    %v2137 = vadd.f32 0.0, %v2136
    %v2138 = vpop.f32.mrb[0].mxu0
    %v2139 = vpop.f32.mrb[0].mxu0
    %v2140 = vadd.f32 0.0, %v2139
    %v2141 = vpop.f32.mrb[0].mxu0
    %2142 = vmatprep.mubr.bf16.mxu0 0
    %2143 = vmatmul.mubr.bf16.gmra.mrb[0].mxu0 %v2072
    %v2144 = vpop.f32.mrb[0].mxu0
    %v2145 = vadd.f32 0.0, %v2144
    %v2146 = vpop.f32.mrb[0].mxu0
    %v2147 = vpop.f32.mrb[0].mxu0
    %v2148 = vadd.f32 0.0, %v2147
    %v2149 = vpop.f32.mrb[0].mxu0
    %2150 = vmatprep.mubr.bf16.mxu0 0
    %2151 = vmatmul.mubr.bf16.gmra.mrb[0].mxu0 %v2075
    %v2152 = vpop.f32.mrb[0].mxu0
    %v2153 = vadd.f32 0.0, %v2152
    %v2154 = vpop.f32.mrb[0].mxu0
    %v2155 = vpop.f32.mrb[0].mxu0
    %v2156 = vadd.f32 0.0, %v2155
    %v2157 = vpop.f32.mrb[0].mxu0
    %2158 = vmatprep.mubr.bf16.mxu0 0
    %2159 = vmatmul.mubr.bf16.gmra.mrb[0].mxu0 %v2078
    %v2160 = vpop.f32.mrb[0].mxu0
    %v2161 = vadd.f32 0.0, %v2160
    %v2162 = vpop.f32.mrb[0].mxu0
    %v2163 = vpop.f32.mrb[0].mxu0
    %v2164 = vadd.f32 0.0, %v2163
    %v2165 = vpop.f32.mrb[0].mxu0
    %2166 = vmatprep.mubr.bf16.mxu0 0
    %2167 = vmatmul.mubr.bf16.gmra.mrb[0].mxu0 %v2081
    %v2168 = vpop.f32.mrb[0].mxu0
    %v2169 = vadd.f32 0.0, %v2168
    %v2170 = vpop.f32.mrb[0].mxu0
    %v2171 = vpop.f32.mrb[0].mxu0
    %v2172 = vadd.f32 0.0, %v2171
    %v2173 = vpop.f32.mrb[0].mxu0
    %2174 = vmatprep.mubr.bf16.mxu0 0
    %2175 = vmatmul.mubr.bf16.gmra.mrb[0].mxu0 %v2084
    %v2176 = vpop.f32.mrb[0].mxu0
    %v2177 = vadd.f32 0.0, %v2176
    %v2178 = vpop.f32.mrb[0].mxu0
    %v2179 = vpop.f32.mrb[0].mxu0
    %v2180 = vadd.f32 0.0, %v2179
    %v2181 = vpop.f32.mrb[0].mxu0
    %2182 = vdwg.mxu0
    %v2183 = vadd.f32 %v1957, %v2121
    %v2184 = vadd.f32 %v1958, %v2124
    %v2185 = vadd.f32 %v1959, %v2129
    %v2186 = vadd.f32 %v1960, %v2132
    %v2187 = vadd.f32 %v1961, %v2137
    %v2188 = vadd.f32 %v1962, %v2140
    %v2189 = vadd.f32 %v1963, %v2145
    %v2190 = vadd.f32 %v1964, %v2148
    %v2191 = vadd.f32 %v1965, %v2153
    %v2192 = vadd.f32 %v1966, %v2156
    %v2193 = vadd.f32 %v1967, %v2161
    %v2194 = vadd.f32 %v1968, %v2164
    %v2195 = vadd.f32 %v1969, %v2169
    %v2196 = vadd.f32 %v1970, %v2172
    %v2197 = vadd.f32 %v1971, %v2177
    %v2198 = vadd.f32 %v1972, %v2180
    %v2199 = vld [vmem:[%s1973] sm:$0xf]
    %v2200 = vld [vmem:[%s1973 + $0x4] sm:$0x1]
    %v2201 = vld [vmem:[%s1973 + $0x8] sm:$0xf]
    %v2202 = vld [vmem:[%s1973 + $0xc] sm:$0x1]
    %v2203 = vld [vmem:[%s1973 + $0x10] sm:$0xf]
    %v2204 = vld [vmem:[%s1973 + $0x14] sm:$0x1]
    %v2205 = vld [vmem:[%s1973 + $0x18] sm:$0xf]
    %v2206 = vld [vmem:[%s1973 + $0x1c] sm:$0x1]
    %v2207 = vld [vmem:[%s1973 + $0x20] sm:$0xf]
    %v2208 = vld [vmem:[%s1973 + $0x24] sm:$0x1]
    %v2209 = vld [vmem:[%s1973 + $0x28] sm:$0xf]
    %v2210 = vld [vmem:[%s1973 + $0x2c] sm:$0x1]
    %v2211 = vld [vmem:[%s1973 + $0x30] sm:$0xf]
    %v2212 = vld [vmem:[%s1973 + $0x34] sm:$0x1]
    %v2213 = vld [vmem:[%s1973 + $0x38] sm:$0xf]
    %v2214 = vld [vmem:[%s1973 + $0x3c] sm:$0x1]
    %v2215 = vld [vmem:[%s1973 + $0x50] sm:$0xf]
    %v2216 = vld [vmem:[%s1973 + $0x54] sm:$0x1]
    %v2217 = vld [vmem:[%s1973 + $0x58] sm:$0xf]
    %v2218 = vld [vmem:[%s1973 + $0x5c] sm:$0x1]
    %v2219 = vld [vmem:[%s1973 + $0x60] sm:$0xf]
    %v2220 = vld [vmem:[%s1973 + $0x64] sm:$0x1]
    %v2221 = vld [vmem:[%s1973 + $0x68] sm:$0xf]
    %v2222 = vld [vmem:[%s1973 + $0x6c] sm:$0x1]
    %v2223 = vld [vmem:[%s1973 + $0x70] sm:$0xf]
    %v2224 = vld [vmem:[%s1973 + $0x74] sm:$0x1]
    %v2225 = vld [vmem:[%s1973 + $0x78] sm:$0xf]
    %v2226 = vld [vmem:[%s1973 + $0x7c] sm:$0x1]
    %v2227 = vld [vmem:[%s1973 + $0x80] sm:$0xf]
    %v2228 = vld [vmem:[%s1973 + $0x84] sm:$0x1]
    %v2229 = vld [vmem:[%s1973 + $0x88] sm:$0xf]
    %v2230 = vld [vmem:[%s1973 + $0x8c] sm:$0x1]
    %v2232 = vshrl.u32 %v2199, 16
    %v2234 = vrot.slane %v2232, 4
    %v2235 = vshll.u32 %v2199, 16
    %v2237 = vrot.slane %v2235, 5
    %v2238 = vor.u32 %v2234, %v2237
    %v2239 = vrot.slane %v2238, 4
    %v2241 = vshll.u32 %v2200, 16
    %v2243 = vrot.slane %v2241, 5
    %v2244 = vsel %vm97, %v2239, %v2243
    %v2246 = vshrl.u32 %v2201, 16
    %v2248 = vrot.slane %v2246, 4
    %v2249 = vshll.u32 %v2201, 16
    %v2251 = vrot.slane %v2249, 5
    %v2252 = vor.u32 %v2248, %v2251
    %v2253 = vrot.slane %v2252, 4
    %v2255 = vshll.u32 %v2202, 16
    %v2257 = vrot.slane %v2255, 5
    %v2258 = vsel %vm97, %v2253, %v2257
    %v2260 = vshrl.u32 %v2203, 16
    %v2262 = vrot.slane %v2260, 4
    %v2263 = vshll.u32 %v2203, 16
    %v2265 = vrot.slane %v2263, 5
    %v2266 = vor.u32 %v2262, %v2265
    %v2267 = vrot.slane %v2266, 4
    %v2269 = vshll.u32 %v2204, 16
    %v2271 = vrot.slane %v2269, 5
    %v2272 = vsel %vm97, %v2267, %v2271
    %v2274 = vshrl.u32 %v2205, 16
    %v2276 = vrot.slane %v2274, 4
    %v2277 = vshll.u32 %v2205, 16
    %v2279 = vrot.slane %v2277, 5
    %v2280 = vor.u32 %v2276, %v2279
    %v2281 = vrot.slane %v2280, 4
    %v2283 = vshll.u32 %v2206, 16
    %v2285 = vrot.slane %v2283, 5
    %v2286 = vsel %vm97, %v2281, %v2285
    %v2288 = vshrl.u32 %v2207, 16
    %v2290 = vrot.slane %v2288, 4
    %v2291 = vshll.u32 %v2207, 16
    %v2293 = vrot.slane %v2291, 5
    %v2294 = vor.u32 %v2290, %v2293
    %v2295 = vrot.slane %v2294, 4
    %v2297 = vshll.u32 %v2208, 16
    %v2299 = vrot.slane %v2297, 5
    %v2300 = vsel %vm97, %v2295, %v2299
    %v2302 = vshrl.u32 %v2209, 16
    %v2304 = vrot.slane %v2302, 4
    %v2305 = vshll.u32 %v2209, 16
    %v2307 = vrot.slane %v2305, 5
    %v2308 = vor.u32 %v2304, %v2307
    %v2309 = vrot.slane %v2308, 4
    %v2311 = vshll.u32 %v2210, 16
    %v2313 = vrot.slane %v2311, 5
    %v2314 = vsel %vm97, %v2309, %v2313
    %v2316 = vshrl.u32 %v2211, 16
    %v2318 = vrot.slane %v2316, 4
    %v2319 = vshll.u32 %v2211, 16
    %v2321 = vrot.slane %v2319, 5
    %v2322 = vor.u32 %v2318, %v2321
    %v2323 = vrot.slane %v2322, 4
    %v2325 = vshll.u32 %v2212, 16
    %v2327 = vrot.slane %v2325, 5
    %v2328 = vsel %vm97, %v2323, %v2327
    %v2330 = vshrl.u32 %v2213, 16
    %v2332 = vrot.slane %v2330, 4
    %v2333 = vshll.u32 %v2213, 16
    %v2335 = vrot.slane %v2333, 5
    %v2336 = vor.u32 %v2332, %v2335
    %v2337 = vrot.slane %v2336, 4
    %v2339 = vshll.u32 %v2214, 16
    %v2341 = vrot.slane %v2339, 5
    %v2342 = vsel %vm97, %v2337, %v2341
    %v2344 = vshrl.u32 %v2215, 16
    %v2346 = vrot.slane %v2344, 4
    %v2347 = vshll.u32 %v2215, 16
    %v2349 = vrot.slane %v2347, 5
    %v2350 = vor.u32 %v2346, %v2349
    %v2351 = vrot.slane %v2350, 4
    %v2353 = vshll.u32 %v2216, 16
    %v2355 = vrot.slane %v2353, 5
    %v2356 = vsel %vm97, %v2351, %v2355
    %v2358 = vshrl.u32 %v2217, 16
    %v2360 = vrot.slane %v2358, 4
    %v2361 = vshll.u32 %v2217, 16
    %v2363 = vrot.slane %v2361, 5
    %v2364 = vor.u32 %v2360, %v2363
    %v2365 = vrot.slane %v2364, 4
    %v2367 = vshll.u32 %v2218, 16
    %v2369 = vrot.slane %v2367, 5
    %v2370 = vsel %vm97, %v2365, %v2369
    %v2372 = vshrl.u32 %v2219, 16
    %v2374 = vrot.slane %v2372, 4
    %v2375 = vshll.u32 %v2219, 16
    %v2377 = vrot.slane %v2375, 5
    %v2378 = vor.u32 %v2374, %v2377
    %v2379 = vrot.slane %v2378, 4
    %v2381 = vshll.u32 %v2220, 16
    %v2383 = vrot.slane %v2381, 5
    %v2384 = vsel %vm97, %v2379, %v2383
    %v2386 = vshrl.u32 %v2221, 16
    %v2388 = vrot.slane %v2386, 4
    %v2389 = vshll.u32 %v2221, 16
    %v2391 = vrot.slane %v2389, 5
    %v2392 = vor.u32 %v2388, %v2391
    %v2393 = vrot.slane %v2392, 4
    %v2395 = vshll.u32 %v2222, 16
    %v2397 = vrot.slane %v2395, 5
    %v2398 = vsel %vm97, %v2393, %v2397
    %v2400 = vshrl.u32 %v2223, 16
    %v2402 = vrot.slane %v2400, 4
    %v2403 = vshll.u32 %v2223, 16
    %v2405 = vrot.slane %v2403, 5
    %v2406 = vor.u32 %v2402, %v2405
    %v2407 = vrot.slane %v2406, 4
    %v2409 = vshll.u32 %v2224, 16
    %v2411 = vrot.slane %v2409, 5
    %v2412 = vsel %vm97, %v2407, %v2411
    %v2414 = vshrl.u32 %v2225, 16
    %v2416 = vrot.slane %v2414, 4
    %v2417 = vshll.u32 %v2225, 16
    %v2419 = vrot.slane %v2417, 5
    %v2420 = vor.u32 %v2416, %v2419
    %v2421 = vrot.slane %v2420, 4
    %v2423 = vshll.u32 %v2226, 16
    %v2425 = vrot.slane %v2423, 5
    %v2426 = vsel %vm97, %v2421, %v2425
    %v2428 = vshrl.u32 %v2227, 16
    %v2430 = vrot.slane %v2428, 4
    %v2431 = vshll.u32 %v2227, 16
    %v2433 = vrot.slane %v2431, 5
    %v2434 = vor.u32 %v2430, %v2433
    %v2435 = vrot.slane %v2434, 4
    %v2437 = vshll.u32 %v2228, 16
    %v2439 = vrot.slane %v2437, 5
    %v2440 = vsel %vm97, %v2435, %v2439
    %v2442 = vshrl.u32 %v2229, 16
    %v2444 = vrot.slane %v2442, 4
    %v2445 = vshll.u32 %v2229, 16
    %v2447 = vrot.slane %v2445, 5
    %v2448 = vor.u32 %v2444, %v2447
    %v2449 = vrot.slane %v2448, 4
    %v2451 = vshll.u32 %v2230, 16
    %v2453 = vrot.slane %v2451, 5
    %v2454 = vsel %vm97, %v2449, %v2453
    %v2455 = vld [vmem:[#allocation5 + $0xe0] sm:$0xf]
    %v2456 = vld [vmem:[#allocation5 + $0xe4] sm:$0xf]
    %v2457 = vld [vmem:[#allocation5 + $0xe8] sm:$0xf]
    %v2458 = vld [vmem:[#allocation5 + $0xec] sm:$0xf]
    %v2459 = vld [vmem:[#allocation5 + $0xf0] sm:$0xf]
    %v2460 = vld [vmem:[#allocation5 + $0xf4] sm:$0xf]
    %v2461 = vld [vmem:[#allocation5 + $0xf8] sm:$0xf]
    %v2462 = vld [vmem:[#allocation5 + $0xfc] sm:$0xf]
    %v2463 = vunpack.c.l.b16 %v2244
    %v2464 = vunpack.c.l.b16 %v2258
    %v2465 = vunpack.c.l.b16 %v2272
    %v2466 = vunpack.c.l.b16 %v2286
    %v2467 = vunpack.c.l.b16 %v2300
    %v2468 = vunpack.c.l.b16 %v2314
    %v2469 = vunpack.c.l.b16 %v2328
    %v2470 = vunpack.c.l.b16 %v2342
    %v2471 = vunpack.c.l.b16 %v2356
    %v2472 = vunpack.c.l.b16 %v2370
    %v2473 = vunpack.c.l.b16 %v2384
    %v2474 = vunpack.c.l.b16 %v2398
    %v2475 = vunpack.c.l.b16 %v2412
    %v2476 = vunpack.c.l.b16 %v2426
    %v2477 = vunpack.c.l.b16 %v2440
    %v2478 = vunpack.c.l.b16 %v2454
    %v2479 = vpack.c.b16 %v2464, %v2463
    %v2480 = vpack.c.b16 %v2466, %v2465
    %v2481 = vpack.c.b16 %v2468, %v2467
    %v2482 = vpack.c.b16 %v2470, %v2469
    %v2483 = vpack.c.b16 %v2472, %v2471
    %v2484 = vpack.c.b16 %v2474, %v2473
    %v2485 = vpack.c.b16 %v2476, %v2475
    %v2486 = vpack.c.b16 %v2478, %v2477
    %v2495 = vunpack.c.l.b16 %v2455
    %v2496 = vunpack.c.l.b16 %v2456
    %v2497 = vunpack.c.l.b16 %v2457
    %v2498 = vunpack.c.l.b16 %v2458
    %v2499 = vunpack.c.l.b16 %v2459
    %v2500 = vunpack.c.l.b16 %v2460
    %v2501 = vunpack.c.l.b16 %v2461
    %v2502 = vunpack.c.l.b16 %v2462
    %v2503 = vpack.c.b16 %v2496, %v2495
    %v2504 = vpack.c.b16 %v2498, %v2497
    %v2505 = vpack.c.b16 %v2500, %v2499
    %v2506 = vpack.c.b16 %v2502, %v2501
    %v2512 = vsel %vm378, %v2479, 0
    %v2515 = vsel %vm378, %v2480, 0
    %v2518 = vsel %vm378, %v2481, 0
    %v2521 = vsel %vm378, %v2482, 0
    %v2524 = vsel %vm378, %v2483, 0
    %v2527 = vsel %vm378, %v2484, 0
    %v2530 = vsel %vm378, %v2485, 0
    %v2533 = vsel %vm378, %v2486, 0
    %2535 = vmatprep.subr.bf16.mxu0 0
    %2536 = vmatpush1.bf16.msra.mxu0 %v2503
    %2537 = vmatprep.subr.bf16.mxu0 0
    %2538 = vmatpush1.bf16.msra.mxu0 %v2504
    %2539 = vmatprep.subr.bf16.mxu0 0
    %2540 = vmatpush1.bf16.msra.mxu0 %v2505
    %2541 = vmatprep.subr.bf16.mxu0 0
    %2542 = vmatpush1.bf16.msra.mxu0 %v2506
    %2543 = vmatprep.subr.bf16.mxu0 0
    %2544 = vmatpush1.bf16.msra.mxu0 0
    %2545 = vmatprep.subr.bf16.mxu0 0
    %2546 = vmatpush1.bf16.msra.mxu0 0
    %2547 = vmatprep.subr.bf16.mxu0 0
    %2548 = vmatpush1.bf16.msra.mxu0 0
    %2549 = vmatprep.subr.bf16.mxu0 0
    %2550 = vmatpush1.bf16.msra.mxu0 0
    %2551 = vmatprep.subr.bf16.mxu0 0
    %2552 = vmatpush1.bf16.msra.mxu0 0
    %2553 = vmatprep.subr.bf16.mxu0 0
    %2554 = vmatpush1.bf16.msra.mxu0 0
    %2555 = vmatprep.subr.bf16.mxu0 0
    %2556 = vmatpush1.bf16.msra.mxu0 0
    %2557 = vmatprep.subr.bf16.mxu0 0
    %2558 = vmatpush1.bf16.msra.mxu0 0
    %2559 = vmatprep.subr.bf16.mxu0 0
    %2560 = vmatpush1.bf16.msra.mxu0 0
    %2561 = vmatprep.subr.bf16.mxu0 0
    %2562 = vmatpush1.bf16.msra.mxu0 0
    %2563 = vmatprep.subr.bf16.mxu0 0
    %2564 = vmatpush1.bf16.msra.mxu0 0
    %2565 = vmatprep.subr.bf16.mxu0 0
    %2566 = vmatpush1.bf16.msra.mxu0 0
    %2567 = vmatprep.mubr.bf16.mxu0 0
    %2568 = vmatmul.mubr.bf16.gmra.mrb[0].mxu0 %v2512
    %v2569 = vpop.f32.mrb[0].mxu0
    %v2570 = vadd.f32 0.0, %v2569
    %v2571 = vpop.f32.mrb[0].mxu0
    %v2572 = vpop.f32.mrb[0].mxu0
    %v2573 = vadd.f32 0.0, %v2572
    %v2574 = vpop.f32.mrb[0].mxu0
    %2575 = vmatprep.mubr.bf16.mxu0 0
    %2576 = vmatmul.mubr.bf16.gmra.mrb[0].mxu0 %v2515
    %v2577 = vpop.f32.mrb[0].mxu0
    %v2578 = vadd.f32 0.0, %v2577
    %v2579 = vpop.f32.mrb[0].mxu0
    %v2580 = vpop.f32.mrb[0].mxu0
    %v2581 = vadd.f32 0.0, %v2580
    %v2582 = vpop.f32.mrb[0].mxu0
    %2583 = vmatprep.mubr.bf16.mxu0 0
    %2584 = vmatmul.mubr.bf16.gmra.mrb[0].mxu0 %v2518
    %v2585 = vpop.f32.mrb[0].mxu0
    %v2586 = vadd.f32 0.0, %v2585
    %v2587 = vpop.f32.mrb[0].mxu0
    %v2588 = vpop.f32.mrb[0].mxu0
    %v2589 = vadd.f32 0.0, %v2588
    %v2590 = vpop.f32.mrb[0].mxu0
    %2591 = vmatprep.mubr.bf16.mxu0 0
    %2592 = vmatmul.mubr.bf16.gmra.mrb[0].mxu0 %v2521
    %v2593 = vpop.f32.mrb[0].mxu0
    %v2594 = vadd.f32 0.0, %v2593
    %v2595 = vpop.f32.mrb[0].mxu0
    %v2596 = vpop.f32.mrb[0].mxu0
    %v2597 = vadd.f32 0.0, %v2596
    %v2598 = vpop.f32.mrb[0].mxu0
    %2599 = vmatprep.mubr.bf16.mxu0 0
    %2600 = vmatmul.mubr.bf16.gmra.mrb[0].mxu0 %v2524
    %v2601 = vpop.f32.mrb[0].mxu0
    %v2602 = vadd.f32 0.0, %v2601
    %v2603 = vpop.f32.mrb[0].mxu0
    %v2604 = vpop.f32.mrb[0].mxu0
    %v2605 = vadd.f32 0.0, %v2604
    %v2606 = vpop.f32.mrb[0].mxu0
    %2607 = vmatprep.mubr.bf16.mxu0 0
    %2608 = vmatmul.mubr.bf16.gmra.mrb[0].mxu0 %v2527
    %v2609 = vpop.f32.mrb[0].mxu0
    %v2610 = vadd.f32 0.0, %v2609
    %v2611 = vpop.f32.mrb[0].mxu0
    %v2612 = vpop.f32.mrb[0].mxu0
    %v2613 = vadd.f32 0.0, %v2612
    %v2614 = vpop.f32.mrb[0].mxu0
    %2615 = vmatprep.mubr.bf16.mxu0 0
    %2616 = vmatmul.mubr.bf16.gmra.mrb[0].mxu0 %v2530
    %v2617 = vpop.f32.mrb[0].mxu0
    %v2618 = vadd.f32 0.0, %v2617
    %v2619 = vpop.f32.mrb[0].mxu0
    %v2620 = vpop.f32.mrb[0].mxu0
    %v2621 = vadd.f32 0.0, %v2620
    %v2622 = vpop.f32.mrb[0].mxu0
    %2623 = vmatprep.mubr.bf16.mxu0 0
    %2624 = vmatmul.mubr.bf16.gmra.mrb[0].mxu0 %v2533
    %v2625 = vpop.f32.mrb[0].mxu0
    %v2626 = vadd.f32 0.0, %v2625
    %v2627 = vpop.f32.mrb[0].mxu0
    %v2628 = vpop.f32.mrb[0].mxu0
    %v2629 = vadd.f32 0.0, %v2628
    %v2630 = vpop.f32.mrb[0].mxu0
    %2631 = vdwg.mxu0
    %v2632 = vadd.f32 %v2183, %v2570
    %v2633 = vadd.f32 %v2184, %v2573
    %v2634 = vadd.f32 %v2185, %v2578
    %v2635 = vadd.f32 %v2186, %v2581
    %v2636 = vadd.f32 %v2187, %v2586
    %v2637 = vadd.f32 %v2188, %v2589
    %v2638 = vadd.f32 %v2189, %v2594
    %v2639 = vadd.f32 %v2190, %v2597
    %v2640 = vadd.f32 %v2191, %v2602
    %v2641 = vadd.f32 %v2192, %v2605
    %v2642 = vadd.f32 %v2193, %v2610
    %v2643 = vadd.f32 %v2194, %v2613
    %v2644 = vadd.f32 %v2195, %v2618
    %v2645 = vadd.f32 %v2196, %v2621
    %v2646 = vadd.f32 %v2197, %v2626
    %v2647 = vadd.f32 %v2198, %v2629
    %v2648 = vld [vmem:[%s1973] sm:$0xe]
    %v2649 = vld [vmem:[%s1973 + $0x8] sm:$0xe]
    %v2650 = vld [vmem:[%s1973 + $0x10] sm:$0xe]
    %v2651 = vld [vmem:[%s1973 + $0x18] sm:$0xe]
    %v2652 = vld [vmem:[%s1973 + $0x20] sm:$0xe]
    %v2653 = vld [vmem:[%s1973 + $0x28] sm:$0xe]
    %v2654 = vld [vmem:[%s1973 + $0x30] sm:$0xe]
    %v2655 = vld [vmem:[%s1973 + $0x38] sm:$0xe]
    %v2656 = vld [vmem:[%s1973 + $0x50] sm:$0xe]
    %v2657 = vld [vmem:[%s1973 + $0x58] sm:$0xe]
    %v2658 = vld [vmem:[%s1973 + $0x60] sm:$0xe]
    %v2659 = vld [vmem:[%s1973 + $0x68] sm:$0xe]
    %v2660 = vld [vmem:[%s1973 + $0x70] sm:$0xe]
    %v2661 = vld [vmem:[%s1973 + $0x78] sm:$0xe]
    %v2662 = vld [vmem:[%s1973 + $0x80] sm:$0xe]
    %v2663 = vld [vmem:[%s1973 + $0x88] sm:$0xe]
    %v2696 = vrot.slane %v2648, 5
    %v2697 = vrot.slane %v2696, 4
    %v2698 = vrot.slane %v2200, 5
    %v2699 = vsel %vm735, %v2697, %v2698
    %v2700 = vrot.slane %v2649, 5
    %v2701 = vrot.slane %v2700, 4
    %v2702 = vrot.slane %v2202, 5
    %v2703 = vsel %vm735, %v2701, %v2702
    %v2704 = vrot.slane %v2650, 5
    %v2705 = vrot.slane %v2704, 4
    %v2706 = vrot.slane %v2204, 5
    %v2707 = vsel %vm735, %v2705, %v2706
    %v2708 = vrot.slane %v2651, 5
    %v2709 = vrot.slane %v2708, 4
    %v2710 = vrot.slane %v2206, 5
    %v2711 = vsel %vm735, %v2709, %v2710
    %v2712 = vrot.slane %v2652, 5
    %v2713 = vrot.slane %v2712, 4
    %v2714 = vrot.slane %v2208, 5
    %v2715 = vsel %vm735, %v2713, %v2714
    %v2716 = vrot.slane %v2653, 5
    %v2717 = vrot.slane %v2716, 4
    %v2718 = vrot.slane %v2210, 5
    %v2719 = vsel %vm735, %v2717, %v2718
    %v2720 = vrot.slane %v2654, 5
    %v2721 = vrot.slane %v2720, 4
    %v2722 = vrot.slane %v2212, 5
    %v2723 = vsel %vm735, %v2721, %v2722
    %v2724 = vrot.slane %v2655, 5
    %v2725 = vrot.slane %v2724, 4
    %v2726 = vrot.slane %v2214, 5
    %v2727 = vsel %vm735, %v2725, %v2726
    %v2728 = vrot.slane %v2656, 5
    %v2729 = vrot.slane %v2728, 4
    %v2730 = vrot.slane %v2216, 5
    %v2731 = vsel %vm735, %v2729, %v2730
    %v2732 = vrot.slane %v2657, 5
    %v2733 = vrot.slane %v2732, 4
    %v2734 = vrot.slane %v2218, 5
    %v2735 = vsel %vm735, %v2733, %v2734
    %v2736 = vrot.slane %v2658, 5
    %v2737 = vrot.slane %v2736, 4
    %v2738 = vrot.slane %v2220, 5
    %v2739 = vsel %vm735, %v2737, %v2738
    %v2740 = vrot.slane %v2659, 5
    %v2741 = vrot.slane %v2740, 4
    %v2742 = vrot.slane %v2222, 5
    %v2743 = vsel %vm735, %v2741, %v2742
    %v2744 = vrot.slane %v2660, 5
    %v2745 = vrot.slane %v2744, 4
    %v2746 = vrot.slane %v2224, 5
    %v2747 = vsel %vm735, %v2745, %v2746
    %v2748 = vrot.slane %v2661, 5
    %v2749 = vrot.slane %v2748, 4
    %v2750 = vrot.slane %v2226, 5
    %v2751 = vsel %vm735, %v2749, %v2750
    %v2752 = vrot.slane %v2662, 5
    %v2753 = vrot.slane %v2752, 4
    %v2754 = vrot.slane %v2228, 5
    %v2755 = vsel %vm735, %v2753, %v2754
    %v2756 = vrot.slane %v2663, 5
    %v2757 = vrot.slane %v2756, 4
    %v2758 = vrot.slane %v2230, 5
    %v2759 = vsel %vm735, %v2757, %v2758
    %v2760 = vld [vmem:[#allocation5 + $0x100] sm:$0xf]
    %v2761 = vld [vmem:[#allocation5 + $0x104] sm:$0xf]
    %v2762 = vld [vmem:[#allocation5 + $0x108] sm:$0xf]
    %v2763 = vld [vmem:[#allocation5 + $0x10c] sm:$0xf]
    %v2764 = vld [vmem:[#allocation5 + $0x110] sm:$0xf]
    %v2765 = vld [vmem:[#allocation5 + $0x114] sm:$0xf]
    %v2766 = vld [vmem:[#allocation5 + $0x118] sm:$0xf]
    %v2767 = vld [vmem:[#allocation5 + $0x11c] sm:$0xf]
    %v2768 = vunpack.c.l.b16 %v2699
    %v2769 = vunpack.c.l.b16 %v2703
    %v2770 = vunpack.c.l.b16 %v2707
    %v2771 = vunpack.c.l.b16 %v2711
    %v2772 = vunpack.c.l.b16 %v2715
    %v2773 = vunpack.c.l.b16 %v2719
    %v2774 = vunpack.c.l.b16 %v2723
    %v2775 = vunpack.c.l.b16 %v2727
    %v2776 = vunpack.c.l.b16 %v2731
    %v2777 = vunpack.c.l.b16 %v2735
    %v2778 = vunpack.c.l.b16 %v2739
    %v2779 = vunpack.c.l.b16 %v2743
    %v2780 = vunpack.c.l.b16 %v2747
    %v2781 = vunpack.c.l.b16 %v2751
    %v2782 = vunpack.c.l.b16 %v2755
    %v2783 = vunpack.c.l.b16 %v2759
    %v2784 = vpack.c.b16 %v2769, %v2768
    %v2785 = vpack.c.b16 %v2771, %v2770
    %v2786 = vpack.c.b16 %v2773, %v2772
    %v2787 = vpack.c.b16 %v2775, %v2774
    %v2788 = vpack.c.b16 %v2777, %v2776
    %v2789 = vpack.c.b16 %v2779, %v2778
    %v2790 = vpack.c.b16 %v2781, %v2780
    %v2791 = vpack.c.b16 %v2783, %v2782
    %v2800 = vunpack.c.l.b16 %v2760
    %v2801 = vunpack.c.l.b16 %v2761
    %v2802 = vunpack.c.l.b16 %v2762
    %v2803 = vunpack.c.l.b16 %v2763
    %v2804 = vunpack.c.l.b16 %v2764
    %v2805 = vunpack.c.l.b16 %v2765
    %v2806 = vunpack.c.l.b16 %v2766
    %v2807 = vunpack.c.l.b16 %v2767
    %v2808 = vpack.c.b16 %v2801, %v2800
    %v2809 = vpack.c.b16 %v2803, %v2802
    %v2810 = vpack.c.b16 %v2805, %v2804
    %v2811 = vpack.c.b16 %v2807, %v2806
    %v2817 = vsel %vm378, %v2784, 0
    %v2820 = vsel %vm378, %v2785, 0
    %v2823 = vsel %vm378, %v2786, 0
    %v2826 = vsel %vm378, %v2787, 0
    %v2829 = vsel %vm378, %v2788, 0
    %v2832 = vsel %vm378, %v2789, 0
    %v2835 = vsel %vm378, %v2790, 0
    %v2838 = vsel %vm378, %v2791, 0
    %2840 = vmatprep.subr.bf16.mxu0 0
    %2841 = vmatpush1.bf16.msra.mxu0 %v2808
    %2842 = vmatprep.subr.bf16.mxu0 0
    %2843 = vmatpush1.bf16.msra.mxu0 %v2809
    %2844 = vmatprep.subr.bf16.mxu0 0
    %2845 = vmatpush1.bf16.msra.mxu0 %v2810
    %2846 = vmatprep.subr.bf16.mxu0 0
    %2847 = vmatpush1.bf16.msra.mxu0 %v2811
    %2848 = vmatprep.subr.bf16.mxu0 0
    %2849 = vmatpush1.bf16.msra.mxu0 0
    %2850 = vmatprep.subr.bf16.mxu0 0
    %2851 = vmatpush1.bf16.msra.mxu0 0
    %2852 = vmatprep.subr.bf16.mxu0 0
    %2853 = vmatpush1.bf16.msra.mxu0 0
    %2854 = vmatprep.subr.bf16.mxu0 0
    %2855 = vmatpush1.bf16.msra.mxu0 0
    %2856 = vmatprep.subr.bf16.mxu0 0
    %2857 = vmatpush1.bf16.msra.mxu0 0
    %2858 = vmatprep.subr.bf16.mxu0 0
    %2859 = vmatpush1.bf16.msra.mxu0 0
    %2860 = vmatprep.subr.bf16.mxu0 0
    %2861 = vmatpush1.bf16.msra.mxu0 0
    %2862 = vmatprep.subr.bf16.mxu0 0
    %2863 = vmatpush1.bf16.msra.mxu0 0
    %2864 = vmatprep.subr.bf16.mxu0 0
    %2865 = vmatpush1.bf16.msra.mxu0 0
    %2866 = vmatprep.subr.bf16.mxu0 0
    %2867 = vmatpush1.bf16.msra.mxu0 0
    %2868 = vmatprep.subr.bf16.mxu0 0
    %2869 = vmatpush1.bf16.msra.mxu0 0
    %2870 = vmatprep.subr.bf16.mxu0 0
    %2871 = vmatpush1.bf16.msra.mxu0 0
    %2872 = vmatprep.mubr.bf16.mxu0 0
    %2873 = vmatmul.mubr.bf16.gmra.mrb[0].mxu0 %v2817
    %v2874 = vpop.f32.mrb[0].mxu0
    %v2875 = vadd.f32 0.0, %v2874
    %v2876 = vpop.f32.mrb[0].mxu0
    %v2877 = vpop.f32.mrb[0].mxu0
    %v2878 = vadd.f32 0.0, %v2877
    %v2879 = vpop.f32.mrb[0].mxu0
    %2880 = vmatprep.mubr.bf16.mxu0 0
    %2881 = vmatmul.mubr.bf16.gmra.mrb[0].mxu0 %v2820
    %v2882 = vpop.f32.mrb[0].mxu0
    %v2883 = vadd.f32 0.0, %v2882
    %v2884 = vpop.f32.mrb[0].mxu0
    %v2885 = vpop.f32.mrb[0].mxu0
    %v2886 = vadd.f32 0.0, %v2885
    %v2887 = vpop.f32.mrb[0].mxu0
    %2888 = vmatprep.mubr.bf16.mxu0 0
    %2889 = vmatmul.mubr.bf16.gmra.mrb[0].mxu0 %v2823
    %v2890 = vpop.f32.mrb[0].mxu0
    %v2891 = vadd.f32 0.0, %v2890
    %v2892 = vpop.f32.mrb[0].mxu0
    %v2893 = vpop.f32.mrb[0].mxu0
    %v2894 = vadd.f32 0.0, %v2893
    %v2895 = vpop.f32.mrb[0].mxu0
    %2896 = vmatprep.mubr.bf16.mxu0 0
    %2897 = vmatmul.mubr.bf16.gmra.mrb[0].mxu0 %v2826
    %v2898 = vpop.f32.mrb[0].mxu0
    %v2899 = vadd.f32 0.0, %v2898
    %v2900 = vpop.f32.mrb[0].mxu0
    %v2901 = vpop.f32.mrb[0].mxu0
    %v2902 = vadd.f32 0.0, %v2901
    %v2903 = vpop.f32.mrb[0].mxu0
    %2904 = vmatprep.mubr.bf16.mxu0 0
    %2905 = vmatmul.mubr.bf16.gmra.mrb[0].mxu0 %v2829
    %v2906 = vpop.f32.mrb[0].mxu0
    %v2907 = vadd.f32 0.0, %v2906
    %v2908 = vpop.f32.mrb[0].mxu0
    %v2909 = vpop.f32.mrb[0].mxu0
    %v2910 = vadd.f32 0.0, %v2909
    %v2911 = vpop.f32.mrb[0].mxu0
    %2912 = vmatprep.mubr.bf16.mxu0 0
    %2913 = vmatmul.mubr.bf16.gmra.mrb[0].mxu0 %v2832
    %v2914 = vpop.f32.mrb[0].mxu0
    %v2915 = vadd.f32 0.0, %v2914
    %v2916 = vpop.f32.mrb[0].mxu0
    %v2917 = vpop.f32.mrb[0].mxu0
    %v2918 = vadd.f32 0.0, %v2917
    %v2919 = vpop.f32.mrb[0].mxu0
    %2920 = vmatprep.mubr.bf16.mxu0 0
    %2921 = vmatmul.mubr.bf16.gmra.mrb[0].mxu0 %v2835
    %v2922 = vpop.f32.mrb[0].mxu0
    %v2923 = vadd.f32 0.0, %v2922
    %v2924 = vpop.f32.mrb[0].mxu0
    %v2925 = vpop.f32.mrb[0].mxu0
    %v2926 = vadd.f32 0.0, %v2925
    %v2927 = vpop.f32.mrb[0].mxu0
    %2928 = vmatprep.mubr.bf16.mxu0 0
    %2929 = vmatmul.mubr.bf16.gmra.mrb[0].mxu0 %v2838
    %v2930 = vpop.f32.mrb[0].mxu0
    %v2931 = vadd.f32 0.0, %v2930
    %v2932 = vpop.f32.mrb[0].mxu0
    %v2933 = vpop.f32.mrb[0].mxu0
    %v2934 = vadd.f32 0.0, %v2933
    %v2935 = vpop.f32.mrb[0].mxu0
    %2936 = vdwg.mxu0
    %v2937 = vadd.f32 %v2632, %v2875
    %v2938 = vadd.f32 %v2633, %v2878
    %v2939 = vadd.f32 %v2634, %v2883
    %v2940 = vadd.f32 %v2635, %v2886
    %v2941 = vadd.f32 %v2636, %v2891
    %v2942 = vadd.f32 %v2637, %v2894
    %v2943 = vadd.f32 %v2638, %v2899
    %v2944 = vadd.f32 %v2639, %v2902
    %v2945 = vadd.f32 %v2640, %v2907
    %v2946 = vadd.f32 %v2641, %v2910
    %v2947 = vadd.f32 %v2642, %v2915
    %v2948 = vadd.f32 %v2643, %v2918
    %v2949 = vadd.f32 %v2644, %v2923
    %v2950 = vadd.f32 %v2645, %v2926
    %v2951 = vadd.f32 %v2646, %v2931
    %v2952 = vadd.f32 %v2647, %v2934
    %v2953 = vld [vmem:[#allocation7] sm:$0x1]
    %v2955 = vlaneseq
    %v2956 = vshrl.u32 %v2955, 7
    %v2957 = vsub.s32 0, %v2956
    %v2958 = vrot.slane %v2953, %v2957
    %v2960 = vadd.f32 %v2937, %v2958
    %v2961 = vadd.f32 %v2938, %v2958
    %v2962 = vadd.f32 %v2939, %v2958
    %v2963 = vadd.f32 %v2940, %v2958
    %v2964 = vadd.f32 %v2941, %v2958
    %v2965 = vadd.f32 %v2942, %v2958
    %v2966 = vadd.f32 %v2943, %v2958
    %v2967 = vadd.f32 %v2944, %v2958
    %v2968 = vadd.f32 %v2945, %v2958
    %v2969 = vadd.f32 %v2946, %v2958
    %v2970 = vadd.f32 %v2947, %v2958
    %v2971 = vadd.f32 %v2948, %v2958
    %v2972 = vadd.f32 %v2949, %v2958
    %v2973 = vadd.f32 %v2950, %v2958
    %v2974 = vadd.f32 %v2951, %v2958
    %v2975 = vadd.f32 %v2952, %v2958
    %v2976 = vmax.f32 %v2960, 0.0
    %v2977 = vmax.f32 %v2961, 0.0
    %v2978 = vmax.f32 %v2962, 0.0
    %v2979 = vmax.f32 %v2963, 0.0
    %v2980 = vmax.f32 %v2964, 0.0
    %v2981 = vmax.f32 %v2965, 0.0
    %v2982 = vmax.f32 %v2966, 0.0
    %v2983 = vmax.f32 %v2967, 0.0
    %v2984 = vmax.f32 %v2968, 0.0
    %v2985 = vmax.f32 %v2969, 0.0
    %v2986 = vmax.f32 %v2970, 0.0
    %v2987 = vmax.f32 %v2971, 0.0
    %v2988 = vmax.f32 %v2972, 0.0
    %v2989 = vmax.f32 %v2973, 0.0
    %v2990 = vmax.f32 %v2974, 0.0
    %v2991 = vmax.f32 %v2975, 0.0
    %v2992 = vpack.c.bf16 %v2977, %v2976
    %v2993 = vpack.c.bf16 %v2979, %v2978
    %v2994 = vpack.c.bf16 %v2981, %v2980
    %v2995 = vpack.c.bf16 %v2983, %v2982
    %v2996 = vpack.c.bf16 %v2985, %v2984
    %v2997 = vpack.c.bf16 %v2987, %v2986
    %v2998 = vpack.c.bf16 %v2989, %v2988
    %v2999 = vpack.c.bf16 %v2991, %v2990
    %v3008 = vunpack.c.l.b16 %v2992
    %v3009 = vunpack.c.h.b16 %v2992
    %v3010 = vunpack.c.l.b16 %v2993
    %v3011 = vunpack.c.h.b16 %v2993
    %v3012 = vunpack.c.l.b16 %v2994
    %v3013 = vunpack.c.h.b16 %v2994
    %v3014 = vunpack.c.l.b16 %v2995
    %v3015 = vunpack.c.h.b16 %v2995
    %v3016 = vunpack.c.l.b16 %v2996
    %v3017 = vunpack.c.h.b16 %v2996
    %v3018 = vunpack.c.l.b16 %v2997
    %v3019 = vunpack.c.h.b16 %v2997
    %v3020 = vunpack.c.l.b16 %v2998
    %v3021 = vunpack.c.h.b16 %v2998
    %v3022 = vunpack.c.l.b16 %v2999
    %v3023 = vunpack.c.h.b16 %v2999
    %v3024 = vpack.c.b16 %v3008, %v3008
    %v3025 = vpack.c.b16 %v3009, %v3009
    %v3026 = vpack.c.b16 %v3010, %v3010
    %v3027 = vpack.c.b16 %v3011, %v3011
    %v3028 = vpack.c.b16 %v3012, %v3012
    %v3029 = vpack.c.b16 %v3013, %v3013
    %v3030 = vpack.c.b16 %v3014, %v3014
    %v3031 = vpack.c.b16 %v3015, %v3015
    %v3032 = vpack.c.b16 %v3016, %v3016
    %v3033 = vpack.c.b16 %v3017, %v3017
    %v3034 = vpack.c.b16 %v3018, %v3018
    %v3035 = vpack.c.b16 %v3019, %v3019
    %v3036 = vpack.c.b16 %v3020, %v3020
    %v3037 = vpack.c.b16 %v3021, %v3021
    %v3038 = vpack.c.b16 %v3022, %v3022
    %v3039 = vpack.c.b16 %v3023, %v3023
    %3056 = vst [vmem:[#allocation8] sm:$0xf] %v3024
    %3057 = vst [vmem:[#allocation8 + $0x4] sm:$0xf] %v3025
    %3058 = vst [vmem:[#allocation8 + $0x8] sm:$0xf] %v3026
    %3059 = vst [vmem:[#allocation8 + $0xc] sm:$0xf] %v3027
    %3060 = vst [vmem:[#allocation8 + $0x10] sm:$0xf] %v3028
    %3061 = vst [vmem:[#allocation8 + $0x14] sm:$0xf] %v3029
    %3062 = vst [vmem:[#allocation8 + $0x18] sm:$0xf] %v3030
    %3063 = vst [vmem:[#allocation8 + $0x1c] sm:$0xf] %v3031
    %3064 = vst [vmem:[#allocation8 + $0x20] sm:$0xf] %v3032
    %3065 = vst [vmem:[#allocation8 + $0x24] sm:$0xf] %v3033
    %3066 = vst [vmem:[#allocation8 + $0x28] sm:$0xf] %v3034
    %3067 = vst [vmem:[#allocation8 + $0x2c] sm:$0xf] %v3035
    %3068 = vst [vmem:[#allocation8 + $0x30] sm:$0xf] %v3036
    %3069 = vst [vmem:[#allocation8 + $0x34] sm:$0xf] %v3037
    %3070 = vst [vmem:[#allocation8 + $0x38] sm:$0xf] %v3038
    %3071 = vst [vmem:[#allocation8 + $0x3c] sm:$0xf] %v3039
    // Predicated region
    $region26: #{tpu_custom_call.1} parent=1 // pred_check
      _
    $region27: #{tpu_custom_call.1} parent=1 // pred_check_branch
      %3073 = sbr.rel (0) target = $region29
    $region28: #{tpu_custom_call.1} parent=1 // pred_region
      %s3075 = ssub.s32 1024, 1024
      %3076 = vsyncadd [#allocation4], %s3075
      %s3077 = sshll.u32 [#allocation8], 4
      %s3078 = int_to_ptr.vmem [resolvable:$true] %s3077
      %3083 = dma.vmem_to_hbm [thread:$0]  %s3078, 1024, %s3, [#allocation4], 64, 64, 4
    $region29: #{tpu_custom_call.1} parent=1 // pred_fallthru
      _
    // Predicated region
    $region30: #{tpu_custom_call.1} parent=1 // pred_check
      _
    $region31: #{tpu_custom_call.1} parent=1 // pred_check_branch
      %3085 = sbr.rel (0) target = $region33
    $region32: #{tpu_custom_call.1} parent=1 // pred_region
      %3086 = dma.done [#allocation4], 1024
    $region33: #{tpu_custom_call.1} parent=1 // pred_fallthru
      _
    %3087 = vsyncpa [#allocation3], 1
    %3088 = vsyncpa [#allocation6], 1
    %3089 = vsyncpa [#allocation4], 1

// kernel: stem_forward.2
$region0: #{stem_forward.2}
  #allocation0 [shape = 'u32[]', space=smem, size = 0x4, offset = 0x4, fixed_abs, tag = 'smem constant byte address 0x4 - core index']
  #allocation1 [shape = 'u32[144,128]{1,0:T(1,128)}', space=vmem, size = 0x12000, scoped, tag = 'internal scratch']
  #allocation2 [shape = 'f32[512,128]{1,0:T(8,128)}', space=vmem, size = 0x40000, scoped, tag = 'scratch operand']
  %s0 = inlined_call_operand.hbm [shape: bf16[512,256], index: 0, kind: input, shape index: {}]
  %s1 = inlined_call_operand.hbm [shape: bf16[256,128], index: 1, kind: input, shape index: {}]
  %s2 = inlined_call_operand.hbm [shape: f32[1,128], index: 2, kind: input, shape index: {}]
  %s3 = inlined_call_operand.hbm [shape: bf16[512,128], index: 3, kind: output, shape index: {}]
  %s4 = sld [smem:[#allocation0]]
  $region42: #{stem_forward.2} parent=0
    _
  %s6 = ssub.s32 1, %s4
  %s7 = scalar_select 0, %s6, %s4
  $region1: #{stem_forward.2} parent=0
    #allocation3 [shape = 'u8[262144]{0}', space=vmem, size = 0x40000, scoped, tag = 'input window, operand 0, single buffered']
    #allocation4 [shape = 's32[1]{0}', space=sflag, size = 0x4, scoped, tag = 'scoped memory for stem_forward.2']
    #allocation5 [shape = 's32[1]{0}', space=sflag, size = 0x4, scoped, tag = 'scoped memory for stem_forward.2']
    #allocation6 [shape = 'u8[65536]{0}', space=vmem, size = 0x10000, scoped, tag = 'input window, operand 1, single buffered']
    #allocation7 [shape = 's32[1]{0}', space=sflag, size = 0x4, scoped, tag = 'scoped memory for stem_forward.2']
    #allocation8 [shape = 'u8[512]{0}', space=vmem, size = 0x400, scoped, tag = 'input window, operand 2, single buffered']
    #allocation9 [shape = 'u8[131072]{0}', space=vmem, size = 0x20000, scoped, tag = 'output window, operand 0, single buffered']
    %8 = vsyncpa [#allocation4], 0
    %9 = vsyncpa [#allocation7], 0
    %10 = vsyncpa [#allocation5], 0
    // Predicated region
    $region2: #{stem_forward.2} parent=1 // pred_check
      _
    $region3: #{stem_forward.2} parent=1 // pred_check_branch
      %12 = sbr.rel (0) target = $region5
    $region4: #{stem_forward.2} parent=1 // pred_region
      %s14 = ssub.s32 8192, 8192
      %15 = vsyncadd [#allocation4], %s14
      %s16 = sshll.u32 [#allocation3], 4
      %s17 = int_to_ptr.vmem [resolvable:$true] %s16
      %22 = dma.hbm_to_vmem [thread:$0]  %s0, 8192, %s17, [#allocation4], 128, 128, 8
    $region5: #{stem_forward.2} parent=1 // pred_fallthru
      _
    // Predicated region
    $region6: #{stem_forward.2} parent=1 // pred_check
      _
    $region7: #{stem_forward.2} parent=1 // pred_check_branch
      %24 = sbr.rel (0) target = $region9
    $region8: #{stem_forward.2} parent=1 // pred_region
      %s26 = ssub.s32 2048, 2048
      %27 = vsyncadd [#allocation7], %s26
      %s28 = sshll.u32 [#allocation6], 4
      %s29 = int_to_ptr.vmem [resolvable:$true] %s28
      %34 = dma.hbm_to_vmem [thread:$0]  %s1, 2048, %s29, [#allocation7], 64, 64, 4
    $region9: #{stem_forward.2} parent=1 // pred_fallthru
      _
    // Predicated region
    $region10: #{stem_forward.2} parent=1 // pred_check
      _
    $region11: #{stem_forward.2} parent=1 // pred_check_branch
      %36 = sbr.rel (0) target = $region13
    $region12: #{stem_forward.2} parent=1 // pred_region
      %s38 = ssub.s32 16, 16
      %39 = vsyncadd [#allocation7], %s38
      %s41 = sshll.u32 [#allocation8], 4
      %s42 = int_to_ptr.vmem [resolvable:$true] %s41
      %44 = dma.hbm_to_vmem [thread:$0]  %s2, 16, %s42, [#allocation7]
    $region13: #{stem_forward.2} parent=1 // pred_fallthru
      _
    // Predicated region
    $region14: #{stem_forward.2} parent=1 // pred_check
      _
    $region15: #{stem_forward.2} parent=1 // pred_check_branch
      %46 = sbr.rel (0) target = $region17
    $region16: #{stem_forward.2} parent=1 // pred_region
      %47 = dma.done [#allocation4], 8192
    $region17: #{stem_forward.2} parent=1 // pred_fallthru
      _
    // Predicated region
    $region18: #{stem_forward.2} parent=1 // pred_check
      _
    $region19: #{stem_forward.2} parent=1 // pred_check_branch
      %49 = sbr.rel (0) target = $region21
    $region20: #{stem_forward.2} parent=1 // pred_region
      %50 = dma.done [#allocation7], 2048
    $region21: #{stem_forward.2} parent=1 // pred_fallthru
      _
    // Predicated region
    $region22: #{stem_forward.2} parent=1 // pred_check
      _
    $region23: #{stem_forward.2} parent=1 // pred_check_branch
      %52 = sbr.rel (0) target = $region25
    $region24: #{stem_forward.2} parent=1 // pred_region
      %53 = dma.done [#allocation7], 16
    $region25: #{stem_forward.2} parent=1 // pred_fallthru
      _
    %p55 = scmp.eq.s32.totalorder 0, 0
    // Predicated region
    $region26: #{stem_forward.2} parent=1 // pred_check
      %p56 = pneg %p55
    $region27: #{stem_forward.2} parent=1 // pred_check_branch
      %58 = sbr.rel (%p56) target = $region29
    $region28: #{stem_forward.2} parent=1 // pred_region
      %59 = vst [vmem:[#allocation2] sm:$0xff] 0.0
      %60 = vst [vmem:[#allocation2 + $0x8] sm:$0xff] 0.0
      %61 = vst [vmem:[#allocation2 + $0x10] sm:$0xff] 0.0
      %62 = vst [vmem:[#allocation2 + $0x18] sm:$0xff] 0.0
      %63 = vst [vmem:[#allocation2 + $0x20] sm:$0xff] 0.0
      %64 = vst [vmem:[#allocation2 + $0x28] sm:$0xff] 0.0
      %65 = vst [vmem:[#allocation2 + $0x30] sm:$0xff] 0.0
      %66 = vst [vmem:[#allocation2 + $0x38] sm:$0xff] 0.0
      %67 = vst [vmem:[#allocation2 + $0x40] sm:$0xff] 0.0
      %68 = vst [vmem:[#allocation2 + $0x48] sm:$0xff] 0.0
      %69 = vst [vmem:[#allocation2 + $0x50] sm:$0xff] 0.0
      %70 = vst [vmem:[#allocation2 + $0x58] sm:$0xff] 0.0
      %71 = vst [vmem:[#allocation2 + $0x60] sm:$0xff] 0.0
      %72 = vst [vmem:[#allocation2 + $0x68] sm:$0xff] 0.0
      %73 = vst [vmem:[#allocation2 + $0x70] sm:$0xff] 0.0
      %74 = vst [vmem:[#allocation2 + $0x78] sm:$0xff] 0.0
      %75 = vst [vmem:[#allocation2 + $0x80] sm:$0xff] 0.0
      %76 = vst [vmem:[#allocation2 + $0x88] sm:$0xff] 0.0
      %77 = vst [vmem:[#allocation2 + $0x90] sm:$0xff] 0.0
      %78 = vst [vmem:[#allocation2 + $0x98] sm:$0xff] 0.0
      %79 = vst [vmem:[#allocation2 + $0xa0] sm:$0xff] 0.0
      %80 = vst [vmem:[#allocation2 + $0xa8] sm:$0xff] 0.0
      %81 = vst [vmem:[#allocation2 + $0xb0] sm:$0xff] 0.0
      %82 = vst [vmem:[#allocation2 + $0xb8] sm:$0xff] 0.0
      %83 = vst [vmem:[#allocation2 + $0xc0] sm:$0xff] 0.0
      %84 = vst [vmem:[#allocation2 + $0xc8] sm:$0xff] 0.0
      %85 = vst [vmem:[#allocation2 + $0xd0] sm:$0xff] 0.0
      %86 = vst [vmem:[#allocation2 + $0xd8] sm:$0xff] 0.0
      %87 = vst [vmem:[#allocation2 + $0xe0] sm:$0xff] 0.0
      %88 = vst [vmem:[#allocation2 + $0xe8] sm:$0xff] 0.0
      %89 = vst [vmem:[#allocation2 + $0xf0] sm:$0xff] 0.0
      %90 = vst [vmem:[#allocation2 + $0xf8] sm:$0xff] 0.0
      %91 = vst [vmem:[#allocation2 + $0x100] sm:$0xff] 0.0
      %92 = vst [vmem:[#allocation2 + $0x108] sm:$0xff] 0.0
      %93 = vst [vmem:[#allocation2 + $0x110] sm:$0xff] 0.0
      %94 = vst [vmem:[#allocation2 + $0x118] sm:$0xff] 0.0
      %95 = vst [vmem:[#allocation2 + $0x120] sm:$0xff] 0.0
      %96 = vst [vmem:[#allocation2 + $0x128] sm:$0xff] 0.0
      %97 = vst [vmem:[#allocation2 + $0x130] sm:$0xff] 0.0
      %98 = vst [vmem:[#allocation2 + $0x138] sm:$0xff] 0.0
      %99 = vst [vmem:[#allocation2 + $0x140] sm:$0xff] 0.0
      %100 = vst [vmem:[#allocation2 + $0x148] sm:$0xff] 0.0
      %101 = vst [vmem:[#allocation2 + $0x150] sm:$0xff] 0.0
      %102 = vst [vmem:[#allocation2 + $0x158] sm:$0xff] 0.0
      %103 = vst [vmem:[#allocation2 + $0x160] sm:$0xff] 0.0
      %104 = vst [vmem:[#allocation2 + $0x168] sm:$0xff] 0.0
      %105 = vst [vmem:[#allocation2 + $0x170] sm:$0xff] 0.0
      %106 = vst [vmem:[#allocation2 + $0x178] sm:$0xff] 0.0
      %107 = vst [vmem:[#allocation2 + $0x180] sm:$0xff] 0.0
      %108 = vst [vmem:[#allocation2 + $0x188] sm:$0xff] 0.0
      %109 = vst [vmem:[#allocation2 + $0x190] sm:$0xff] 0.0
      %110 = vst [vmem:[#allocation2 + $0x198] sm:$0xff] 0.0
      %111 = vst [vmem:[#allocation2 + $0x1a0] sm:$0xff] 0.0
      %112 = vst [vmem:[#allocation2 + $0x1a8] sm:$0xff] 0.0
      %113 = vst [vmem:[#allocation2 + $0x1b0] sm:$0xff] 0.0
      %114 = vst [vmem:[#allocation2 + $0x1b8] sm:$0xff] 0.0
      %115 = vst [vmem:[#allocation2 + $0x1c0] sm:$0xff] 0.0
      %116 = vst [vmem:[#allocation2 + $0x1c8] sm:$0xff] 0.0
      %117 = vst [vmem:[#allocation2 + $0x1d0] sm:$0xff] 0.0
      %118 = vst [vmem:[#allocation2 + $0x1d8] sm:$0xff] 0.0
      %119 = vst [vmem:[#allocation2 + $0x1e0] sm:$0xff] 0.0
      %120 = vst [vmem:[#allocation2 + $0x1e8] sm:$0xff] 0.0
      %121 = vst [vmem:[#allocation2 + $0x1f0] sm:$0xff] 0.0
      %122 = vst [vmem:[#allocation2 + $0x1f8] sm:$0xff] 0.0
    $region29: #{stem_forward.2} parent=1 // pred_fallthru
      _
    %v123 = vld [vmem:[#allocation2] sm:$0xff]
    %v124 = vld [vmem:[#allocation2 + $0x8] sm:$0xff]
    %v125 = vld [vmem:[#allocation2 + $0x10] sm:$0xff]
    %v126 = vld [vmem:[#allocation2 + $0x18] sm:$0xff]
    %v127 = vld [vmem:[#allocation2 + $0x20] sm:$0xff]
    %v128 = vld [vmem:[#allocation2 + $0x28] sm:$0xff]
    %v129 = vld [vmem:[#allocation2 + $0x30] sm:$0xff]
    %v130 = vld [vmem:[#allocation2 + $0x38] sm:$0xff]
    %v131 = vld [vmem:[#allocation2 + $0x40] sm:$0xff]
    %v132 = vld [vmem:[#allocation2 + $0x48] sm:$0xff]
    %v133 = vld [vmem:[#allocation2 + $0x50] sm:$0xff]
    %v134 = vld [vmem:[#allocation2 + $0x58] sm:$0xff]
    %v135 = vld [vmem:[#allocation2 + $0x60] sm:$0xff]
    %v136 = vld [vmem:[#allocation2 + $0x68] sm:$0xff]
    %v137 = vld [vmem:[#allocation2 + $0x70] sm:$0xff]
    %v138 = vld [vmem:[#allocation2 + $0x78] sm:$0xff]
    %v139 = vld [vmem:[#allocation2 + $0x80] sm:$0xff]
    %v140 = vld [vmem:[#allocation2 + $0x88] sm:$0xff]
    %v141 = vld [vmem:[#allocation2 + $0x90] sm:$0xff]
    %v142 = vld [vmem:[#allocation2 + $0x98] sm:$0xff]
    %v143 = vld [vmem:[#allocation2 + $0xa0] sm:$0xff]
    %v144 = vld [vmem:[#allocation2 + $0xa8] sm:$0xff]
    %v145 = vld [vmem:[#allocation2 + $0xb0] sm:$0xff]
    %v146 = vld [vmem:[#allocation2 + $0xb8] sm:$0xff]
    %v147 = vld [vmem:[#allocation2 + $0xc0] sm:$0xff]
    %v148 = vld [vmem:[#allocation2 + $0xc8] sm:$0xff]
    %v149 = vld [vmem:[#allocation2 + $0xd0] sm:$0xff]
    %v150 = vld [vmem:[#allocation2 + $0xd8] sm:$0xff]
    %v151 = vld [vmem:[#allocation2 + $0xe0] sm:$0xff]
    %v152 = vld [vmem:[#allocation2 + $0xe8] sm:$0xff]
    %v153 = vld [vmem:[#allocation2 + $0xf0] sm:$0xff]
    %v154 = vld [vmem:[#allocation2 + $0xf8] sm:$0xff]
    %v155 = vld [vmem:[#allocation2 + $0x100] sm:$0xff]
    %v156 = vld [vmem:[#allocation2 + $0x108] sm:$0xff]
    %v157 = vld [vmem:[#allocation2 + $0x110] sm:$0xff]
    %v158 = vld [vmem:[#allocation2 + $0x118] sm:$0xff]
    %v159 = vld [vmem:[#allocation2 + $0x120] sm:$0xff]
    %v160 = vld [vmem:[#allocation2 + $0x128] sm:$0xff]
    %v161 = vld [vmem:[#allocation2 + $0x130] sm:$0xff]
    %v162 = vld [vmem:[#allocation2 + $0x138] sm:$0xff]
    %v163 = vld [vmem:[#allocation2 + $0x140] sm:$0xff]
    %v164 = vld [vmem:[#allocation2 + $0x148] sm:$0xff]
    %v165 = vld [vmem:[#allocation2 + $0x150] sm:$0xff]
    %v166 = vld [vmem:[#allocation2 + $0x158] sm:$0xff]
    %v167 = vld [vmem:[#allocation2 + $0x160] sm:$0xff]
    %v168 = vld [vmem:[#allocation2 + $0x168] sm:$0xff]
    %v169 = vld [vmem:[#allocation2 + $0x170] sm:$0xff]
    %v170 = vld [vmem:[#allocation2 + $0x178] sm:$0xff]
    %v171 = vld [vmem:[#allocation2 + $0x180] sm:$0xff]
    %v172 = vld [vmem:[#allocation2 + $0x188] sm:$0xff]
    %v173 = vld [vmem:[#allocation2 + $0x190] sm:$0xff]
    %v174 = vld [vmem:[#allocation2 + $0x198] sm:$0xff]
    %v175 = vld [vmem:[#allocation2 + $0x1a0] sm:$0xff]
    %v176 = vld [vmem:[#allocation2 + $0x1a8] sm:$0xff]
    %v177 = vld [vmem:[#allocation2 + $0x1b0] sm:$0xff]
    %v178 = vld [vmem:[#allocation2 + $0x1b8] sm:$0xff]
    %v179 = vld [vmem:[#allocation2 + $0x1c0] sm:$0xff]
    %v180 = vld [vmem:[#allocation2 + $0x1c8] sm:$0xff]
    %v181 = vld [vmem:[#allocation2 + $0x1d0] sm:$0xff]
    %v182 = vld [vmem:[#allocation2 + $0x1d8] sm:$0xff]
    %v183 = vld [vmem:[#allocation2 + $0x1e0] sm:$0xff]
    %v184 = vld [vmem:[#allocation2 + $0x1e8] sm:$0xff]
    %v185 = vld [vmem:[#allocation2 + $0x1f0] sm:$0xff]
    %v186 = vld [vmem:[#allocation2 + $0x1f8] sm:$0xff]
    %v187 = vld [vmem:[#allocation3] sm:$0xff]
    %v188 = vld [vmem:[#allocation3 + $0x8] sm:$0xff]
    %v189 = vld [vmem:[#allocation3 + $0x10] sm:$0xff]
    %v190 = vld [vmem:[#allocation3 + $0x18] sm:$0xff]
    %v191 = vld [vmem:[#allocation3 + $0x20] sm:$0xff]
    %v192 = vld [vmem:[#allocation3 + $0x28] sm:$0xff]
    %v193 = vld [vmem:[#allocation3 + $0x30] sm:$0xff]
    %v194 = vld [vmem:[#allocation3 + $0x38] sm:$0xff]
    %v195 = vld [vmem:[#allocation3 + $0x40] sm:$0xff]
    %v196 = vld [vmem:[#allocation3 + $0x48] sm:$0xff]
    %v197 = vld [vmem:[#allocation3 + $0x50] sm:$0xff]
    %v198 = vld [vmem:[#allocation3 + $0x58] sm:$0xff]
    %v199 = vld [vmem:[#allocation3 + $0x60] sm:$0xff]
    %v200 = vld [vmem:[#allocation3 + $0x68] sm:$0xff]
    %v201 = vld [vmem:[#allocation3 + $0x70] sm:$0xff]
    %v202 = vld [vmem:[#allocation3 + $0x78] sm:$0xff]
    %v203 = vld [vmem:[#allocation3 + $0x80] sm:$0xff]
    %v204 = vld [vmem:[#allocation3 + $0x88] sm:$0xff]
    %v205 = vld [vmem:[#allocation3 + $0x90] sm:$0xff]
    %v206 = vld [vmem:[#allocation3 + $0x98] sm:$0xff]
    %v207 = vld [vmem:[#allocation3 + $0xa0] sm:$0xff]
    %v208 = vld [vmem:[#allocation3 + $0xa8] sm:$0xff]
    %v209 = vld [vmem:[#allocation3 + $0xb0] sm:$0xff]
    %v210 = vld [vmem:[#allocation3 + $0xb8] sm:$0xff]
    %v211 = vld [vmem:[#allocation3 + $0xc0] sm:$0xff]
    %v212 = vld [vmem:[#allocation3 + $0xc8] sm:$0xff]
    %v213 = vld [vmem:[#allocation3 + $0xd0] sm:$0xff]
    %v214 = vld [vmem:[#allocation3 + $0xd8] sm:$0xff]
    %v215 = vld [vmem:[#allocation3 + $0xe0] sm:$0xff]
    %v216 = vld [vmem:[#allocation3 + $0xe8] sm:$0xff]
    %v217 = vld [vmem:[#allocation3 + $0xf0] sm:$0xff]
    %v218 = vld [vmem:[#allocation3 + $0xf8] sm:$0xff]
    %v219 = vld [vmem:[#allocation3 + $0x100] sm:$0xff]
    %v220 = vld [vmem:[#allocation3 + $0x108] sm:$0xff]
    %v221 = vld [vmem:[#allocation3 + $0x110] sm:$0xff]
    %v222 = vld [vmem:[#allocation3 + $0x118] sm:$0xff]
    %v223 = vld [vmem:[#allocation3 + $0x120] sm:$0xff]
    %v224 = vld [vmem:[#allocation3 + $0x128] sm:$0xff]
    %v225 = vld [vmem:[#allocation3 + $0x130] sm:$0xff]
    %v226 = vld [vmem:[#allocation3 + $0x138] sm:$0xff]
    %v227 = vld [vmem:[#allocation3 + $0x140] sm:$0xff]
    %v228 = vld [vmem:[#allocation3 + $0x148] sm:$0xff]
    %v229 = vld [vmem:[#allocation3 + $0x150] sm:$0xff]
    %v230 = vld [vmem:[#allocation3 + $0x158] sm:$0xff]
    %v231 = vld [vmem:[#allocation3 + $0x160] sm:$0xff]
    %v232 = vld [vmem:[#allocation3 + $0x168] sm:$0xff]
    %v233 = vld [vmem:[#allocation3 + $0x170] sm:$0xff]
    %v234 = vld [vmem:[#allocation3 + $0x178] sm:$0xff]
    %v235 = vld [vmem:[#allocation3 + $0x180] sm:$0xff]
    %v236 = vld [vmem:[#allocation3 + $0x188] sm:$0xff]
    %v237 = vld [vmem:[#allocation3 + $0x190] sm:$0xff]
    %v238 = vld [vmem:[#allocation3 + $0x198] sm:$0xff]
    %v239 = vld [vmem:[#allocation3 + $0x1a0] sm:$0xff]
    %v240 = vld [vmem:[#allocation3 + $0x1a8] sm:$0xff]
    %v241 = vld [vmem:[#allocation3 + $0x1b0] sm:$0xff]
    %v242 = vld [vmem:[#allocation3 + $0x1b8] sm:$0xff]
    %v243 = vld [vmem:[#allocation3 + $0x1c0] sm:$0xff]
    %v244 = vld [vmem:[#allocation3 + $0x1c8] sm:$0xff]
    %v245 = vld [vmem:[#allocation3 + $0x1d0] sm:$0xff]
    %v246 = vld [vmem:[#allocation3 + $0x1d8] sm:$0xff]
    %v247 = vld [vmem:[#allocation3 + $0x1e0] sm:$0xff]
    %v248 = vld [vmem:[#allocation3 + $0x1e8] sm:$0xff]
    %v249 = vld [vmem:[#allocation3 + $0x1f0] sm:$0xff]
    %v250 = vld [vmem:[#allocation3 + $0x1f8] sm:$0xff]
    %v251 = vld [vmem:[#allocation6] sm:$0xf]
    %v252 = vld [vmem:[#allocation6 + $0x4] sm:$0xf]
    %v253 = vld [vmem:[#allocation6 + $0x8] sm:$0xf]
    %v254 = vld [vmem:[#allocation6 + $0xc] sm:$0xf]
    %v255 = vld [vmem:[#allocation6 + $0x10] sm:$0xf]
    %v256 = vld [vmem:[#allocation6 + $0x14] sm:$0xf]
    %v257 = vld [vmem:[#allocation6 + $0x18] sm:$0xf]
    %v258 = vld [vmem:[#allocation6 + $0x1c] sm:$0xf]
    %v259 = vld [vmem:[#allocation6 + $0x20] sm:$0xf]
    %v260 = vld [vmem:[#allocation6 + $0x24] sm:$0xf]
    %v261 = vld [vmem:[#allocation6 + $0x28] sm:$0xf]
    %v262 = vld [vmem:[#allocation6 + $0x2c] sm:$0xf]
    %v263 = vld [vmem:[#allocation6 + $0x30] sm:$0xf]
    %v264 = vld [vmem:[#allocation6 + $0x34] sm:$0xf]
    %v265 = vld [vmem:[#allocation6 + $0x38] sm:$0xf]
    %v266 = vld [vmem:[#allocation6 + $0x3c] sm:$0xf]
    %v267 = vld [vmem:[#allocation6 + $0x40] sm:$0xf]
    %v268 = vld [vmem:[#allocation6 + $0x44] sm:$0xf]
    %v269 = vld [vmem:[#allocation6 + $0x48] sm:$0xf]
    %v270 = vld [vmem:[#allocation6 + $0x4c] sm:$0xf]
    %v271 = vld [vmem:[#allocation6 + $0x50] sm:$0xf]
    %v272 = vld [vmem:[#allocation6 + $0x54] sm:$0xf]
    %v273 = vld [vmem:[#allocation6 + $0x58] sm:$0xf]
    %v274 = vld [vmem:[#allocation6 + $0x5c] sm:$0xf]
    %v275 = vld [vmem:[#allocation6 + $0x60] sm:$0xf]
    %v276 = vld [vmem:[#allocation6 + $0x64] sm:$0xf]
    %v277 = vld [vmem:[#allocation6 + $0x68] sm:$0xf]
    %v278 = vld [vmem:[#allocation6 + $0x6c] sm:$0xf]
    %v279 = vld [vmem:[#allocation6 + $0x70] sm:$0xf]
    %v280 = vld [vmem:[#allocation6 + $0x74] sm:$0xf]
    %v281 = vld [vmem:[#allocation6 + $0x78] sm:$0xf]
    %v282 = vld [vmem:[#allocation6 + $0x7c] sm:$0xf]
    %v347 = vunpack.c.l.b16 %v187
    %v348 = vunpack.c.h.b16 %v187
    %v349 = vunpack.c.l.b16 %v188
    %v350 = vunpack.c.h.b16 %v188
    %v351 = vunpack.c.l.b16 %v189
    %v352 = vunpack.c.h.b16 %v189
    %v353 = vunpack.c.l.b16 %v190
    %v354 = vunpack.c.h.b16 %v190
    %v355 = vunpack.c.l.b16 %v191
    %v356 = vunpack.c.h.b16 %v191
    %v357 = vunpack.c.l.b16 %v192
    %v358 = vunpack.c.h.b16 %v192
    %v359 = vunpack.c.l.b16 %v193
    %v360 = vunpack.c.h.b16 %v193
    %v361 = vunpack.c.l.b16 %v194
    %v362 = vunpack.c.h.b16 %v194
    %v363 = vunpack.c.l.b16 %v195
    %v364 = vunpack.c.h.b16 %v195
    %v365 = vunpack.c.l.b16 %v196
    %v366 = vunpack.c.h.b16 %v196
    %v367 = vunpack.c.l.b16 %v197
    %v368 = vunpack.c.h.b16 %v197
    %v369 = vunpack.c.l.b16 %v198
    %v370 = vunpack.c.h.b16 %v198
    %v371 = vunpack.c.l.b16 %v199
    %v372 = vunpack.c.h.b16 %v199
    %v373 = vunpack.c.l.b16 %v200
    %v374 = vunpack.c.h.b16 %v200
    %v375 = vunpack.c.l.b16 %v201
    %v376 = vunpack.c.h.b16 %v201
    %v377 = vunpack.c.l.b16 %v202
    %v378 = vunpack.c.h.b16 %v202
    %v379 = vunpack.c.l.b16 %v203
    %v380 = vunpack.c.h.b16 %v203
    %v381 = vunpack.c.l.b16 %v204
    %v382 = vunpack.c.h.b16 %v204
    %v383 = vunpack.c.l.b16 %v205
    %v384 = vunpack.c.h.b16 %v205
    %v385 = vunpack.c.l.b16 %v206
    %v386 = vunpack.c.h.b16 %v206
    %v387 = vunpack.c.l.b16 %v207
    %v388 = vunpack.c.h.b16 %v207
    %v389 = vunpack.c.l.b16 %v208
    %v390 = vunpack.c.h.b16 %v208
    %v391 = vunpack.c.l.b16 %v209
    %v392 = vunpack.c.h.b16 %v209
    %v393 = vunpack.c.l.b16 %v210
    %v394 = vunpack.c.h.b16 %v210
    %v395 = vunpack.c.l.b16 %v211
    %v396 = vunpack.c.h.b16 %v211
    %v397 = vunpack.c.l.b16 %v212
    %v398 = vunpack.c.h.b16 %v212
    %v399 = vunpack.c.l.b16 %v213
    %v400 = vunpack.c.h.b16 %v213
    %v401 = vunpack.c.l.b16 %v214
    %v402 = vunpack.c.h.b16 %v214
    %v403 = vunpack.c.l.b16 %v215
    %v404 = vunpack.c.h.b16 %v215
    %v405 = vunpack.c.l.b16 %v216
    %v406 = vunpack.c.h.b16 %v216
    %v407 = vunpack.c.l.b16 %v217
    %v408 = vunpack.c.h.b16 %v217
    %v409 = vunpack.c.l.b16 %v218
    %v410 = vunpack.c.h.b16 %v218
    %v411 = vunpack.c.l.b16 %v219
    %v412 = vunpack.c.h.b16 %v219
    %v413 = vunpack.c.l.b16 %v220
    %v414 = vunpack.c.h.b16 %v220
    %v415 = vunpack.c.l.b16 %v221
    %v416 = vunpack.c.h.b16 %v221
    %v417 = vunpack.c.l.b16 %v222
    %v418 = vunpack.c.h.b16 %v222
    %v419 = vunpack.c.l.b16 %v223
    %v420 = vunpack.c.h.b16 %v223
    %v421 = vunpack.c.l.b16 %v224
    %v422 = vunpack.c.h.b16 %v224
    %v423 = vunpack.c.l.b16 %v225
    %v424 = vunpack.c.h.b16 %v225
    %v425 = vunpack.c.l.b16 %v226
    %v426 = vunpack.c.h.b16 %v226
    %v427 = vunpack.c.l.b16 %v227
    %v428 = vunpack.c.h.b16 %v227
    %v429 = vunpack.c.l.b16 %v228
    %v430 = vunpack.c.h.b16 %v228
    %v431 = vunpack.c.l.b16 %v229
    %v432 = vunpack.c.h.b16 %v229
    %v433 = vunpack.c.l.b16 %v230
    %v434 = vunpack.c.h.b16 %v230
    %v435 = vunpack.c.l.b16 %v231
    %v436 = vunpack.c.h.b16 %v231
    %v437 = vunpack.c.l.b16 %v232
    %v438 = vunpack.c.h.b16 %v232
    %v439 = vunpack.c.l.b16 %v233
    %v440 = vunpack.c.h.b16 %v233
    %v441 = vunpack.c.l.b16 %v234
    %v442 = vunpack.c.h.b16 %v234
    %v443 = vunpack.c.l.b16 %v235
    %v444 = vunpack.c.h.b16 %v235
    %v445 = vunpack.c.l.b16 %v236
    %v446 = vunpack.c.h.b16 %v236
    %v447 = vunpack.c.l.b16 %v237
    %v448 = vunpack.c.h.b16 %v237
    %v449 = vunpack.c.l.b16 %v238
    %v450 = vunpack.c.h.b16 %v238
    %v451 = vunpack.c.l.b16 %v239
    %v452 = vunpack.c.h.b16 %v239
    %v453 = vunpack.c.l.b16 %v240
    %v454 = vunpack.c.h.b16 %v240
    %v455 = vunpack.c.l.b16 %v241
    %v456 = vunpack.c.h.b16 %v241
    %v457 = vunpack.c.l.b16 %v242
    %v458 = vunpack.c.h.b16 %v242
    %v459 = vunpack.c.l.b16 %v243
    %v460 = vunpack.c.h.b16 %v243
    %v461 = vunpack.c.l.b16 %v244
    %v462 = vunpack.c.h.b16 %v244
    %v463 = vunpack.c.l.b16 %v245
    %v464 = vunpack.c.h.b16 %v245
    %v465 = vunpack.c.l.b16 %v246
    %v466 = vunpack.c.h.b16 %v246
    %v467 = vunpack.c.l.b16 %v247
    %v468 = vunpack.c.h.b16 %v247
    %v469 = vunpack.c.l.b16 %v248
    %v470 = vunpack.c.h.b16 %v248
    %v471 = vunpack.c.l.b16 %v249
    %v472 = vunpack.c.h.b16 %v249
    %v473 = vunpack.c.l.b16 %v250
    %v474 = vunpack.c.h.b16 %v250
    %v475 = vpack.c.b16 %v349, %v347
    %v476 = vpack.c.b16 %v350, %v348
    %v477 = vpack.c.b16 %v353, %v351
    %v478 = vpack.c.b16 %v354, %v352
    %v479 = vpack.c.b16 %v357, %v355
    %v480 = vpack.c.b16 %v358, %v356
    %v481 = vpack.c.b16 %v361, %v359
    %v482 = vpack.c.b16 %v362, %v360
    %v483 = vpack.c.b16 %v365, %v363
    %v484 = vpack.c.b16 %v366, %v364
    %v485 = vpack.c.b16 %v369, %v367
    %v486 = vpack.c.b16 %v370, %v368
    %v487 = vpack.c.b16 %v373, %v371
    %v488 = vpack.c.b16 %v374, %v372
    %v489 = vpack.c.b16 %v377, %v375
    %v490 = vpack.c.b16 %v378, %v376
    %v491 = vpack.c.b16 %v381, %v379
    %v492 = vpack.c.b16 %v382, %v380
    %v493 = vpack.c.b16 %v385, %v383
    %v494 = vpack.c.b16 %v386, %v384
    %v495 = vpack.c.b16 %v389, %v387
    %v496 = vpack.c.b16 %v390, %v388
    %v497 = vpack.c.b16 %v393, %v391
    %v498 = vpack.c.b16 %v394, %v392
    %v499 = vpack.c.b16 %v397, %v395
    %v500 = vpack.c.b16 %v398, %v396
    %v501 = vpack.c.b16 %v401, %v399
    %v502 = vpack.c.b16 %v402, %v400
    %v503 = vpack.c.b16 %v405, %v403
    %v504 = vpack.c.b16 %v406, %v404
    %v505 = vpack.c.b16 %v409, %v407
    %v506 = vpack.c.b16 %v410, %v408
    %v507 = vpack.c.b16 %v413, %v411
    %v508 = vpack.c.b16 %v414, %v412
    %v509 = vpack.c.b16 %v417, %v415
    %v510 = vpack.c.b16 %v418, %v416
    %v511 = vpack.c.b16 %v421, %v419
    %v512 = vpack.c.b16 %v422, %v420
    %v513 = vpack.c.b16 %v425, %v423
    %v514 = vpack.c.b16 %v426, %v424
    %v515 = vpack.c.b16 %v429, %v427
    %v516 = vpack.c.b16 %v430, %v428
    %v517 = vpack.c.b16 %v433, %v431
    %v518 = vpack.c.b16 %v434, %v432
    %v519 = vpack.c.b16 %v437, %v435
    %v520 = vpack.c.b16 %v438, %v436
    %v521 = vpack.c.b16 %v441, %v439
    %v522 = vpack.c.b16 %v442, %v440
    %v523 = vpack.c.b16 %v445, %v443
    %v524 = vpack.c.b16 %v446, %v444
    %v525 = vpack.c.b16 %v449, %v447
    %v526 = vpack.c.b16 %v450, %v448
    %v527 = vpack.c.b16 %v453, %v451
    %v528 = vpack.c.b16 %v454, %v452
    %v529 = vpack.c.b16 %v457, %v455
    %v530 = vpack.c.b16 %v458, %v456
    %v531 = vpack.c.b16 %v461, %v459
    %v532 = vpack.c.b16 %v462, %v460
    %v533 = vpack.c.b16 %v465, %v463
    %v534 = vpack.c.b16 %v466, %v464
    %v535 = vpack.c.b16 %v469, %v467
    %v536 = vpack.c.b16 %v470, %v468
    %v537 = vpack.c.b16 %v473, %v471
    %v538 = vpack.c.b16 %v474, %v472
    %v635 = vunpack.c.l.b16 %v251
    %v636 = vunpack.c.l.b16 %v252
    %v637 = vunpack.c.l.b16 %v253
    %v638 = vunpack.c.l.b16 %v254
    %v639 = vunpack.c.l.b16 %v255
    %v640 = vunpack.c.l.b16 %v256
    %v641 = vunpack.c.l.b16 %v257
    %v642 = vunpack.c.l.b16 %v258
    %v643 = vunpack.c.l.b16 %v259
    %v644 = vunpack.c.l.b16 %v260
    %v645 = vunpack.c.l.b16 %v261
    %v646 = vunpack.c.l.b16 %v262
    %v647 = vunpack.c.l.b16 %v263
    %v648 = vunpack.c.l.b16 %v264
    %v649 = vunpack.c.l.b16 %v265
    %v650 = vunpack.c.l.b16 %v266
    %v651 = vunpack.c.l.b16 %v267
    %v652 = vunpack.c.l.b16 %v268
    %v653 = vunpack.c.l.b16 %v269
    %v654 = vunpack.c.l.b16 %v270
    %v655 = vunpack.c.l.b16 %v271
    %v656 = vunpack.c.l.b16 %v272
    %v657 = vunpack.c.l.b16 %v273
    %v658 = vunpack.c.l.b16 %v274
    %v659 = vunpack.c.l.b16 %v275
    %v660 = vunpack.c.l.b16 %v276
    %v661 = vunpack.c.l.b16 %v277
    %v662 = vunpack.c.l.b16 %v278
    %v663 = vunpack.c.l.b16 %v279
    %v664 = vunpack.c.l.b16 %v280
    %v665 = vunpack.c.l.b16 %v281
    %v666 = vunpack.c.l.b16 %v282
    %v667 = vpack.c.b16 %v636, %v635
    %v668 = vpack.c.b16 %v638, %v637
    %v669 = vpack.c.b16 %v640, %v639
    %v670 = vpack.c.b16 %v642, %v641
    %v671 = vpack.c.b16 %v644, %v643
    %v672 = vpack.c.b16 %v646, %v645
    %v673 = vpack.c.b16 %v648, %v647
    %v674 = vpack.c.b16 %v650, %v649
    %v675 = vpack.c.b16 %v652, %v651
    %v676 = vpack.c.b16 %v654, %v653
    %v677 = vpack.c.b16 %v656, %v655
    %v678 = vpack.c.b16 %v658, %v657
    %v679 = vpack.c.b16 %v660, %v659
    %v680 = vpack.c.b16 %v662, %v661
    %v681 = vpack.c.b16 %v664, %v663
    %v682 = vpack.c.b16 %v666, %v665
    %699 = vmatprep.subr.bf16.mxu0 0
    %700 = vmatpush1.bf16.msra.mxu0 %v667
    %701 = vmatprep.subr.bf16.mxu0 0
    %702 = vmatpush1.bf16.msra.mxu0 %v668
    %703 = vmatprep.subr.bf16.mxu0 0
    %704 = vmatpush1.bf16.msra.mxu0 %v669
    %705 = vmatprep.subr.bf16.mxu0 0
    %706 = vmatpush1.bf16.msra.mxu0 %v670
    %707 = vmatprep.subr.bf16.mxu0 0
    %708 = vmatpush1.bf16.msra.mxu0 %v671
    %709 = vmatprep.subr.bf16.mxu0 0
    %710 = vmatpush1.bf16.msra.mxu0 %v672
    %711 = vmatprep.subr.bf16.mxu0 0
    %712 = vmatpush1.bf16.msra.mxu0 %v673
    %713 = vmatprep.subr.bf16.mxu0 0
    %714 = vmatpush1.bf16.msra.mxu0 %v674
    %715 = vmatprep.subr.bf16.mxu0 0
    %716 = vmatpush1.bf16.msra.mxu0 %v675
    %717 = vmatprep.subr.bf16.mxu0 0
    %718 = vmatpush1.bf16.msra.mxu0 %v676
    %719 = vmatprep.subr.bf16.mxu0 0
    %720 = vmatpush1.bf16.msra.mxu0 %v677
    %721 = vmatprep.subr.bf16.mxu0 0
    %722 = vmatpush1.bf16.msra.mxu0 %v678
    %723 = vmatprep.subr.bf16.mxu0 0
    %724 = vmatpush1.bf16.msra.mxu0 %v679
    %725 = vmatprep.subr.bf16.mxu0 0
    %726 = vmatpush1.bf16.msra.mxu0 %v680
    %727 = vmatprep.subr.bf16.mxu0 0
    %728 = vmatpush1.bf16.msra.mxu0 %v681
    %729 = vmatprep.subr.bf16.mxu0 0
    %730 = vmatpush1.bf16.msra.mxu0 %v682
    %731 = vmatprep.mubr.bf16.mxu0 %v476
    %732 = vmatmul.mubr.bf16.gmra.mrb[0].mxu0 %v475
    %v733 = vpop.f32.mrb[0].mxu0
    %v734 = vadd.f32 0.0, %v733
    %v735 = vpop.f32.mrb[0].mxu0
    %v736 = vpop.f32.mrb[0].mxu0
    %v737 = vadd.f32 0.0, %v736
    %v738 = vpop.f32.mrb[0].mxu0
    %739 = vmatprep.mubr.bf16.mxu0 %v478
    %740 = vmatmul.mubr.bf16.gmra.mrb[0].mxu0 %v477
    %v741 = vpop.f32.mrb[0].mxu0
    %v742 = vadd.f32 0.0, %v741
    %v743 = vpop.f32.mrb[0].mxu0
    %v744 = vpop.f32.mrb[0].mxu0
    %v745 = vadd.f32 0.0, %v744
    %v746 = vpop.f32.mrb[0].mxu0
    %747 = vmatprep.mubr.bf16.mxu0 %v480
    %748 = vmatmul.mubr.bf16.gmra.mrb[0].mxu0 %v479
    %v749 = vpop.f32.mrb[0].mxu0
    %v750 = vadd.f32 0.0, %v749
    %v751 = vpop.f32.mrb[0].mxu0
    %v752 = vpop.f32.mrb[0].mxu0
    %v753 = vadd.f32 0.0, %v752
    %v754 = vpop.f32.mrb[0].mxu0
    %755 = vmatprep.mubr.bf16.mxu0 %v482
    %756 = vmatmul.mubr.bf16.gmra.mrb[0].mxu0 %v481
    %v757 = vpop.f32.mrb[0].mxu0
    %v758 = vadd.f32 0.0, %v757
    %v759 = vpop.f32.mrb[0].mxu0
    %v760 = vpop.f32.mrb[0].mxu0
    %v761 = vadd.f32 0.0, %v760
    %v762 = vpop.f32.mrb[0].mxu0
    %763 = vmatprep.mubr.bf16.mxu0 %v484
    %764 = vmatmul.mubr.bf16.gmra.mrb[0].mxu0 %v483
    %v765 = vpop.f32.mrb[0].mxu0
    %v766 = vadd.f32 0.0, %v765
    %v767 = vpop.f32.mrb[0].mxu0
    %v768 = vpop.f32.mrb[0].mxu0
    %v769 = vadd.f32 0.0, %v768
    %v770 = vpop.f32.mrb[0].mxu0
    %771 = vmatprep.mubr.bf16.mxu0 %v486
    %772 = vmatmul.mubr.bf16.gmra.mrb[0].mxu0 %v485
    %v773 = vpop.f32.mrb[0].mxu0
    %v774 = vadd.f32 0.0, %v773
    %v775 = vpop.f32.mrb[0].mxu0
    %v776 = vpop.f32.mrb[0].mxu0
    %v777 = vadd.f32 0.0, %v776
    %v778 = vpop.f32.mrb[0].mxu0
    %779 = vmatprep.mubr.bf16.mxu0 %v488
    %780 = vmatmul.mubr.bf16.gmra.mrb[0].mxu0 %v487
    %v781 = vpop.f32.mrb[0].mxu0
    %v782 = vadd.f32 0.0, %v781
    %v783 = vpop.f32.mrb[0].mxu0
    %v784 = vpop.f32.mrb[0].mxu0
    %v785 = vadd.f32 0.0, %v784
    %v786 = vpop.f32.mrb[0].mxu0
    %787 = vmatprep.mubr.bf16.mxu0 %v490
    %788 = vmatmul.mubr.bf16.gmra.mrb[0].mxu0 %v489
    %v789 = vpop.f32.mrb[0].mxu0
    %v790 = vadd.f32 0.0, %v789
    %v791 = vpop.f32.mrb[0].mxu0
    %v792 = vpop.f32.mrb[0].mxu0
    %v793 = vadd.f32 0.0, %v792
    %v794 = vpop.f32.mrb[0].mxu0
    %795 = vmatprep.mubr.bf16.mxu0 %v492
    %796 = vmatmul.mubr.bf16.gmra.mrb[0].mxu0 %v491
    %v797 = vpop.f32.mrb[0].mxu0
    %v798 = vadd.f32 0.0, %v797
    %v799 = vpop.f32.mrb[0].mxu0
    %v800 = vpop.f32.mrb[0].mxu0
    %v801 = vadd.f32 0.0, %v800
    %v802 = vpop.f32.mrb[0].mxu0
    %803 = vmatprep.mubr.bf16.mxu0 %v494
    %804 = vmatmul.mubr.bf16.gmra.mrb[0].mxu0 %v493
    %v805 = vpop.f32.mrb[0].mxu0
    %v806 = vadd.f32 0.0, %v805
    %v807 = vpop.f32.mrb[0].mxu0
    %v808 = vpop.f32.mrb[0].mxu0
    %v809 = vadd.f32 0.0, %v808
    %v810 = vpop.f32.mrb[0].mxu0
    %811 = vmatprep.mubr.bf16.mxu0 %v496
    %812 = vmatmul.mubr.bf16.gmra.mrb[0].mxu0 %v495
    %v813 = vpop.f32.mrb[0].mxu0
    %v814 = vadd.f32 0.0, %v813
    %v815 = vpop.f32.mrb[0].mxu0
    %v816 = vpop.f32.mrb[0].mxu0
    %v817 = vadd.f32 0.0, %v816
    %v818 = vpop.f32.mrb[0].mxu0
    %819 = vmatprep.mubr.bf16.mxu0 %v498
    %820 = vmatmul.mubr.bf16.gmra.mrb[0].mxu0 %v497
    %v821 = vpop.f32.mrb[0].mxu0
    %v822 = vadd.f32 0.0, %v821
    %v823 = vpop.f32.mrb[0].mxu0
    %v824 = vpop.f32.mrb[0].mxu0
    %v825 = vadd.f32 0.0, %v824
    %v826 = vpop.f32.mrb[0].mxu0
    %827 = vmatprep.mubr.bf16.mxu0 %v500
    %828 = vmatmul.mubr.bf16.gmra.mrb[0].mxu0 %v499
    %v829 = vpop.f32.mrb[0].mxu0
    %v830 = vadd.f32 0.0, %v829
    %v831 = vpop.f32.mrb[0].mxu0
    %v832 = vpop.f32.mrb[0].mxu0
    %v833 = vadd.f32 0.0, %v832
    %v834 = vpop.f32.mrb[0].mxu0
    %835 = vmatprep.mubr.bf16.mxu0 %v502
    %836 = vmatmul.mubr.bf16.gmra.mrb[0].mxu0 %v501
    %v837 = vpop.f32.mrb[0].mxu0
    %v838 = vadd.f32 0.0, %v837
    %v839 = vpop.f32.mrb[0].mxu0
    %v840 = vpop.f32.mrb[0].mxu0
    %v841 = vadd.f32 0.0, %v840
    %v842 = vpop.f32.mrb[0].mxu0
    %843 = vmatprep.mubr.bf16.mxu0 %v504
    %844 = vmatmul.mubr.bf16.gmra.mrb[0].mxu0 %v503
    %v845 = vpop.f32.mrb[0].mxu0
    %v846 = vadd.f32 0.0, %v845
    %v847 = vpop.f32.mrb[0].mxu0
    %v848 = vpop.f32.mrb[0].mxu0
    %v849 = vadd.f32 0.0, %v848
    %v850 = vpop.f32.mrb[0].mxu0
    %851 = vmatprep.mubr.bf16.mxu0 %v506
    %852 = vmatmul.mubr.bf16.gmra.mrb[0].mxu0 %v505
    %v853 = vpop.f32.mrb[0].mxu0
    %v854 = vadd.f32 0.0, %v853
    %v855 = vpop.f32.mrb[0].mxu0
    %v856 = vpop.f32.mrb[0].mxu0
    %v857 = vadd.f32 0.0, %v856
    %v858 = vpop.f32.mrb[0].mxu0
    %859 = vmatprep.mubr.bf16.mxu0 %v508
    %860 = vmatmul.mubr.bf16.gmra.mrb[0].mxu0 %v507
    %v861 = vpop.f32.mrb[0].mxu0
    %v862 = vadd.f32 0.0, %v861
    %v863 = vpop.f32.mrb[0].mxu0
    %v864 = vpop.f32.mrb[0].mxu0
    %v865 = vadd.f32 0.0, %v864
    %v866 = vpop.f32.mrb[0].mxu0
    %867 = vmatprep.mubr.bf16.mxu0 %v510
    %868 = vmatmul.mubr.bf16.gmra.mrb[0].mxu0 %v509
    %v869 = vpop.f32.mrb[0].mxu0
    %v870 = vadd.f32 0.0, %v869
    %v871 = vpop.f32.mrb[0].mxu0
    %v872 = vpop.f32.mrb[0].mxu0
    %v873 = vadd.f32 0.0, %v872
    %v874 = vpop.f32.mrb[0].mxu0
    %875 = vmatprep.mubr.bf16.mxu0 %v512
    %876 = vmatmul.mubr.bf16.gmra.mrb[0].mxu0 %v511
    %v877 = vpop.f32.mrb[0].mxu0
    %v878 = vadd.f32 0.0, %v877
    %v879 = vpop.f32.mrb[0].mxu0
    %v880 = vpop.f32.mrb[0].mxu0
    %v881 = vadd.f32 0.0, %v880
    %v882 = vpop.f32.mrb[0].mxu0
    %883 = vmatprep.mubr.bf16.mxu0 %v514
    %884 = vmatmul.mubr.bf16.gmra.mrb[0].mxu0 %v513
    %v885 = vpop.f32.mrb[0].mxu0
    %v886 = vadd.f32 0.0, %v885
    %v887 = vpop.f32.mrb[0].mxu0
    %v888 = vpop.f32.mrb[0].mxu0
    %v889 = vadd.f32 0.0, %v888
    %v890 = vpop.f32.mrb[0].mxu0
    %891 = vmatprep.mubr.bf16.mxu0 %v516
    %892 = vmatmul.mubr.bf16.gmra.mrb[0].mxu0 %v515
    %v893 = vpop.f32.mrb[0].mxu0
    %v894 = vadd.f32 0.0, %v893
    %v895 = vpop.f32.mrb[0].mxu0
    %v896 = vpop.f32.mrb[0].mxu0
    %v897 = vadd.f32 0.0, %v896
    %v898 = vpop.f32.mrb[0].mxu0
    %899 = vmatprep.mubr.bf16.mxu0 %v518
    %900 = vmatmul.mubr.bf16.gmra.mrb[0].mxu0 %v517
    %v901 = vpop.f32.mrb[0].mxu0
    %v902 = vadd.f32 0.0, %v901
    %v903 = vpop.f32.mrb[0].mxu0
    %v904 = vpop.f32.mrb[0].mxu0
    %v905 = vadd.f32 0.0, %v904
    %v906 = vpop.f32.mrb[0].mxu0
    %907 = vmatprep.mubr.bf16.mxu0 %v520
    %908 = vmatmul.mubr.bf16.gmra.mrb[0].mxu0 %v519
    %v909 = vpop.f32.mrb[0].mxu0
    %v910 = vadd.f32 0.0, %v909
    %v911 = vpop.f32.mrb[0].mxu0
    %v912 = vpop.f32.mrb[0].mxu0
    %v913 = vadd.f32 0.0, %v912
    %v914 = vpop.f32.mrb[0].mxu0
    %915 = vmatprep.mubr.bf16.mxu0 %v522
    %916 = vmatmul.mubr.bf16.gmra.mrb[0].mxu0 %v521
    %v917 = vpop.f32.mrb[0].mxu0
    %v918 = vadd.f32 0.0, %v917
    %v919 = vpop.f32.mrb[0].mxu0
    %v920 = vpop.f32.mrb[0].mxu0
    %v921 = vadd.f32 0.0, %v920
    %v922 = vpop.f32.mrb[0].mxu0
    %923 = vmatprep.mubr.bf16.mxu0 %v524
    %924 = vmatmul.mubr.bf16.gmra.mrb[0].mxu0 %v523
    %v925 = vpop.f32.mrb[0].mxu0
    %v926 = vadd.f32 0.0, %v925
    %v927 = vpop.f32.mrb[0].mxu0
    %v928 = vpop.f32.mrb[0].mxu0
    %v929 = vadd.f32 0.0, %v928
    %v930 = vpop.f32.mrb[0].mxu0
    %931 = vmatprep.mubr.bf16.mxu0 %v526
    %932 = vmatmul.mubr.bf16.gmra.mrb[0].mxu0 %v525
    %v933 = vpop.f32.mrb[0].mxu0
    %v934 = vadd.f32 0.0, %v933
    %v935 = vpop.f32.mrb[0].mxu0
    %v936 = vpop.f32.mrb[0].mxu0
    %v937 = vadd.f32 0.0, %v936
    %v938 = vpop.f32.mrb[0].mxu0
    %939 = vmatprep.mubr.bf16.mxu0 %v528
    %940 = vmatmul.mubr.bf16.gmra.mrb[0].mxu0 %v527
    %v941 = vpop.f32.mrb[0].mxu0
    %v942 = vadd.f32 0.0, %v941
    %v943 = vpop.f32.mrb[0].mxu0
    %v944 = vpop.f32.mrb[0].mxu0
    %v945 = vadd.f32 0.0, %v944
    %v946 = vpop.f32.mrb[0].mxu0
    %947 = vmatprep.mubr.bf16.mxu0 %v530
    %948 = vmatmul.mubr.bf16.gmra.mrb[0].mxu0 %v529
    %v949 = vpop.f32.mrb[0].mxu0
    %v950 = vadd.f32 0.0, %v949
    %v951 = vpop.f32.mrb[0].mxu0
    %v952 = vpop.f32.mrb[0].mxu0
    %v953 = vadd.f32 0.0, %v952
    %v954 = vpop.f32.mrb[0].mxu0
    %955 = vmatprep.mubr.bf16.mxu0 %v532
    %956 = vmatmul.mubr.bf16.gmra.mrb[0].mxu0 %v531
    %v957 = vpop.f32.mrb[0].mxu0
    %v958 = vadd.f32 0.0, %v957
    %v959 = vpop.f32.mrb[0].mxu0
    %v960 = vpop.f32.mrb[0].mxu0
    %v961 = vadd.f32 0.0, %v960
    %v962 = vpop.f32.mrb[0].mxu0
    %963 = vmatprep.mubr.bf16.mxu0 %v534
    %964 = vmatmul.mubr.bf16.gmra.mrb[0].mxu0 %v533
    %v965 = vpop.f32.mrb[0].mxu0
    %v966 = vadd.f32 0.0, %v965
    %v967 = vpop.f32.mrb[0].mxu0
    %v968 = vpop.f32.mrb[0].mxu0
    %v969 = vadd.f32 0.0, %v968
    %v970 = vpop.f32.mrb[0].mxu0
    %971 = vmatprep.mubr.bf16.mxu0 %v536
    %972 = vmatmul.mubr.bf16.gmra.mrb[0].mxu0 %v535
    %v973 = vpop.f32.mrb[0].mxu0
    %v974 = vadd.f32 0.0, %v973
    %v975 = vpop.f32.mrb[0].mxu0
    %v976 = vpop.f32.mrb[0].mxu0
    %v977 = vadd.f32 0.0, %v976
    %v978 = vpop.f32.mrb[0].mxu0
    %979 = vmatprep.mubr.bf16.mxu0 %v538
    %980 = vmatmul.mubr.bf16.gmra.mrb[0].mxu0 %v537
    %v981 = vpop.f32.mrb[0].mxu0
    %v982 = vadd.f32 0.0, %v981
    %v983 = vpop.f32.mrb[0].mxu0
    %v984 = vpop.f32.mrb[0].mxu0
    %v985 = vadd.f32 0.0, %v984
    %v986 = vpop.f32.mrb[0].mxu0
    %987 = vdwg.mxu0
    %v988 = vadd.f32 %v123, %v734
    %v989 = vadd.f32 %v124, %v737
    %v990 = vadd.f32 %v125, %v742
    %v991 = vadd.f32 %v126, %v745
    %v992 = vadd.f32 %v127, %v750
    %v993 = vadd.f32 %v128, %v753
    %v994 = vadd.f32 %v129, %v758
    %v995 = vadd.f32 %v130, %v761
    %v996 = vadd.f32 %v131, %v766
    %v997 = vadd.f32 %v132, %v769
    %v998 = vadd.f32 %v133, %v774
    %v999 = vadd.f32 %v134, %v777
    %v1000 = vadd.f32 %v135, %v782
    %v1001 = vadd.f32 %v136, %v785
    %v1002 = vadd.f32 %v137, %v790
    %v1003 = vadd.f32 %v138, %v793
    %v1004 = vadd.f32 %v139, %v798
    %v1005 = vadd.f32 %v140, %v801
    %v1006 = vadd.f32 %v141, %v806
    %v1007 = vadd.f32 %v142, %v809
    %v1008 = vadd.f32 %v143, %v814
    %v1009 = vadd.f32 %v144, %v817
    %v1010 = vadd.f32 %v145, %v822
    %v1011 = vadd.f32 %v146, %v825
    %v1012 = vadd.f32 %v147, %v830
    %v1013 = vadd.f32 %v148, %v833
    %v1014 = vadd.f32 %v149, %v838
    %v1015 = vadd.f32 %v150, %v841
    %v1016 = vadd.f32 %v151, %v846
    %v1017 = vadd.f32 %v152, %v849
    %v1018 = vadd.f32 %v153, %v854
    %v1019 = vadd.f32 %v154, %v857
    %v1020 = vadd.f32 %v155, %v862
    %v1021 = vadd.f32 %v156, %v865
    %v1022 = vadd.f32 %v157, %v870
    %v1023 = vadd.f32 %v158, %v873
    %v1024 = vadd.f32 %v159, %v878
    %v1025 = vadd.f32 %v160, %v881
    %v1026 = vadd.f32 %v161, %v886
    %v1027 = vadd.f32 %v162, %v889
    %v1028 = vadd.f32 %v163, %v894
    %v1029 = vadd.f32 %v164, %v897
    %v1030 = vadd.f32 %v165, %v902
    %v1031 = vadd.f32 %v166, %v905
    %v1032 = vadd.f32 %v167, %v910
    %v1033 = vadd.f32 %v168, %v913
    %v1034 = vadd.f32 %v169, %v918
    %v1035 = vadd.f32 %v170, %v921
    %v1036 = vadd.f32 %v171, %v926
    %v1037 = vadd.f32 %v172, %v929
    %v1038 = vadd.f32 %v173, %v934
    %v1039 = vadd.f32 %v174, %v937
    %v1040 = vadd.f32 %v175, %v942
    %v1041 = vadd.f32 %v176, %v945
    %v1042 = vadd.f32 %v177, %v950
    %v1043 = vadd.f32 %v178, %v953
    %v1044 = vadd.f32 %v179, %v958
    %v1045 = vadd.f32 %v180, %v961
    %v1046 = vadd.f32 %v181, %v966
    %v1047 = vadd.f32 %v182, %v969
    %v1048 = vadd.f32 %v183, %v974
    %v1049 = vadd.f32 %v184, %v977
    %v1050 = vadd.f32 %v185, %v982
    %v1051 = vadd.f32 %v186, %v985
    %1052 = vst [vmem:[#allocation2] sm:$0xff] %v988
    %1053 = vst [vmem:[#allocation2 + $0x8] sm:$0xff] %v989
    %1054 = vst [vmem:[#allocation2 + $0x10] sm:$0xff] %v990
    %1055 = vst [vmem:[#allocation2 + $0x18] sm:$0xff] %v991
    %1056 = vst [vmem:[#allocation2 + $0x20] sm:$0xff] %v992
    %1057 = vst [vmem:[#allocation2 + $0x28] sm:$0xff] %v993
    %1058 = vst [vmem:[#allocation2 + $0x30] sm:$0xff] %v994
    %1059 = vst [vmem:[#allocation2 + $0x38] sm:$0xff] %v995
    %1060 = vst [vmem:[#allocation2 + $0x40] sm:$0xff] %v996
    %1061 = vst [vmem:[#allocation2 + $0x48] sm:$0xff] %v997
    %1062 = vst [vmem:[#allocation2 + $0x50] sm:$0xff] %v998
    %1063 = vst [vmem:[#allocation2 + $0x58] sm:$0xff] %v999
    %1064 = vst [vmem:[#allocation2 + $0x60] sm:$0xff] %v1000
    %1065 = vst [vmem:[#allocation2 + $0x68] sm:$0xff] %v1001
    %1066 = vst [vmem:[#allocation2 + $0x70] sm:$0xff] %v1002
    %1067 = vst [vmem:[#allocation2 + $0x78] sm:$0xff] %v1003
    %1068 = vst [vmem:[#allocation2 + $0x80] sm:$0xff] %v1004
    %1069 = vst [vmem:[#allocation2 + $0x88] sm:$0xff] %v1005
    %1070 = vst [vmem:[#allocation2 + $0x90] sm:$0xff] %v1006
    %1071 = vst [vmem:[#allocation2 + $0x98] sm:$0xff] %v1007
    %1072 = vst [vmem:[#allocation2 + $0xa0] sm:$0xff] %v1008
    %1073 = vst [vmem:[#allocation2 + $0xa8] sm:$0xff] %v1009
    %1074 = vst [vmem:[#allocation2 + $0xb0] sm:$0xff] %v1010
    %1075 = vst [vmem:[#allocation2 + $0xb8] sm:$0xff] %v1011
    %1076 = vst [vmem:[#allocation2 + $0xc0] sm:$0xff] %v1012
    %1077 = vst [vmem:[#allocation2 + $0xc8] sm:$0xff] %v1013
    %1078 = vst [vmem:[#allocation2 + $0xd0] sm:$0xff] %v1014
    %1079 = vst [vmem:[#allocation2 + $0xd8] sm:$0xff] %v1015
    %1080 = vst [vmem:[#allocation2 + $0xe0] sm:$0xff] %v1016
    %1081 = vst [vmem:[#allocation2 + $0xe8] sm:$0xff] %v1017
    %1082 = vst [vmem:[#allocation2 + $0xf0] sm:$0xff] %v1018
    %1083 = vst [vmem:[#allocation2 + $0xf8] sm:$0xff] %v1019
    %1084 = vst [vmem:[#allocation2 + $0x100] sm:$0xff] %v1020
    %1085 = vst [vmem:[#allocation2 + $0x108] sm:$0xff] %v1021
    %1086 = vst [vmem:[#allocation2 + $0x110] sm:$0xff] %v1022
    %1087 = vst [vmem:[#allocation2 + $0x118] sm:$0xff] %v1023
    %1088 = vst [vmem:[#allocation2 + $0x120] sm:$0xff] %v1024
    %1089 = vst [vmem:[#allocation2 + $0x128] sm:$0xff] %v1025
    %1090 = vst [vmem:[#allocation2 + $0x130] sm:$0xff] %v1026
    %1091 = vst [vmem:[#allocation2 + $0x138] sm:$0xff] %v1027
    %1092 = vst [vmem:[#allocation2 + $0x140] sm:$0xff] %v1028
    %1093 = vst [vmem:[#allocation2 + $0x148] sm:$0xff] %v1029
    %1094 = vst [vmem:[#allocation2 + $0x150] sm:$0xff] %v1030
    %1095 = vst [vmem:[#allocation2 + $0x158] sm:$0xff] %v1031
    %1096 = vst [vmem:[#allocation2 + $0x160] sm:$0xff] %v1032
    %1097 = vst [vmem:[#allocation2 + $0x168] sm:$0xff] %v1033
    %1098 = vst [vmem:[#allocation2 + $0x170] sm:$0xff] %v1034
    %1099 = vst [vmem:[#allocation2 + $0x178] sm:$0xff] %v1035
    %1100 = vst [vmem:[#allocation2 + $0x180] sm:$0xff] %v1036
    %1101 = vst [vmem:[#allocation2 + $0x188] sm:$0xff] %v1037
    %1102 = vst [vmem:[#allocation2 + $0x190] sm:$0xff] %v1038
    %1103 = vst [vmem:[#allocation2 + $0x198] sm:$0xff] %v1039
    %1104 = vst [vmem:[#allocation2 + $0x1a0] sm:$0xff] %v1040
    %1105 = vst [vmem:[#allocation2 + $0x1a8] sm:$0xff] %v1041
    %1106 = vst [vmem:[#allocation2 + $0x1b0] sm:$0xff] %v1042
    %1107 = vst [vmem:[#allocation2 + $0x1b8] sm:$0xff] %v1043
    %1108 = vst [vmem:[#allocation2 + $0x1c0] sm:$0xff] %v1044
    %1109 = vst [vmem:[#allocation2 + $0x1c8] sm:$0xff] %v1045
    %1110 = vst [vmem:[#allocation2 + $0x1d0] sm:$0xff] %v1046
    %1111 = vst [vmem:[#allocation2 + $0x1d8] sm:$0xff] %v1047
    %1112 = vst [vmem:[#allocation2 + $0x1e0] sm:$0xff] %v1048
    %1113 = vst [vmem:[#allocation2 + $0x1e8] sm:$0xff] %v1049
    %1114 = vst [vmem:[#allocation2 + $0x1f0] sm:$0xff] %v1050
    %1115 = vst [vmem:[#allocation2 + $0x1f8] sm:$0xff] %v1051
    // Predicated region
    $region30: #{stem_forward.2} parent=1 // pred_check
      %p1116 = pneg %p55
    $region31: #{stem_forward.2} parent=1 // pred_check_branch
      %1118 = sbr.rel (%p1116) target = $region33
    $region32: #{stem_forward.2} parent=1 // pred_region
      %v1119 = vld [vmem:[#allocation2] sm:$0xff]
      %v1120 = vld [vmem:[#allocation2 + $0x8] sm:$0xff]
      %v1121 = vld [vmem:[#allocation2 + $0x10] sm:$0xff]
      %v1122 = vld [vmem:[#allocation2 + $0x18] sm:$0xff]
      %v1123 = vld [vmem:[#allocation2 + $0x20] sm:$0xff]
      %v1124 = vld [vmem:[#allocation2 + $0x28] sm:$0xff]
      %v1125 = vld [vmem:[#allocation2 + $0x30] sm:$0xff]
      %v1126 = vld [vmem:[#allocation2 + $0x38] sm:$0xff]
      %v1127 = vld [vmem:[#allocation2 + $0x40] sm:$0xff]
      %v1128 = vld [vmem:[#allocation2 + $0x48] sm:$0xff]
      %v1129 = vld [vmem:[#allocation2 + $0x50] sm:$0xff]
      %v1130 = vld [vmem:[#allocation2 + $0x58] sm:$0xff]
      %v1131 = vld [vmem:[#allocation2 + $0x60] sm:$0xff]
      %v1132 = vld [vmem:[#allocation2 + $0x68] sm:$0xff]
      %v1133 = vld [vmem:[#allocation2 + $0x70] sm:$0xff]
      %v1134 = vld [vmem:[#allocation2 + $0x78] sm:$0xff]
      %v1135 = vld [vmem:[#allocation2 + $0x80] sm:$0xff]
      %v1136 = vld [vmem:[#allocation2 + $0x88] sm:$0xff]
      %v1137 = vld [vmem:[#allocation2 + $0x90] sm:$0xff]
      %v1138 = vld [vmem:[#allocation2 + $0x98] sm:$0xff]
      %v1139 = vld [vmem:[#allocation2 + $0xa0] sm:$0xff]
      %v1140 = vld [vmem:[#allocation2 + $0xa8] sm:$0xff]
      %v1141 = vld [vmem:[#allocation2 + $0xb0] sm:$0xff]
      %v1142 = vld [vmem:[#allocation2 + $0xb8] sm:$0xff]
      %v1143 = vld [vmem:[#allocation2 + $0xc0] sm:$0xff]
      %v1144 = vld [vmem:[#allocation2 + $0xc8] sm:$0xff]
      %v1145 = vld [vmem:[#allocation2 + $0xd0] sm:$0xff]
      %v1146 = vld [vmem:[#allocation2 + $0xd8] sm:$0xff]
      %v1147 = vld [vmem:[#allocation2 + $0xe0] sm:$0xff]
      %v1148 = vld [vmem:[#allocation2 + $0xe8] sm:$0xff]
      %v1149 = vld [vmem:[#allocation2 + $0xf0] sm:$0xff]
      %v1150 = vld [vmem:[#allocation2 + $0xf8] sm:$0xff]
      %v1151 = vld [vmem:[#allocation2 + $0x100] sm:$0xff]
      %v1152 = vld [vmem:[#allocation2 + $0x108] sm:$0xff]
      %v1153 = vld [vmem:[#allocation2 + $0x110] sm:$0xff]
      %v1154 = vld [vmem:[#allocation2 + $0x118] sm:$0xff]
      %v1155 = vld [vmem:[#allocation2 + $0x120] sm:$0xff]
      %v1156 = vld [vmem:[#allocation2 + $0x128] sm:$0xff]
      %v1157 = vld [vmem:[#allocation2 + $0x130] sm:$0xff]
      %v1158 = vld [vmem:[#allocation2 + $0x138] sm:$0xff]
      %v1159 = vld [vmem:[#allocation2 + $0x140] sm:$0xff]
      %v1160 = vld [vmem:[#allocation2 + $0x148] sm:$0xff]
      %v1161 = vld [vmem:[#allocation2 + $0x150] sm:$0xff]
      %v1162 = vld [vmem:[#allocation2 + $0x158] sm:$0xff]
      %v1163 = vld [vmem:[#allocation2 + $0x160] sm:$0xff]
      %v1164 = vld [vmem:[#allocation2 + $0x168] sm:$0xff]
      %v1165 = vld [vmem:[#allocation2 + $0x170] sm:$0xff]
      %v1166 = vld [vmem:[#allocation2 + $0x178] sm:$0xff]
      %v1167 = vld [vmem:[#allocation2 + $0x180] sm:$0xff]
      %v1168 = vld [vmem:[#allocation2 + $0x188] sm:$0xff]
      %v1169 = vld [vmem:[#allocation2 + $0x190] sm:$0xff]
      %v1170 = vld [vmem:[#allocation2 + $0x198] sm:$0xff]
      %v1171 = vld [vmem:[#allocation2 + $0x1a0] sm:$0xff]
      %v1172 = vld [vmem:[#allocation2 + $0x1a8] sm:$0xff]
      %v1173 = vld [vmem:[#allocation2 + $0x1b0] sm:$0xff]
      %v1174 = vld [vmem:[#allocation2 + $0x1b8] sm:$0xff]
      %v1175 = vld [vmem:[#allocation2 + $0x1c0] sm:$0xff]
      %v1176 = vld [vmem:[#allocation2 + $0x1c8] sm:$0xff]
      %v1177 = vld [vmem:[#allocation2 + $0x1d0] sm:$0xff]
      %v1178 = vld [vmem:[#allocation2 + $0x1d8] sm:$0xff]
      %v1179 = vld [vmem:[#allocation2 + $0x1e0] sm:$0xff]
      %v1180 = vld [vmem:[#allocation2 + $0x1e8] sm:$0xff]
      %v1181 = vld [vmem:[#allocation2 + $0x1f0] sm:$0xff]
      %v1182 = vld [vmem:[#allocation2 + $0x1f8] sm:$0xff]
      %v1183 = vld [vmem:[#allocation8] sm:$0x1]
      %v1185 = vlaneseq
      %v1186 = vshrl.u32 %v1185, 7
      %v1187 = vsub.s32 0, %v1186
      %v1188 = vrot.slane %v1183, %v1187
      %v1190 = vadd.f32 %v1119, %v1188
      %v1191 = vadd.f32 %v1120, %v1188
      %v1192 = vadd.f32 %v1121, %v1188
      %v1193 = vadd.f32 %v1122, %v1188
      %v1194 = vadd.f32 %v1123, %v1188
      %v1195 = vadd.f32 %v1124, %v1188
      %v1196 = vadd.f32 %v1125, %v1188
      %v1197 = vadd.f32 %v1126, %v1188
      %v1198 = vadd.f32 %v1127, %v1188
      %v1199 = vadd.f32 %v1128, %v1188
      %v1200 = vadd.f32 %v1129, %v1188
      %v1201 = vadd.f32 %v1130, %v1188
      %v1202 = vadd.f32 %v1131, %v1188
      %v1203 = vadd.f32 %v1132, %v1188
      %v1204 = vadd.f32 %v1133, %v1188
      %v1205 = vadd.f32 %v1134, %v1188
      %v1206 = vadd.f32 %v1135, %v1188
      %v1207 = vadd.f32 %v1136, %v1188
      %v1208 = vadd.f32 %v1137, %v1188
      %v1209 = vadd.f32 %v1138, %v1188
      %v1210 = vadd.f32 %v1139, %v1188
      %v1211 = vadd.f32 %v1140, %v1188
      %v1212 = vadd.f32 %v1141, %v1188
      %v1213 = vadd.f32 %v1142, %v1188
      %v1214 = vadd.f32 %v1143, %v1188
      %v1215 = vadd.f32 %v1144, %v1188
      %v1216 = vadd.f32 %v1145, %v1188
      %v1217 = vadd.f32 %v1146, %v1188
      %v1218 = vadd.f32 %v1147, %v1188
      %v1219 = vadd.f32 %v1148, %v1188
      %v1220 = vadd.f32 %v1149, %v1188
      %v1221 = vadd.f32 %v1150, %v1188
      %v1222 = vadd.f32 %v1151, %v1188
      %v1223 = vadd.f32 %v1152, %v1188
      %v1224 = vadd.f32 %v1153, %v1188
      %v1225 = vadd.f32 %v1154, %v1188
      %v1226 = vadd.f32 %v1155, %v1188
      %v1227 = vadd.f32 %v1156, %v1188
      %v1228 = vadd.f32 %v1157, %v1188
      %v1229 = vadd.f32 %v1158, %v1188
      %v1230 = vadd.f32 %v1159, %v1188
      %v1231 = vadd.f32 %v1160, %v1188
      %v1232 = vadd.f32 %v1161, %v1188
      %v1233 = vadd.f32 %v1162, %v1188
      %v1234 = vadd.f32 %v1163, %v1188
      %v1235 = vadd.f32 %v1164, %v1188
      %v1236 = vadd.f32 %v1165, %v1188
      %v1237 = vadd.f32 %v1166, %v1188
      %v1238 = vadd.f32 %v1167, %v1188
      %v1239 = vadd.f32 %v1168, %v1188
      %v1240 = vadd.f32 %v1169, %v1188
      %v1241 = vadd.f32 %v1170, %v1188
      %v1242 = vadd.f32 %v1171, %v1188
      %v1243 = vadd.f32 %v1172, %v1188
      %v1244 = vadd.f32 %v1173, %v1188
      %v1245 = vadd.f32 %v1174, %v1188
      %v1246 = vadd.f32 %v1175, %v1188
      %v1247 = vadd.f32 %v1176, %v1188
      %v1248 = vadd.f32 %v1177, %v1188
      %v1249 = vadd.f32 %v1178, %v1188
      %v1250 = vadd.f32 %v1179, %v1188
      %v1251 = vadd.f32 %v1180, %v1188
      %v1252 = vadd.f32 %v1181, %v1188
      %v1253 = vadd.f32 %v1182, %v1188
      %v1254 = vmax.f32 %v1190, 0.0
      %v1255 = vmax.f32 %v1191, 0.0
      %v1256 = vmax.f32 %v1192, 0.0
      %v1257 = vmax.f32 %v1193, 0.0
      %v1258 = vmax.f32 %v1194, 0.0
      %v1259 = vmax.f32 %v1195, 0.0
      %v1260 = vmax.f32 %v1196, 0.0
      %v1261 = vmax.f32 %v1197, 0.0
      %v1262 = vmax.f32 %v1198, 0.0
      %v1263 = vmax.f32 %v1199, 0.0
      %v1264 = vmax.f32 %v1200, 0.0
      %v1265 = vmax.f32 %v1201, 0.0
      %v1266 = vmax.f32 %v1202, 0.0
      %v1267 = vmax.f32 %v1203, 0.0
      %v1268 = vmax.f32 %v1204, 0.0
      %v1269 = vmax.f32 %v1205, 0.0
      %v1270 = vmax.f32 %v1206, 0.0
      %v1271 = vmax.f32 %v1207, 0.0
      %v1272 = vmax.f32 %v1208, 0.0
      %v1273 = vmax.f32 %v1209, 0.0
      %v1274 = vmax.f32 %v1210, 0.0
      %v1275 = vmax.f32 %v1211, 0.0
      %v1276 = vmax.f32 %v1212, 0.0
      %v1277 = vmax.f32 %v1213, 0.0
      %v1278 = vmax.f32 %v1214, 0.0
      %v1279 = vmax.f32 %v1215, 0.0
      %v1280 = vmax.f32 %v1216, 0.0
      %v1281 = vmax.f32 %v1217, 0.0
      %v1282 = vmax.f32 %v1218, 0.0
      %v1283 = vmax.f32 %v1219, 0.0
      %v1284 = vmax.f32 %v1220, 0.0
      %v1285 = vmax.f32 %v1221, 0.0
      %v1286 = vmax.f32 %v1222, 0.0
      %v1287 = vmax.f32 %v1223, 0.0
      %v1288 = vmax.f32 %v1224, 0.0
      %v1289 = vmax.f32 %v1225, 0.0
      %v1290 = vmax.f32 %v1226, 0.0
      %v1291 = vmax.f32 %v1227, 0.0
      %v1292 = vmax.f32 %v1228, 0.0
      %v1293 = vmax.f32 %v1229, 0.0
      %v1294 = vmax.f32 %v1230, 0.0
      %v1295 = vmax.f32 %v1231, 0.0
      %v1296 = vmax.f32 %v1232, 0.0
      %v1297 = vmax.f32 %v1233, 0.0
      %v1298 = vmax.f32 %v1234, 0.0
      %v1299 = vmax.f32 %v1235, 0.0
      %v1300 = vmax.f32 %v1236, 0.0
      %v1301 = vmax.f32 %v1237, 0.0
      %v1302 = vmax.f32 %v1238, 0.0
      %v1303 = vmax.f32 %v1239, 0.0
      %v1304 = vmax.f32 %v1240, 0.0
      %v1305 = vmax.f32 %v1241, 0.0
      %v1306 = vmax.f32 %v1242, 0.0
      %v1307 = vmax.f32 %v1243, 0.0
      %v1308 = vmax.f32 %v1244, 0.0
      %v1309 = vmax.f32 %v1245, 0.0
      %v1310 = vmax.f32 %v1246, 0.0
      %v1311 = vmax.f32 %v1247, 0.0
      %v1312 = vmax.f32 %v1248, 0.0
      %v1313 = vmax.f32 %v1249, 0.0
      %v1314 = vmax.f32 %v1250, 0.0
      %v1315 = vmax.f32 %v1251, 0.0
      %v1316 = vmax.f32 %v1252, 0.0
      %v1317 = vmax.f32 %v1253, 0.0
      %v1318 = vpack.c.bf16 %v1255, %v1254
      %v1319 = vpack.c.bf16 %v1257, %v1256
      %v1320 = vpack.c.bf16 %v1259, %v1258
      %v1321 = vpack.c.bf16 %v1261, %v1260
      %v1322 = vpack.c.bf16 %v1263, %v1262
      %v1323 = vpack.c.bf16 %v1265, %v1264
      %v1324 = vpack.c.bf16 %v1267, %v1266
      %v1325 = vpack.c.bf16 %v1269, %v1268
      %v1326 = vpack.c.bf16 %v1271, %v1270
      %v1327 = vpack.c.bf16 %v1273, %v1272
      %v1328 = vpack.c.bf16 %v1275, %v1274
      %v1329 = vpack.c.bf16 %v1277, %v1276
      %v1330 = vpack.c.bf16 %v1279, %v1278
      %v1331 = vpack.c.bf16 %v1281, %v1280
      %v1332 = vpack.c.bf16 %v1283, %v1282
      %v1333 = vpack.c.bf16 %v1285, %v1284
      %v1334 = vpack.c.bf16 %v1287, %v1286
      %v1335 = vpack.c.bf16 %v1289, %v1288
      %v1336 = vpack.c.bf16 %v1291, %v1290
      %v1337 = vpack.c.bf16 %v1293, %v1292
      %v1338 = vpack.c.bf16 %v1295, %v1294
      %v1339 = vpack.c.bf16 %v1297, %v1296
      %v1340 = vpack.c.bf16 %v1299, %v1298
      %v1341 = vpack.c.bf16 %v1301, %v1300
      %v1342 = vpack.c.bf16 %v1303, %v1302
      %v1343 = vpack.c.bf16 %v1305, %v1304
      %v1344 = vpack.c.bf16 %v1307, %v1306
      %v1345 = vpack.c.bf16 %v1309, %v1308
      %v1346 = vpack.c.bf16 %v1311, %v1310
      %v1347 = vpack.c.bf16 %v1313, %v1312
      %v1348 = vpack.c.bf16 %v1315, %v1314
      %v1349 = vpack.c.bf16 %v1317, %v1316
      %v1382 = vunpack.c.l.b16 %v1318
      %v1383 = vunpack.c.h.b16 %v1318
      %v1384 = vunpack.c.l.b16 %v1319
      %v1385 = vunpack.c.h.b16 %v1319
      %v1386 = vunpack.c.l.b16 %v1320
      %v1387 = vunpack.c.h.b16 %v1320
      %v1388 = vunpack.c.l.b16 %v1321
      %v1389 = vunpack.c.h.b16 %v1321
      %v1390 = vunpack.c.l.b16 %v1322
      %v1391 = vunpack.c.h.b16 %v1322
      %v1392 = vunpack.c.l.b16 %v1323
      %v1393 = vunpack.c.h.b16 %v1323
      %v1394 = vunpack.c.l.b16 %v1324
      %v1395 = vunpack.c.h.b16 %v1324
      %v1396 = vunpack.c.l.b16 %v1325
      %v1397 = vunpack.c.h.b16 %v1325
      %v1398 = vunpack.c.l.b16 %v1326
      %v1399 = vunpack.c.h.b16 %v1326
      %v1400 = vunpack.c.l.b16 %v1327
      %v1401 = vunpack.c.h.b16 %v1327
      %v1402 = vunpack.c.l.b16 %v1328
      %v1403 = vunpack.c.h.b16 %v1328
      %v1404 = vunpack.c.l.b16 %v1329
      %v1405 = vunpack.c.h.b16 %v1329
      %v1406 = vunpack.c.l.b16 %v1330
      %v1407 = vunpack.c.h.b16 %v1330
      %v1408 = vunpack.c.l.b16 %v1331
      %v1409 = vunpack.c.h.b16 %v1331
      %v1410 = vunpack.c.l.b16 %v1332
      %v1411 = vunpack.c.h.b16 %v1332
      %v1412 = vunpack.c.l.b16 %v1333
      %v1413 = vunpack.c.h.b16 %v1333
      %v1414 = vunpack.c.l.b16 %v1334
      %v1415 = vunpack.c.h.b16 %v1334
      %v1416 = vunpack.c.l.b16 %v1335
      %v1417 = vunpack.c.h.b16 %v1335
      %v1418 = vunpack.c.l.b16 %v1336
      %v1419 = vunpack.c.h.b16 %v1336
      %v1420 = vunpack.c.l.b16 %v1337
      %v1421 = vunpack.c.h.b16 %v1337
      %v1422 = vunpack.c.l.b16 %v1338
      %v1423 = vunpack.c.h.b16 %v1338
      %v1424 = vunpack.c.l.b16 %v1339
      %v1425 = vunpack.c.h.b16 %v1339
      %v1426 = vunpack.c.l.b16 %v1340
      %v1427 = vunpack.c.h.b16 %v1340
      %v1428 = vunpack.c.l.b16 %v1341
      %v1429 = vunpack.c.h.b16 %v1341
      %v1430 = vunpack.c.l.b16 %v1342
      %v1431 = vunpack.c.h.b16 %v1342
      %v1432 = vunpack.c.l.b16 %v1343
      %v1433 = vunpack.c.h.b16 %v1343
      %v1434 = vunpack.c.l.b16 %v1344
      %v1435 = vunpack.c.h.b16 %v1344
      %v1436 = vunpack.c.l.b16 %v1345
      %v1437 = vunpack.c.h.b16 %v1345
      %v1438 = vunpack.c.l.b16 %v1346
      %v1439 = vunpack.c.h.b16 %v1346
      %v1440 = vunpack.c.l.b16 %v1347
      %v1441 = vunpack.c.h.b16 %v1347
      %v1442 = vunpack.c.l.b16 %v1348
      %v1443 = vunpack.c.h.b16 %v1348
      %v1444 = vunpack.c.l.b16 %v1349
      %v1445 = vunpack.c.h.b16 %v1349
      %v1446 = vpack.c.b16 %v1382, %v1382
      %v1447 = vpack.c.b16 %v1383, %v1383
      %v1448 = vpack.c.b16 %v1384, %v1384
      %v1449 = vpack.c.b16 %v1385, %v1385
      %v1450 = vpack.c.b16 %v1386, %v1386
      %v1451 = vpack.c.b16 %v1387, %v1387
      %v1452 = vpack.c.b16 %v1388, %v1388
      %v1453 = vpack.c.b16 %v1389, %v1389
      %v1454 = vpack.c.b16 %v1390, %v1390
      %v1455 = vpack.c.b16 %v1391, %v1391
      %v1456 = vpack.c.b16 %v1392, %v1392
      %v1457 = vpack.c.b16 %v1393, %v1393
      %v1458 = vpack.c.b16 %v1394, %v1394
      %v1459 = vpack.c.b16 %v1395, %v1395
      %v1460 = vpack.c.b16 %v1396, %v1396
      %v1461 = vpack.c.b16 %v1397, %v1397
      %v1462 = vpack.c.b16 %v1398, %v1398
      %v1463 = vpack.c.b16 %v1399, %v1399
      %v1464 = vpack.c.b16 %v1400, %v1400
      %v1465 = vpack.c.b16 %v1401, %v1401
      %v1466 = vpack.c.b16 %v1402, %v1402
      %v1467 = vpack.c.b16 %v1403, %v1403
      %v1468 = vpack.c.b16 %v1404, %v1404
      %v1469 = vpack.c.b16 %v1405, %v1405
      %v1470 = vpack.c.b16 %v1406, %v1406
      %v1471 = vpack.c.b16 %v1407, %v1407
      %v1472 = vpack.c.b16 %v1408, %v1408
      %v1473 = vpack.c.b16 %v1409, %v1409
      %v1474 = vpack.c.b16 %v1410, %v1410
      %v1475 = vpack.c.b16 %v1411, %v1411
      %v1476 = vpack.c.b16 %v1412, %v1412
      %v1477 = vpack.c.b16 %v1413, %v1413
      %v1478 = vpack.c.b16 %v1414, %v1414
      %v1479 = vpack.c.b16 %v1415, %v1415
      %v1480 = vpack.c.b16 %v1416, %v1416
      %v1481 = vpack.c.b16 %v1417, %v1417
      %v1482 = vpack.c.b16 %v1418, %v1418
      %v1483 = vpack.c.b16 %v1419, %v1419
      %v1484 = vpack.c.b16 %v1420, %v1420
      %v1485 = vpack.c.b16 %v1421, %v1421
      %v1486 = vpack.c.b16 %v1422, %v1422
      %v1487 = vpack.c.b16 %v1423, %v1423
      %v1488 = vpack.c.b16 %v1424, %v1424
      %v1489 = vpack.c.b16 %v1425, %v1425
      %v1490 = vpack.c.b16 %v1426, %v1426
      %v1491 = vpack.c.b16 %v1427, %v1427
      %v1492 = vpack.c.b16 %v1428, %v1428
      %v1493 = vpack.c.b16 %v1429, %v1429
      %v1494 = vpack.c.b16 %v1430, %v1430
      %v1495 = vpack.c.b16 %v1431, %v1431
      %v1496 = vpack.c.b16 %v1432, %v1432
      %v1497 = vpack.c.b16 %v1433, %v1433
      %v1498 = vpack.c.b16 %v1434, %v1434
      %v1499 = vpack.c.b16 %v1435, %v1435
      %v1500 = vpack.c.b16 %v1436, %v1436
      %v1501 = vpack.c.b16 %v1437, %v1437
      %v1502 = vpack.c.b16 %v1438, %v1438
      %v1503 = vpack.c.b16 %v1439, %v1439
      %v1504 = vpack.c.b16 %v1440, %v1440
      %v1505 = vpack.c.b16 %v1441, %v1441
      %v1506 = vpack.c.b16 %v1442, %v1442
      %v1507 = vpack.c.b16 %v1443, %v1443
      %v1508 = vpack.c.b16 %v1444, %v1444
      %v1509 = vpack.c.b16 %v1445, %v1445
      %1574 = vst [vmem:[#allocation9] sm:$0xf] %v1446
      %1575 = vst [vmem:[#allocation9 + $0x4] sm:$0xf] %v1447
      %1576 = vst [vmem:[#allocation9 + $0x8] sm:$0xf] %v1448
      %1577 = vst [vmem:[#allocation9 + $0xc] sm:$0xf] %v1449
      %1578 = vst [vmem:[#allocation9 + $0x10] sm:$0xf] %v1450
      %1579 = vst [vmem:[#allocation9 + $0x14] sm:$0xf] %v1451
      %1580 = vst [vmem:[#allocation9 + $0x18] sm:$0xf] %v1452
      %1581 = vst [vmem:[#allocation9 + $0x1c] sm:$0xf] %v1453
      %1582 = vst [vmem:[#allocation9 + $0x20] sm:$0xf] %v1454
      %1583 = vst [vmem:[#allocation9 + $0x24] sm:$0xf] %v1455
      %1584 = vst [vmem:[#allocation9 + $0x28] sm:$0xf] %v1456
      %1585 = vst [vmem:[#allocation9 + $0x2c] sm:$0xf] %v1457
      %1586 = vst [vmem:[#allocation9 + $0x30] sm:$0xf] %v1458
      %1587 = vst [vmem:[#allocation9 + $0x34] sm:$0xf] %v1459
      %1588 = vst [vmem:[#allocation9 + $0x38] sm:$0xf] %v1460
      %1589 = vst [vmem:[#allocation9 + $0x3c] sm:$0xf] %v1461
      %1590 = vst [vmem:[#allocation9 + $0x40] sm:$0xf] %v1462
      %1591 = vst [vmem:[#allocation9 + $0x44] sm:$0xf] %v1463
      %1592 = vst [vmem:[#allocation9 + $0x48] sm:$0xf] %v1464
      %1593 = vst [vmem:[#allocation9 + $0x4c] sm:$0xf] %v1465
      %1594 = vst [vmem:[#allocation9 + $0x50] sm:$0xf] %v1466
      %1595 = vst [vmem:[#allocation9 + $0x54] sm:$0xf] %v1467
      %1596 = vst [vmem:[#allocation9 + $0x58] sm:$0xf] %v1468
      %1597 = vst [vmem:[#allocation9 + $0x5c] sm:$0xf] %v1469
      %1598 = vst [vmem:[#allocation9 + $0x60] sm:$0xf] %v1470
      %1599 = vst [vmem:[#allocation9 + $0x64] sm:$0xf] %v1471
      %1600 = vst [vmem:[#allocation9 + $0x68] sm:$0xf] %v1472
      %1601 = vst [vmem:[#allocation9 + $0x6c] sm:$0xf] %v1473
      %1602 = vst [vmem:[#allocation9 + $0x70] sm:$0xf] %v1474
      %1603 = vst [vmem:[#allocation9 + $0x74] sm:$0xf] %v1475
      %1604 = vst [vmem:[#allocation9 + $0x78] sm:$0xf] %v1476
      %1605 = vst [vmem:[#allocation9 + $0x7c] sm:$0xf] %v1477
      %1606 = vst [vmem:[#allocation9 + $0x80] sm:$0xf] %v1478
      %1607 = vst [vmem:[#allocation9 + $0x84] sm:$0xf] %v1479
      %1608 = vst [vmem:[#allocation9 + $0x88] sm:$0xf] %v1480
      %1609 = vst [vmem:[#allocation9 + $0x8c] sm:$0xf] %v1481
      %1610 = vst [vmem:[#allocation9 + $0x90] sm:$0xf] %v1482
      %1611 = vst [vmem:[#allocation9 + $0x94] sm:$0xf] %v1483
      %1612 = vst [vmem:[#allocation9 + $0x98] sm:$0xf] %v1484
      %1613 = vst [vmem:[#allocation9 + $0x9c] sm:$0xf] %v1485
      %1614 = vst [vmem:[#allocation9 + $0xa0] sm:$0xf] %v1486
      %1615 = vst [vmem:[#allocation9 + $0xa4] sm:$0xf] %v1487
      %1616 = vst [vmem:[#allocation9 + $0xa8] sm:$0xf] %v1488
      %1617 = vst [vmem:[#allocation9 + $0xac] sm:$0xf] %v1489
      %1618 = vst [vmem:[#allocation9 + $0xb0] sm:$0xf] %v1490
      %1619 = vst [vmem:[#allocation9 + $0xb4] sm:$0xf] %v1491
      %1620 = vst [vmem:[#allocation9 + $0xb8] sm:$0xf] %v1492
      %1621 = vst [vmem:[#allocation9 + $0xbc] sm:$0xf] %v1493
      %1622 = vst [vmem:[#allocation9 + $0xc0] sm:$0xf] %v1494
      %1623 = vst [vmem:[#allocation9 + $0xc4] sm:$0xf] %v1495
      %1624 = vst [vmem:[#allocation9 + $0xc8] sm:$0xf] %v1496
      %1625 = vst [vmem:[#allocation9 + $0xcc] sm:$0xf] %v1497
      %1626 = vst [vmem:[#allocation9 + $0xd0] sm:$0xf] %v1498
      %1627 = vst [vmem:[#allocation9 + $0xd4] sm:$0xf] %v1499
      %1628 = vst [vmem:[#allocation9 + $0xd8] sm:$0xf] %v1500
      %1629 = vst [vmem:[#allocation9 + $0xdc] sm:$0xf] %v1501
      %1630 = vst [vmem:[#allocation9 + $0xe0] sm:$0xf] %v1502
      %1631 = vst [vmem:[#allocation9 + $0xe4] sm:$0xf] %v1503
      %1632 = vst [vmem:[#allocation9 + $0xe8] sm:$0xf] %v1504
      %1633 = vst [vmem:[#allocation9 + $0xec] sm:$0xf] %v1505
      %1634 = vst [vmem:[#allocation9 + $0xf0] sm:$0xf] %v1506
      %1635 = vst [vmem:[#allocation9 + $0xf4] sm:$0xf] %v1507
      %1636 = vst [vmem:[#allocation9 + $0xf8] sm:$0xf] %v1508
      %1637 = vst [vmem:[#allocation9 + $0xfc] sm:$0xf] %v1509
    $region33: #{stem_forward.2} parent=1 // pred_fallthru
      _
    // Predicated region
    $region34: #{stem_forward.2} parent=1 // pred_check
      _
    $region35: #{stem_forward.2} parent=1 // pred_check_branch
      %1639 = sbr.rel (0) target = $region37
    $region36: #{stem_forward.2} parent=1 // pred_region
      %s1641 = ssub.s32 4096, 4096
      %1642 = vsyncadd [#allocation5], %s1641
      %s1643 = sshll.u32 [#allocation9], 4
      %s1644 = int_to_ptr.vmem [resolvable:$true] %s1643
      %1649 = dma.vmem_to_hbm [thread:$0]  %s1644, 4096, %s3, [#allocation5], 64, 64, 4
    $region37: #{stem_forward.2} parent=1 // pred_fallthru
      _
    // Predicated region
    $region38: #{stem_forward.2} parent=1 // pred_check
      _
    $region39: #{stem_forward.2} parent=1 // pred_check_branch
      %1651 = sbr.rel (0) target = $region41
    $region40: #{stem_forward.2} parent=1 // pred_region
      %1652 = dma.done [#allocation5], 4096
    $region41: #{stem_forward.2} parent=1 // pred_fallthru
      _
    %1653 = vsyncpa [#allocation4], 1
    %1654 = vsyncpa [#allocation7], 1
    %1655 = vsyncpa [#allocation5], 1

// kernel: stem_forward.3
$region0: #{stem_forward.3}
  #allocation0 [shape = 'u32[]', space=smem, size = 0x4, offset = 0x4, fixed_abs, tag = 'smem constant byte address 0x4 - core index']
  #allocation1 [shape = 'u32[144,128]{1,0:T(1,128)}', space=vmem, size = 0x12000, scoped, tag = 'internal scratch']
  %s0 = inlined_call_operand.hbm [shape: bf16[9,16,512], index: 0, kind: input, shape index: {}]
  %s1 = inlined_call_operand.hbm [shape: bf16[16,512], index: 1, kind: output, shape index: {}]
  %s2 = sld [smem:[#allocation0]]
  $region18: #{stem_forward.3} parent=0
    _
  %s4 = ssub.s32 1, %s2
  %s5 = scalar_select 0, %s4, %s2
  $region1: #{stem_forward.3} parent=0
    #allocation2 [shape = 'u8[147456]{0}', space=vmem, size = 0x24000, scoped, tag = 'input window, operand 0, single buffered']
    #allocation3 [shape = 's32[1]{0}', space=sflag, size = 0x4, scoped, tag = 'scoped memory for stem_forward.3']
    #allocation4 [shape = 's32[1]{0}', space=sflag, size = 0x4, scoped, tag = 'scoped memory for stem_forward.3']
    #allocation5 [shape = 'u8[16384]{0}', space=vmem, size = 0x4000, scoped, tag = 'output window, operand 0, single buffered']
    %6 = vsyncpa [#allocation3], 0
    %7 = vsyncpa [#allocation4], 0
    // Predicated region
    $region2: #{stem_forward.3} parent=1 // pred_check
      _
    $region3: #{stem_forward.3} parent=1 // pred_check_branch
      %9 = sbr.rel (0) target = $region5
    $region4: #{stem_forward.3} parent=1 // pred_region
      %s11 = ssub.s32 4608, 4608
      %12 = vsyncadd [#allocation3], %s11
      %s13 = sshll.u32 [#allocation2], 4
      %s14 = int_to_ptr.vmem [resolvable:$true] %s13
      %19 = dma.hbm_to_vmem [thread:$0]  %s0, 4608, %s14, [#allocation3], 256, 256, 16
    $region5: #{stem_forward.3} parent=1 // pred_fallthru
      _
    // Predicated region
    $region6: #{stem_forward.3} parent=1 // pred_check
      _
    $region7: #{stem_forward.3} parent=1 // pred_check_branch
      %21 = sbr.rel (0) target = $region9
    $region8: #{stem_forward.3} parent=1 // pred_region
      %22 = dma.done [#allocation3], 4608
    $region9: #{stem_forward.3} parent=1 // pred_fallthru
      _
    %v23 = vld [vmem:[#allocation2] sm:$0xff]
    %v24 = vld [vmem:[#allocation2 + $0x8] sm:$0xff]
    %v25 = vld [vmem:[#allocation2 + $0x10] sm:$0xff]
    %v26 = vld [vmem:[#allocation2 + $0x18] sm:$0xff]
    %s27 = scalar_lea.vmem [#allocation2], 32
    %v28 = vld [vmem:[%s27] sm:$0xff]
    %v29 = vld [vmem:[%s27 + $0x8] sm:$0xff]
    %v30 = vld [vmem:[%s27 + $0x10] sm:$0xff]
    %v31 = vld [vmem:[%s27 + $0x18] sm:$0xff]
    %s32 = scalar_lea.vmem [#allocation2], 64
    %v33 = vld [vmem:[%s32] sm:$0xff]
    %v34 = vld [vmem:[%s32 + $0x8] sm:$0xff]
    %v35 = vld [vmem:[%s32 + $0x10] sm:$0xff]
    %v36 = vld [vmem:[%s32 + $0x18] sm:$0xff]
    %s37 = scalar_lea.vmem [#allocation2], 96
    %v38 = vld [vmem:[%s37] sm:$0xff]
    %v39 = vld [vmem:[%s37 + $0x8] sm:$0xff]
    %v40 = vld [vmem:[%s37 + $0x10] sm:$0xff]
    %v41 = vld [vmem:[%s37 + $0x18] sm:$0xff]
    %s42 = scalar_lea.vmem [#allocation2], 128
    %v43 = vld [vmem:[%s42] sm:$0xff]
    %v44 = vld [vmem:[%s42 + $0x8] sm:$0xff]
    %v45 = vld [vmem:[%s42 + $0x10] sm:$0xff]
    %v46 = vld [vmem:[%s42 + $0x18] sm:$0xff]
    %s47 = scalar_lea.vmem [#allocation2], 160
    %v48 = vld [vmem:[%s47] sm:$0xff]
    %v49 = vld [vmem:[%s47 + $0x8] sm:$0xff]
    %v50 = vld [vmem:[%s47 + $0x10] sm:$0xff]
    %v51 = vld [vmem:[%s47 + $0x18] sm:$0xff]
    %s52 = scalar_lea.vmem [#allocation2], 192
    %v53 = vld [vmem:[%s52] sm:$0xff]
    %v54 = vld [vmem:[%s52 + $0x8] sm:$0xff]
    %v55 = vld [vmem:[%s52 + $0x10] sm:$0xff]
    %v56 = vld [vmem:[%s52 + $0x18] sm:$0xff]
    %s57 = scalar_lea.vmem [#allocation2], 224
    %v58 = vld [vmem:[%s57] sm:$0xff]
    %v59 = vld [vmem:[%s57 + $0x8] sm:$0xff]
    %v60 = vld [vmem:[%s57 + $0x10] sm:$0xff]
    %v61 = vld [vmem:[%s57 + $0x18] sm:$0xff]
    %s62 = scalar_lea.vmem [#allocation2], 256
    %v63 = vld [vmem:[%s62] sm:$0xff]
    %v64 = vld [vmem:[%s62 + $0x8] sm:$0xff]
    %v65 = vld [vmem:[%s62 + $0x10] sm:$0xff]
    %v66 = vld [vmem:[%s62 + $0x18] sm:$0xff]
    %v67 = vmax.bf16 %v23, %v28
    %v68 = vmax.bf16 %v24, %v29
    %v69 = vmax.bf16 %v25, %v30
    %v70 = vmax.bf16 %v26, %v31
    %v71 = vmax.bf16 %v33, %v38
    %v72 = vmax.bf16 %v34, %v39
    %v73 = vmax.bf16 %v35, %v40
    %v74 = vmax.bf16 %v36, %v41
    %v75 = vmax.bf16 %v43, %v48
    %v76 = vmax.bf16 %v44, %v49
    %v77 = vmax.bf16 %v45, %v50
    %v78 = vmax.bf16 %v46, %v51
    %v79 = vmax.bf16 %v53, %v58
    %v80 = vmax.bf16 %v54, %v59
    %v81 = vmax.bf16 %v55, %v60
    %v82 = vmax.bf16 %v56, %v61
    %v83 = vmax.bf16 %v67, %v71
    %v84 = vmax.bf16 %v68, %v72
    %v85 = vmax.bf16 %v69, %v73
    %v86 = vmax.bf16 %v70, %v74
    %v87 = vmax.bf16 %v75, %v79
    %v88 = vmax.bf16 %v76, %v80
    %v89 = vmax.bf16 %v77, %v81
    %v90 = vmax.bf16 %v78, %v82
    %v91 = vmax.bf16 %v83, %v87
    %v92 = vmax.bf16 %v84, %v88
    %v93 = vmax.bf16 %v85, %v89
    %v94 = vmax.bf16 %v86, %v90
    %v95 = vmax.bf16 %v91, %v63
    %v96 = vmax.bf16 %v92, %v64
    %v97 = vmax.bf16 %v93, %v65
    %v98 = vmax.bf16 %v94, %v66
    %99 = vst [vmem:[#allocation5] sm:$0xff] %v95
    %100 = vst [vmem:[#allocation5 + $0x8] sm:$0xff] %v96
    %101 = vst [vmem:[#allocation5 + $0x10] sm:$0xff] %v97
    %102 = vst [vmem:[#allocation5 + $0x18] sm:$0xff] %v98
    // Predicated region
    $region10: #{stem_forward.3} parent=1 // pred_check
      _
    $region11: #{stem_forward.3} parent=1 // pred_check_branch
      %104 = sbr.rel (0) target = $region13
    $region12: #{stem_forward.3} parent=1 // pred_region
      %s106 = ssub.s32 512, 512
      %107 = vsyncadd [#allocation4], %s106
      %s108 = sshll.u32 [#allocation5], 4
      %s109 = int_to_ptr.vmem [resolvable:$true] %s108
      %114 = dma.vmem_to_hbm [thread:$0]  %s109, 512, %s1, [#allocation4], 256, 256, 16
    $region13: #{stem_forward.3} parent=1 // pred_fallthru
      _
    // Predicated region
    $region14: #{stem_forward.3} parent=1 // pred_check
      _
    $region15: #{stem_forward.3} parent=1 // pred_check_branch
      %116 = sbr.rel (0) target = $region17
    $region16: #{stem_forward.3} parent=1 // pred_region
      %117 = dma.done [#allocation4], 512
    $region17: #{stem_forward.3} parent=1 // pred_fallthru
      _
    %118 = vsyncpa [#allocation3], 1
    %119 = vsyncpa [#allocation4], 1

</llo_original>
